<compile_context>
chip_gen: v5e
topology: v5e:2x2
jax: 0.10.0
libtpu: 0.0.40
codegen_flags: <defaults>
</compile_context>

<pallas_src>
import functools
import math

import jax
import jax.numpy as jnp
from jax.experimental import pallas as pl
from jax.experimental.pallas import tpu as pltpu


# ----------------------------------------------------------------------------
# Fused multi-head-attention sublayer kernel
#   computes: LayerNorm( x_q + OutProj( MHA( x_q, x_kv ) ) )
# ----------------------------------------------------------------------------
def _mha_block_kernel(xq_ref, xkv_ref, wq_ref, bq_ref, wkv_ref, bkv_ref,
                      wo_ref, bo_ref, g_ref, beta_ref, o_ref, ctx_ref,
                      *, num_heads, causal, eps):
    xq = xq_ref[0]                       # (Sq, D) f32
    xkv = xkv_ref[0]                     # (Sk, D) f32
    Sq, D = xq.shape
    Sk = xkv.shape[0]
    Dh = D // num_heads
    scale = 1.0 / math.sqrt(Dh)

    # --- projections (bf16 MXU inputs, f32 accumulation) ---
    q = jnp.dot(xq.astype(jnp.bfloat16), wq_ref[...],
                preferred_element_type=jnp.float32) + bq_ref[...]      # (Sq, D)
    kv = jnp.dot(xkv.astype(jnp.bfloat16), wkv_ref[...],
                 preferred_element_type=jnp.float32) + bkv_ref[...]    # (Sk, 2D)
    k = kv[:, :D]
    v = kv[:, D:]

    # --- causal mask built in-kernel (no HBM mask traffic) ---
    if causal:
        row = jax.lax.broadcasted_iota(jnp.int32, (Sq, Sk), 0)
        col = jax.lax.broadcasted_iota(jnp.int32, (Sq, Sk), 1)
        neg = jnp.where(row >= col, 0.0, -1e9).astype(jnp.float32)

    # --- per-head attention (static column slices; f32 softmax math) ---
    for h in range(num_heads):
        lo, hi = h * Dh, (h + 1) * Dh
        qh = q[:, lo:hi]
        kh = k[:, lo:hi]
        vh = v[:, lo:hi]
        s = jnp.dot(qh, kh.T, preferred_element_type=jnp.float32) * scale
        if causal:
            s = s + neg
        s = s - jnp.max(s, axis=-1, keepdims=True)
        p = jnp.exp(s)
        p = p * pl.reciprocal(jnp.sum(p, axis=-1, keepdims=True), approx=True)
        ctx_ref[:, lo:hi] = jnp.dot(p, vh, preferred_element_type=jnp.float32)

    # --- output projection + residual + LayerNorm ---
    attn = jnp.dot(ctx_ref[...].astype(jnp.bfloat16), wo_ref[...],
                   preferred_element_type=jnp.float32) + bo_ref[...]
    y = xq + attn
    mu = jnp.mean(y, axis=-1, keepdims=True)
    var = jnp.mean(jnp.square(y - mu), axis=-1, keepdims=True)
    o_ref[0] = (y - mu) * jax.lax.rsqrt(var + eps) * g_ref[...] + beta_ref[...]


def mha_block(xq, xkv, p, gamma, beta, num_heads, causal):
    """Fused attention sublayer. xq: [B,Sq,D], xkv: [B,Sk,D] -> [B,Sq,D]."""
    B, Sq, D = xq.shape
    Sk = xkv.shape[1]
    kernel = functools.partial(_mha_block_kernel, num_heads=num_heads,
                               causal=causal, eps=1e-5)
    return pl.pallas_call(
        kernel,
        out_shape=jax.ShapeDtypeStruct((B, Sq, D), jnp.float32),
        grid=(B,),
        in_specs=[
            pl.BlockSpec((1, Sq, D), lambda b: (b, 0, 0)),   # x_q
            pl.BlockSpec((1, Sk, D), lambda b: (b, 0, 0)),   # x_kv
            pl.BlockSpec((D, D), lambda b: (0, 0)),          # wq   (bf16)
            pl.BlockSpec((1, D), lambda b: (0, 0)),          # bq
            pl.BlockSpec((D, 2 * D), lambda b: (0, 0)),      # wkv  (bf16)
            pl.BlockSpec((1, 2 * D), lambda b: (0, 0)),      # bkv
            pl.BlockSpec((D, D), lambda b: (0, 0)),          # wo   (bf16)
            pl.BlockSpec((1, D), lambda b: (0, 0)),          # bo
            pl.BlockSpec((1, D), lambda b: (0, 0)),          # ln gamma
            pl.BlockSpec((1, D), lambda b: (0, 0)),          # ln beta
        ],
        out_specs=pl.BlockSpec((1, Sq, D), lambda b: (b, 0, 0)),
        scratch_shapes=[pltpu.VMEM((Sq, D), jnp.float32)],   # head-concat slab
        compiler_params=pltpu.CompilerParams(dimension_semantics=("parallel",)),
    )(xq, xkv, p["wq"], p["bq"], p["wkv"], p["bkv"], p["wo"], p["bo"],
      gamma, beta)


# ----------------------------------------------------------------------------
# Fused feed-forward sublayer kernel: LayerNorm( x + W2 ReLU(W1 x + b1) + b2 )
# ----------------------------------------------------------------------------
def _ffn_block_kernel(x_ref, w1_ref, b1_ref, w2_ref, b2_ref, g_ref, beta_ref,
                      o_ref, *, eps):
    x = x_ref[0]                                              # (S, D) f32
    h = jnp.dot(x.astype(jnp.bfloat16), w1_ref[...],
                preferred_element_type=jnp.float32) + b1_ref[...]
    h = jnp.maximum(h, 0.0)
    f = jnp.dot(h.astype(jnp.bfloat16), w2_ref[...],
                preferred_element_type=jnp.float32) + b2_ref[...]
    y = x + f
    mu = jnp.mean(y, axis=-1, keepdims=True)
    var = jnp.mean(jnp.square(y - mu), axis=-1, keepdims=True)
    o_ref[0] = (y - mu) * jax.lax.rsqrt(var + eps) * g_ref[...] + beta_ref[...]


def ffn_block(x, p, gamma, beta):
    B, S, D = x.shape
    F = p["w1"].shape[1]
    return pl.pallas_call(
        functools.partial(_ffn_block_kernel, eps=1e-5),
        out_shape=jax.ShapeDtypeStruct((B, S, D), jnp.float32),
        grid=(B,),
        in_specs=[
            pl.BlockSpec((1, S, D), lambda b: (b, 0, 0)),
            pl.BlockSpec((D, F), lambda b: (0, 0)),           # w1 (bf16)
            pl.BlockSpec((1, F), lambda b: (0, 0)),
            pl.BlockSpec((F, D), lambda b: (0, 0)),           # w2 (bf16)
            pl.BlockSpec((1, D), lambda b: (0, 0)),
            pl.BlockSpec((1, D), lambda b: (0, 0)),
            pl.BlockSpec((1, D), lambda b: (0, 0)),
        ],
        out_specs=pl.BlockSpec((1, S, D), lambda b: (b, 0, 0)),
        compiler_params=pltpu.CompilerParams(dimension_semantics=("parallel",)),
    )(x, p["w1"], p["b1"], p["w2"], p["b2"], gamma, beta)


# ----------------------------------------------------------------------------
# Vocab projection: single matmul with lane-dense (128-padded) output columns
# ----------------------------------------------------------------------------
def _linear_pad_kernel(x_ref, w_ref, b_ref, o_ref):
    o_ref[...] = jnp.dot(x_ref[...].astype(jnp.bfloat16), w_ref[...],
                         preferred_element_type=jnp.float32) + b_ref[...]


def output_projection(x, w_pad, b_pad, vocab_size):
    """x: [M, D], w_pad: [D, Npad] (bf16, zero-padded), b_pad: [1, Npad]."""
    M, D = x.shape
    Npad = w_pad.shape[1]
    logits_pad = pl.pallas_call(
        _linear_pad_kernel,
        out_shape=jax.ShapeDtypeStruct((M, Npad), jnp.float32),
        grid=(1,),
        in_specs=[
            pl.BlockSpec((M, D), lambda i: (0, 0)),
            pl.BlockSpec((D, Npad), lambda i: (0, 0)),
            pl.BlockSpec((1, Npad), lambda i: (0, 0)),
        ],
        out_specs=pl.BlockSpec((M, Npad), lambda i: (0, 0)),
    )(x, w_pad, b_pad)
    return logits_pad[:, :vocab_size]      # drop padded logit columns


# ----------------------------------------------------------------------------
# Model building blocks (plain-JAX glue around the fused kernels)
# ----------------------------------------------------------------------------
def encoder_layer(x, p, num_heads):
    x = mha_block(x, x, p["self_attn"], p["ln1_g"], p["ln1_b"],
                  num_heads, causal=False)
    x = ffn_block(x, p["ffn"], p["ln2_g"], p["ln2_b"])
    return x


def decoder_layer(y, enc_out, p, num_heads):
    y = mha_block(y, y, p["self_attn"], p["ln1_g"], p["ln1_b"],
                  num_heads, causal=True)                     # causal self-attn
    y = mha_block(y, enc_out, p["cross_attn"], p["ln2_g"], p["ln2_b"],
                  num_heads, causal=False)                    # cross-attn
    y = ffn_block(y, p["ffn"], p["ln3_g"], p["ln3_b"])
    return y


def positional_encoding(max_len, d_model):
    pos = jnp.arange(max_len, dtype=jnp.float32)[:, None]
    i = jnp.arange(d_model)[None, :]
    angle = pos / jnp.power(10000.0, (2 * (i // 2)).astype(jnp.float32) / d_model)
    return jnp.where(i % 2 == 0, jnp.sin(angle), jnp.cos(angle))


def embed(tokens, table, pe, d_model):
    # TODO(synk): embedding row gather stays in plain JAX (jnp.take); a
    # per-token gather has no clean rectangular BlockSpec at this size.
    x = jnp.take(table, tokens, axis=0) * math.sqrt(d_model)
    S = tokens.shape[1]
    return x + pe[:S][None, :, :]


def transformer_forward(params, src, tgt, cfg):
    B, S = src.shape
    T = tgt.shape[1]
    D = cfg["input_dim"]
    H = cfg["num_heads"]
    pe = params["pos_enc"]

    # encoder
    x = embed(src, params["src_embed"], pe, D)
    for lp in params["encoder_layers"]:
        x = encoder_layer(x, lp, H)
    enc_out = x

    # decoder (causal self-attention handled inside the kernel)
    y = embed(tgt, params["tgt_embed"], pe, D)
    for lp in params["decoder_layers"]:
        y = decoder_layer(y, enc_out, lp, H)

    logits = output_projection(y.reshape(B * T, D),
                               params["out_w"], params["out_b"],
                               cfg["vocab_size"])
    return logits.reshape(B, T, cfg["vocab_size"])


# ----------------------------------------------------------------------------
# Deterministic parameter construction (weights stored bf16, biases/LN f32)
# ----------------------------------------------------------------------------
def _init_dense(key, fan_in, fan_out):
    w = (jax.random.normal(key, (fan_in, fan_out), jnp.float32)
         / math.sqrt(fan_in)).astype(jnp.bfloat16)
    b = jnp.zeros((1, fan_out), jnp.float32)
    return w, b


def _init_attn(key, d):
    ks = jax.random.split(key, 4)
    wq, bq = _init_dense(ks[0], d, d)
    wk, bk = _init_dense(ks[1], d, d)
    wv, bv = _init_dense(ks[2], d, d)
    wo, bo = _init_dense(ks[3], d, d)
    # K and V projections fused into one [D, 2D] matmul
    return dict(wq=wq, bq=bq,
                wkv=jnp.concatenate([wk, wv], axis=1),
                bkv=jnp.concatenate([bk, bv], axis=1),
                wo=wo, bo=bo)


def _init_ffn(key, d, f):
    k1, k2 = jax.random.split(key)
    w1, b1 = _init_dense(k1, d, f)
    w2, b2 = _init_dense(k2, f, d)
    return dict(w1=w1, b1=b1, w2=w2, b2=b2)


def _ln_params(d):
    return jnp.ones((1, d), jnp.float32), jnp.zeros((1, d), jnp.float32)


def init_params(key, cfg):
    D, F = cfg["input_dim"], cfg["feature_dim"]
    V, L = cfg["vocab_size"], cfg["max_len"]
    keys = jax.random.split(
        key, 4 + cfg["num_encoder_layers"] + cfg["num_decoder_layers"])
    ki = iter(keys)

    params = {
        "src_embed": jax.random.normal(next(ki), (V, D), jnp.float32) * 0.02,
        "tgt_embed": jax.random.normal(next(ki), (V, D), jnp.float32) * 0.02,
        "pos_enc": positional_encoding(L, D),
        "encoder_layers": [],
        "decoder_layers": [],
    }
    for _ in range(cfg["num_encoder_layers"]):
        k1, k2 = jax.random.split(next(ki))
        g1, b1 = _ln_params(D)
        g2, b2 = _ln_params(D)
        params["encoder_layers"].append(dict(
            self_attn=_init_attn(k1, D), ffn=_init_ffn(k2, D, F),
            ln1_g=g1, ln1_b=b1, ln2_g=g2, ln2_b=b2))
    for _ in range(cfg["num_decoder_layers"]):
        k1, k2, k3 = jax.random.split(next(ki), 3)
        g1, b1 = _ln_params(D)
        g2, b2 = _ln_params(D)
        g3, b3 = _ln_params(D)
        params["decoder_layers"].append(dict(
            self_attn=_init_attn(k1, D), cross_attn=_init_attn(k2, D),
            ffn=_init_ffn(k3, D, F),
            ln1_g=g1, ln1_b=b1, ln2_g=g2, ln2_b=b2, ln3_g=g3, ln3_b=b3))

    # vocab projection, zero-padded to a lane-dense (multiple of 128) width
    Vpad = -(-V // 128) * 128
    ow = jax.random.normal(next(ki), (D, V), jnp.float32) / math.sqrt(D)
    ow_pad = jnp.zeros((D, Vpad), jnp.float32).at[:, :V].set(ow)
    params["out_w"] = ow_pad.astype(jnp.bfloat16)
    params["out_b"] = jnp.zeros((1, Vpad), jnp.float32)
    return params


# ----------------------------------------------------------------------------
if __name__ == "__main__":
    cfg = dict(
        vocab_size=50,
        input_dim=32,          # d_model
        num_heads=4,
        num_encoder_layers=2,
        num_decoder_layers=2,
        feature_dim=64,        # FFN hidden
        dropout=0.1,           # inference: identity
        max_len=16,
    )
    B, S_SRC, S_TGT = 2, 8, 8

    root = jax.random.PRNGKey(0)
    k_params, k_src, k_tgt = jax.random.split(root, 3)
    params = init_params(k_params, cfg)
    src = jax.random.randint(k_src, (B, S_SRC), 0, cfg["vocab_size"], jnp.int32)
    tgt = jax.random.randint(k_tgt, (B, S_TGT), 0, cfg["vocab_size"], jnp.int32)

    fwd = jax.jit(functools.partial(transformer_forward, cfg=cfg))
    logits = fwd(params, src, tgt)
    logits = jax.block_until_ready(logits)

    assert logits.shape == (B, S_TGT, cfg["vocab_size"]), logits.shape
    assert bool(jnp.all(jnp.isfinite(logits)))
    print("KERNEL_OK")
</pallas_src>

<mosaic_0001>
module attributes {stable_mosaic.version = 11 : i64} {
  func.func @_mha_block_kernel(%arg0: i32, %arg1: memref<1x8x32xf32, #tpu.memory_space<vmem>>, %arg2: memref<1x8x32xf32, #tpu.memory_space<vmem>>, %arg3: memref<32x32xbf16, #tpu.memory_space<vmem>>, %arg4: memref<1x32xf32, #tpu.memory_space<vmem>>, %arg5: memref<32x64xbf16, #tpu.memory_space<vmem>>, %arg6: memref<1x64xf32, #tpu.memory_space<vmem>>, %arg7: memref<32x32xbf16, #tpu.memory_space<vmem>>, %arg8: memref<1x32xf32, #tpu.memory_space<vmem>>, %arg9: memref<1x32xf32, #tpu.memory_space<vmem>>, %arg10: memref<1x32xf32, #tpu.memory_space<vmem>>, %arg11: memref<1x8x32xf32, #tpu.memory_space<vmem>>, %arg12: memref<8x32xf32, #tpu.memory_space<vmem>>) attributes {dimension_semantics = [#tpu.dimension_semantics<parallel>], iteration_bounds = array<i64: 2>, scalar_prefetch = 0 : i64, scratch_operands = 1 : i64, tpu.core_type = #tpu.core_type<tc>, window_params = [{transform_indices = @transform_0, window_bounds = array<i64: 1, 8, 32>}, {transform_indices = @transform_1, window_bounds = array<i64: 1, 8, 32>}, {pipeline_mode = #tpu.pipeline_mode<synchronous>, transform_indices = @transform_2, window_bounds = array<i64: 32, 32>}, {pipeline_mode = #tpu.pipeline_mode<synchronous>, transform_indices = @transform_3, window_bounds = array<i64: 1, 32>}, {pipeline_mode = #tpu.pipeline_mode<synchronous>, transform_indices = @transform_4, window_bounds = array<i64: 32, 64>}, {pipeline_mode = #tpu.pipeline_mode<synchronous>, transform_indices = @transform_5, window_bounds = array<i64: 1, 64>}, {pipeline_mode = #tpu.pipeline_mode<synchronous>, transform_indices = @transform_6, window_bounds = array<i64: 32, 32>}, {pipeline_mode = #tpu.pipeline_mode<synchronous>, transform_indices = @transform_7, window_bounds = array<i64: 1, 32>}, {pipeline_mode = #tpu.pipeline_mode<synchronous>, transform_indices = @transform_8, window_bounds = array<i64: 1, 32>}, {pipeline_mode = #tpu.pipeline_mode<synchronous>, transform_indices = @transform_9, window_bounds = array<i64: 1, 32>}, {transform_indices = @transform_10, window_bounds = array<i64: 1, 8, 32>}]} {
    %c0 = arith.constant 0 : index
    %c0_0 = arith.constant 0 : index
    %c0_1 = arith.constant 0 : index
    %0 = vector.load %arg1[%c0, %c0_0, %c0_1] : memref<1x8x32xf32, #tpu.memory_space<vmem>>, vector<1x8x32xf32>
    %1 = vector.shape_cast %0 : vector<1x8x32xf32> to vector<8x32xf32>
    %c0_2 = arith.constant 0 : index
    %c0_3 = arith.constant 0 : index
    %c0_4 = arith.constant 0 : index
    %2 = vector.load %arg2[%c0_2, %c0_3, %c0_4] : memref<1x8x32xf32, #tpu.memory_space<vmem>>, vector<1x8x32xf32>
    %3 = vector.shape_cast %2 : vector<1x8x32xf32> to vector<8x32xf32>
    %4 = arith.truncf %1 : vector<8x32xf32> to vector<8x32xbf16>
    %c0_5 = arith.constant 0 : index
    %c0_6 = arith.constant 0 : index
    %5 = vector.load %arg3[%c0_5, %c0_6] : memref<32x32xbf16, #tpu.memory_space<vmem>>, vector<32x32xbf16>
    %cst = arith.constant dense<0.000000e+00> : vector<8x32xf32>
    %6 = tpu.matmul %4, %5, %cst {dimension_numbers = #tpu.dot_dimension_numbers<[1], [0], [0], [1], [0, 0, 1, 1], [], []>} : vector<8x32xbf16>, vector<32x32xbf16>, vector<8x32xf32> -> vector<8x32xf32>
    %c0_7 = arith.constant 0 : index
    %c0_8 = arith.constant 0 : index
    %7 = vector.load %arg4[%c0_7, %c0_8] : memref<1x32xf32, #tpu.memory_space<vmem>>, vector<1x32xf32>
    %8 = vector.broadcast %7 : vector<1x32xf32> to vector<8x32xf32>
    %9 = arith.addf %6, %8 : vector<8x32xf32>
    %10 = arith.truncf %3 : vector<8x32xf32> to vector<8x32xbf16>
    %c0_9 = arith.constant 0 : index
    %c0_10 = arith.constant 0 : index
    %11 = vector.load %arg5[%c0_9, %c0_10] : memref<32x64xbf16, #tpu.memory_space<vmem>>, vector<32x64xbf16>
    %cst_11 = arith.constant dense<0.000000e+00> : vector<8x64xf32>
    %12 = tpu.matmul %10, %11, %cst_11 {dimension_numbers = #tpu.dot_dimension_numbers<[1], [0], [0], [1], [0, 0, 1, 1], [], []>} : vector<8x32xbf16>, vector<32x64xbf16>, vector<8x64xf32> -> vector<8x64xf32>
    %c0_12 = arith.constant 0 : index
    %c0_13 = arith.constant 0 : index
    %13 = vector.load %arg6[%c0_12, %c0_13] : memref<1x64xf32, #tpu.memory_space<vmem>>, vector<1x64xf32>
    %14 = vector.broadcast %13 : vector<1x64xf32> to vector<8x64xf32>
    %15 = arith.addf %12, %14 : vector<8x64xf32>
    %16 = vector.extract_strided_slice %15 {offsets = [0, 0], sizes = [8, 32], strides = [1, 1]} : vector<8x64xf32> to vector<8x32xf32>
    %17 = vector.extract_strided_slice %15 {offsets = [0, 32], sizes = [8, 32], strides = [1, 1]} : vector<8x64xf32> to vector<8x32xf32>
    %18 = vector.extract_strided_slice %9 {offsets = [0, 0], sizes = [8, 8], strides = [1, 1]} : vector<8x32xf32> to vector<8x8xf32>
    %19 = vector.extract_strided_slice %16 {offsets = [0, 0], sizes = [8, 8], strides = [1, 1]} : vector<8x32xf32> to vector<8x8xf32>
    %20 = vector.extract_strided_slice %17 {offsets = [0, 0], sizes = [8, 8], strides = [1, 1]} : vector<8x32xf32> to vector<8x8xf32>
    %21 = tpu.transpose %19, [1, 0] : vector<8x8xf32> -> vector<8x8xf32>
    %cst_14 = arith.constant dense<0.000000e+00> : vector<8x8xf32>
    %22 = tpu.matmul %18, %21, %cst_14 {dimension_numbers = #tpu.dot_dimension_numbers<[1], [0], [0], [1], [0, 0, 1, 1], [], []>} : vector<8x8xf32>, vector<8x8xf32>, vector<8x8xf32> -> vector<8x8xf32>
    %cst_15 = arith.constant 0.353553385 : f32
    %23 = vector.broadcast %cst_15 : f32 to vector<8x8xf32>
    %24 = arith.mulf %22, %23 : vector<8x8xf32>
    %cst_16 = arith.constant dense<0xFF800000> : vector<8xf32>
    %25 = vector.multi_reduction <maximumf>, %24, %cst_16 [1] : vector<8x8xf32> to vector<8xf32>
    %26 = vector.shape_cast %25 : vector<8xf32> to vector<8x1xf32>
    %27 = vector.broadcast %26 : vector<8x1xf32> to vector<8x8xf32>
    %28 = arith.subf %24, %27 : vector<8x8xf32>
    %29 = math.exp %28 : vector<8x8xf32>
    %cst_17 = arith.constant dense<0.000000e+00> : vector<8xf32>
    %30 = vector.multi_reduction <add>, %29, %cst_17 [1] : vector<8x8xf32> to vector<8xf32>
    %31 = vector.shape_cast %30 : vector<8xf32> to vector<8x1xf32>
    %32 = tpu.reciprocal %31 {approx = true} : vector<8x1xf32> -> vector<8x1xf32>
    %33 = vector.broadcast %32 : vector<8x1xf32> to vector<8x8xf32>
    %34 = arith.mulf %29, %33 : vector<8x8xf32>
    %cst_18 = arith.constant dense<0.000000e+00> : vector<8x8xf32>
    %35 = tpu.matmul %34, %20, %cst_18 {dimension_numbers = #tpu.dot_dimension_numbers<[1], [0], [0], [1], [0, 0, 1, 1], [], []>} : vector<8x8xf32>, vector<8x8xf32>, vector<8x8xf32> -> vector<8x8xf32>
    %c0_19 = arith.constant 0 : index
    %c0_20 = arith.constant 0 : index
    %36 = vector.load %arg12[%c0_19, %c0_20] : memref<8x32xf32, #tpu.memory_space<vmem>>, vector<8x8xf32>
    tpu.vector_store %arg12[%c0_19, %c0_20], %35 {strides = array<i32>} : memref<8x32xf32, #tpu.memory_space<vmem>>, vector<8x8xf32>,
    %37 = vector.extract_strided_slice %9 {offsets = [0, 8], sizes = [8, 8], strides = [1, 1]} : vector<8x32xf32> to vector<8x8xf32>
    %38 = vector.extract_strided_slice %16 {offsets = [0, 8], sizes = [8, 8], strides = [1, 1]} : vector<8x32xf32> to vector<8x8xf32>
    %39 = vector.extract_strided_slice %17 {offsets = [0, 8], sizes = [8, 8], strides = [1, 1]} : vector<8x32xf32> to vector<8x8xf32>
    %40 = tpu.transpose %38, [1, 0] : vector<8x8xf32> -> vector<8x8xf32>
    %cst_21 = arith.constant dense<0.000000e+00> : vector<8x8xf32>
    %41 = tpu.matmul %37, %40, %cst_21 {dimension_numbers = #tpu.dot_dimension_numbers<[1], [0], [0], [1], [0, 0, 1, 1], [], []>} : vector<8x8xf32>, vector<8x8xf32>, vector<8x8xf32> -> vector<8x8xf32>
    %cst_22 = arith.constant 0.353553385 : f32
    %42 = vector.broadcast %cst_22 : f32 to vector<8x8xf32>
    %43 = arith.mulf %41, %42 : vector<8x8xf32>
    %cst_23 = arith.constant dense<0xFF800000> : vector<8xf32>
    %44 = vector.multi_reduction <maximumf>, %43, %cst_23 [1] : vector<8x8xf32> to vector<8xf32>
    %45 = vector.shape_cast %44 : vector<8xf32> to vector<8x1xf32>
    %46 = vector.broadcast %45 : vector<8x1xf32> to vector<8x8xf32>
    %47 = arith.subf %43, %46 : vector<8x8xf32>
    %48 = math.exp %47 : vector<8x8xf32>
    %cst_24 = arith.constant dense<0.000000e+00> : vector<8xf32>
    %49 = vector.multi_reduction <add>, %48, %cst_24 [1] : vector<8x8xf32> to vector<8xf32>
    %50 = vector.shape_cast %49 : vector<8xf32> to vector<8x1xf32>
    %51 = tpu.reciprocal %50 {approx = true} : vector<8x1xf32> -> vector<8x1xf32>
    %52 = vector.broadcast %51 : vector<8x1xf32> to vector<8x8xf32>
    %53 = arith.mulf %48, %52 : vector<8x8xf32>
    %cst_25 = arith.constant dense<0.000000e+00> : vector<8x8xf32>
    %54 = tpu.matmul %53, %39, %cst_25 {dimension_numbers = #tpu.dot_dimension_numbers<[1], [0], [0], [1], [0, 0, 1, 1], [], []>} : vector<8x8xf32>, vector<8x8xf32>, vector<8x8xf32> -> vector<8x8xf32>
    %c0_26 = arith.constant 0 : index
    %c8 = arith.constant 8 : index
    %55 = vector.load %arg12[%c0_26, %c8] : memref<8x32xf32, #tpu.memory_space<vmem>>, vector<8x8xf32>
    tpu.vector_store %arg12[%c0_26, %c8], %54 {strides = array<i32>} : memref<8x32xf32, #tpu.memory_space<vmem>>, vector<8x8xf32>,
    %56 = vector.extract_strided_slice %9 {offsets = [0, 16], sizes = [8, 8], strides = [1, 1]} : vector<8x32xf32> to vector<8x8xf32>
    %57 = vector.extract_strided_slice %16 {offsets = [0, 16], sizes = [8, 8], strides = [1, 1]} : vector<8x32xf32> to vector<8x8xf32>
    %58 = vector.extract_strided_slice %17 {offsets = [0, 16], sizes = [8, 8], strides = [1, 1]} : vector<8x32xf32> to vector<8x8xf32>
    %59 = tpu.transpose %57, [1, 0] : vector<8x8xf32> -> vector<8x8xf32>
    %cst_27 = arith.constant dense<0.000000e+00> : vector<8x8xf32>
    %60 = tpu.matmul %56, %59, %cst_27 {dimension_numbers = #tpu.dot_dimension_numbers<[1], [0], [0], [1], [0, 0, 1, 1], [], []>} : vector<8x8xf32>, vector<8x8xf32>, vector<8x8xf32> -> vector<8x8xf32>
    %cst_28 = arith.constant 0.353553385 : f32
    %61 = vector.broadcast %cst_28 : f32 to vector<8x8xf32>
    %62 = arith.mulf %60, %61 : vector<8x8xf32>
    %cst_29 = arith.constant dense<0xFF800000> : vector<8xf32>
    %63 = vector.multi_reduction <maximumf>, %62, %cst_29 [1] : vector<8x8xf32> to vector<8xf32>
    %64 = vector.shape_cast %63 : vector<8xf32> to vector<8x1xf32>
    %65 = vector.broadcast %64 : vector<8x1xf32> to vector<8x8xf32>
    %66 = arith.subf %62, %65 : vector<8x8xf32>
    %67 = math.exp %66 : vector<8x8xf32>
    %cst_30 = arith.constant dense<0.000000e+00> : vector<8xf32>
    %68 = vector.multi_reduction <add>, %67, %cst_30 [1] : vector<8x8xf32> to vector<8xf32>
    %69 = vector.shape_cast %68 : vector<8xf32> to vector<8x1xf32>
    %70 = tpu.reciprocal %69 {approx = true} : vector<8x1xf32> -> vector<8x1xf32>
    %71 = vector.broadcast %70 : vector<8x1xf32> to vector<8x8xf32>
    %72 = arith.mulf %67, %71 : vector<8x8xf32>
    %cst_31 = arith.constant dense<0.000000e+00> : vector<8x8xf32>
    %73 = tpu.matmul %72, %58, %cst_31 {dimension_numbers = #tpu.dot_dimension_numbers<[1], [0], [0], [1], [0, 0, 1, 1], [], []>} : vector<8x8xf32>, vector<8x8xf32>, vector<8x8xf32> -> vector<8x8xf32>
    %c0_32 = arith.constant 0 : index
    %c16 = arith.constant 16 : index
    %74 = vector.load %arg12[%c0_32, %c16] : memref<8x32xf32, #tpu.memory_space<vmem>>, vector<8x8xf32>
    tpu.vector_store %arg12[%c0_32, %c16], %73 {strides = array<i32>} : memref<8x32xf32, #tpu.memory_space<vmem>>, vector<8x8xf32>,
    %75 = vector.extract_strided_slice %9 {offsets = [0, 24], sizes = [8, 8], strides = [1, 1]} : vector<8x32xf32> to vector<8x8xf32>
    %76 = vector.extract_strided_slice %16 {offsets = [0, 24], sizes = [8, 8], strides = [1, 1]} : vector<8x32xf32> to vector<8x8xf32>
    %77 = vector.extract_strided_slice %17 {offsets = [0, 24], sizes = [8, 8], strides = [1, 1]} : vector<8x32xf32> to vector<8x8xf32>
    %78 = tpu.transpose %76, [1, 0] : vector<8x8xf32> -> vector<8x8xf32>
    %cst_33 = arith.constant dense<0.000000e+00> : vector<8x8xf32>
    %79 = tpu.matmul %75, %78, %cst_33 {dimension_numbers = #tpu.dot_dimension_numbers<[1], [0], [0], [1], [0, 0, 1, 1], [], []>} : vector<8x8xf32>, vector<8x8xf32>, vector<8x8xf32> -> vector<8x8xf32>
    %cst_34 = arith.constant 0.353553385 : f32
    %80 = vector.broadcast %cst_34 : f32 to vector<8x8xf32>
    %81 = arith.mulf %79, %80 : vector<8x8xf32>
    %cst_35 = arith.constant dense<0xFF800000> : vector<8xf32>
    %82 = vector.multi_reduction <maximumf>, %81, %cst_35 [1] : vector<8x8xf32> to vector<8xf32>
    %83 = vector.shape_cast %82 : vector<8xf32> to vector<8x1xf32>
    %84 = vector.broadcast %83 : vector<8x1xf32> to vector<8x8xf32>
    %85 = arith.subf %81, %84 : vector<8x8xf32>
    %86 = math.exp %85 : vector<8x8xf32>
    %cst_36 = arith.constant dense<0.000000e+00> : vector<8xf32>
    %87 = vector.multi_reduction <add>, %86, %cst_36 [1] : vector<8x8xf32> to vector<8xf32>
    %88 = vector.shape_cast %87 : vector<8xf32> to vector<8x1xf32>
    %89 = tpu.reciprocal %88 {approx = true} : vector<8x1xf32> -> vector<8x1xf32>
    %90 = vector.broadcast %89 : vector<8x1xf32> to vector<8x8xf32>
    %91 = arith.mulf %86, %90 : vector<8x8xf32>
    %cst_37 = arith.constant dense<0.000000e+00> : vector<8x8xf32>
    %92 = tpu.matmul %91, %77, %cst_37 {dimension_numbers = #tpu.dot_dimension_numbers<[1], [0], [0], [1], [0, 0, 1, 1], [], []>} : vector<8x8xf32>, vector<8x8xf32>, vector<8x8xf32> -> vector<8x8xf32>
    %c0_38 = arith.constant 0 : index
    %c24 = arith.constant 24 : index
    %93 = vector.load %arg12[%c0_38, %c24] : memref<8x32xf32, #tpu.memory_space<vmem>>, vector<8x8xf32>
    tpu.vector_store %arg12[%c0_38, %c24], %92 {strides = array<i32>} : memref<8x32xf32, #tpu.memory_space<vmem>>, vector<8x8xf32>,
    %c0_39 = arith.constant 0 : index
    %c0_40 = arith.constant 0 : index
    %94 = vector.load %arg12[%c0_39, %c0_40] : memref<8x32xf32, #tpu.memory_space<vmem>>, vector<8x32xf32>
    %95 = arith.truncf %94 : vector<8x32xf32> to vector<8x32xbf16>
    %c0_41 = arith.constant 0 : index
    %c0_42 = arith.constant 0 : index
    %96 = vector.load %arg7[%c0_41, %c0_42] : memref<32x32xbf16, #tpu.memory_space<vmem>>, vector<32x32xbf16>
    %cst_43 = arith.constant dense<0.000000e+00> : vector<8x32xf32>
    %97 = tpu.matmul %95, %96, %cst_43 {dimension_numbers = #tpu.dot_dimension_numbers<[1], [0], [0], [1], [0, 0, 1, 1], [], []>} : vector<8x32xbf16>, vector<32x32xbf16>, vector<8x32xf32> -> vector<8x32xf32>
    %c0_44 = arith.constant 0 : index
    %c0_45 = arith.constant 0 : index
    %98 = vector.load %arg8[%c0_44, %c0_45] : memref<1x32xf32, #tpu.memory_space<vmem>>, vector<1x32xf32>
    %99 = vector.broadcast %98 : vector<1x32xf32> to vector<8x32xf32>
    %100 = arith.addf %97, %99 : vector<8x32xf32>
    %101 = arith.addf %1, %100 : vector<8x32xf32>
    %cst_46 = arith.constant dense<0.000000e+00> : vector<8xf32>
    %102 = vector.multi_reduction <add>, %101, %cst_46 [1] : vector<8x32xf32> to vector<8xf32>
    %103 = vector.shape_cast %102 : vector<8xf32> to vector<8x1xf32>
    %cst_47 = arith.constant 3.200000e+01 : f32
    %104 = vector.broadcast %cst_47 : f32 to vector<8x1xf32>
    %105 = arith.divf %103, %104 : vector<8x1xf32>
    %106 = vector.broadcast %105 : vector<8x1xf32> to vector<8x32xf32>
    %107 = arith.subf %101, %106 : vector<8x32xf32>
    %108 = arith.mulf %107, %107 : vector<8x32xf32>
    %cst_48 = arith.constant dense<0.000000e+00> : vector<8xf32>
    %109 = vector.multi_reduction <add>, %108, %cst_48 [1] : vector<8x32xf32> to vector<8xf32>
    %110 = vector.shape_cast %109 : vector<8xf32> to vector<8x1xf32>
    %cst_49 = arith.constant 3.200000e+01 : f32
    %111 = vector.broadcast %cst_49 : f32 to vector<8x1xf32>
    %112 = arith.divf %110, %111 : vector<8x1xf32>
    %113 = vector.broadcast %105 : vector<8x1xf32> to vector<8x32xf32>
    %114 = arith.subf %101, %113 : vector<8x32xf32>
    %cst_50 = arith.constant 9.99999974E-6 : f32
    %115 = vector.broadcast %cst_50 : f32 to vector<8x1xf32>
    %116 = arith.addf %112, %115 : vector<8x1xf32>
    %117 = math.rsqrt %116 : vector<8x1xf32>
    %118 = vector.broadcast %117 : vector<8x1xf32> to vector<8x32xf32>
    %119 = arith.mulf %114, %118 : vector<8x32xf32>
    %c0_51 = arith.constant 0 : index
    %c0_52 = arith.constant 0 : index
    %120 = vector.load %arg9[%c0_51, %c0_52] : memref<1x32xf32, #tpu.memory_space<vmem>>, vector<1x32xf32>
    %121 = vector.broadcast %120 : vector<1x32xf32> to vector<8x32xf32>
    %122 = arith.mulf %119, %121 : vector<8x32xf32>
    %c0_53 = arith.constant 0 : index
    %c0_54 = arith.constant 0 : index
    %123 = vector.load %arg10[%c0_53, %c0_54] : memref<1x32xf32, #tpu.memory_space<vmem>>, vector<1x32xf32>
    %124 = vector.broadcast %123 : vector<1x32xf32> to vector<8x32xf32>
    %125 = arith.addf %122, %124 : vector<8x32xf32>
    %c0_55 = arith.constant 0 : index
    %c0_56 = arith.constant 0 : index
    %c0_57 = arith.constant 0 : index
    %126 = vector.load %arg11[%c0_55, %c0_56, %c0_57] : memref<1x8x32xf32, #tpu.memory_space<vmem>>, vector<1x8x32xf32>
    %127 = vector.shape_cast %126 : vector<1x8x32xf32> to vector<8x32xf32>
    %128 = vector.shape_cast %125 : vector<8x32xf32> to vector<1x8x32xf32>
    tpu.vector_store %arg11[%c0_55, %c0_56, %c0_57], %128 {strides = array<i32>} : memref<1x8x32xf32, #tpu.memory_space<vmem>>, vector<1x8x32xf32>,
    return
  }
  func.func @transform_0(%arg0: i32) -> (i32, i32, i32) {
    %c0_i32 = arith.constant 0 : i32
    %c0_i32_0 = arith.constant 0 : i32
    %c0_i32_1 = arith.constant 0 : i32
    return %arg0, %c0_i32, %c0_i32_0 : i32, i32, i32
  }
  func.func @transform_1(%arg0: i32) -> (i32, i32, i32) {
    %c0_i32 = arith.constant 0 : i32
    %c0_i32_0 = arith.constant 0 : i32
    %c0_i32_1 = arith.constant 0 : i32
    return %arg0, %c0_i32, %c0_i32_0 : i32, i32, i32
  }
  func.func @transform_2(%arg0: i32) -> (i32, i32) {
    %c0_i32 = arith.constant 0 : i32
    %c0_i32_0 = arith.constant 0 : i32
    %c0_i32_1 = arith.constant 0 : i32
    return %c0_i32, %c0_i32_0 : i32, i32
  }
  func.func @transform_3(%arg0: i32) -> (i32, i32) {
    %c0_i32 = arith.constant 0 : i32
    %c0_i32_0 = arith.constant 0 : i32
    %c0_i32_1 = arith.constant 0 : i32
    return %c0_i32, %c0_i32_0 : i32, i32
  }
  func.func @transform_4(%arg0: i32) -> (i32, i32) {
    %c0_i32 = arith.constant 0 : i32
    %c0_i32_0 = arith.constant 0 : i32
    %c0_i32_1 = arith.constant 0 : i32
    return %c0_i32, %c0_i32_0 : i32, i32
  }
  func.func @transform_5(%arg0: i32) -> (i32, i32) {
    %c0_i32 = arith.constant 0 : i32
    %c0_i32_0 = arith.constant 0 : i32
    %c0_i32_1 = arith.constant 0 : i32
    return %c0_i32, %c0_i32_0 : i32, i32
  }
  func.func @transform_6(%arg0: i32) -> (i32, i32) {
    %c0_i32 = arith.constant 0 : i32
    %c0_i32_0 = arith.constant 0 : i32
    %c0_i32_1 = arith.constant 0 : i32
    return %c0_i32, %c0_i32_0 : i32, i32
  }
  func.func @transform_7(%arg0: i32) -> (i32, i32) {
    %c0_i32 = arith.constant 0 : i32
    %c0_i32_0 = arith.constant 0 : i32
    %c0_i32_1 = arith.constant 0 : i32
    return %c0_i32, %c0_i32_0 : i32, i32
  }
  func.func @transform_8(%arg0: i32) -> (i32, i32) {
    %c0_i32 = arith.constant 0 : i32
    %c0_i32_0 = arith.constant 0 : i32
    %c0_i32_1 = arith.constant 0 : i32
    return %c0_i32, %c0_i32_0 : i32, i32
  }
  func.func @transform_9(%arg0: i32) -> (i32, i32) {
    %c0_i32 = arith.constant 0 : i32
    %c0_i32_0 = arith.constant 0 : i32
    %c0_i32_1 = arith.constant 0 : i32
    return %c0_i32, %c0_i32_0 : i32, i32
  }
  func.func @transform_10(%arg0: i32) -> (i32, i32, i32) {
    %c0_i32 = arith.constant 0 : i32
    %c0_i32_0 = arith.constant 0 : i32
    %c0_i32_1 = arith.constant 0 : i32
    return %arg0, %c0_i32, %c0_i32_0 : i32, i32, i32
  }
}

module attributes {stable_mosaic.version = 11 : i64} {
  func.func @_ffn_block_kernel(%arg0: i32, %arg1: memref<1x8x32xf32, #tpu.memory_space<vmem>>, %arg2: memref<32x64xbf16, #tpu.memory_space<vmem>>, %arg3: memref<1x64xf32, #tpu.memory_space<vmem>>, %arg4: memref<64x32xbf16, #tpu.memory_space<vmem>>, %arg5: memref<1x32xf32, #tpu.memory_space<vmem>>, %arg6: memref<1x32xf32, #tpu.memory_space<vmem>>, %arg7: memref<1x32xf32, #tpu.memory_space<vmem>>, %arg8: memref<1x8x32xf32, #tpu.memory_space<vmem>>) attributes {dimension_semantics = [#tpu.dimension_semantics<parallel>], iteration_bounds = array<i64: 2>, scalar_prefetch = 0 : i64, scratch_operands = 0 : i64, tpu.core_type = #tpu.core_type<tc>, window_params = [{transform_indices = @transform_0, window_bounds = array<i64: 1, 8, 32>}, {pipeline_mode = #tpu.pipeline_mode<synchronous>, transform_indices = @transform_1, window_bounds = array<i64: 32, 64>}, {pipeline_mode = #tpu.pipeline_mode<synchronous>, transform_indices = @transform_2, window_bounds = array<i64: 1, 64>}, {pipeline_mode = #tpu.pipeline_mode<synchronous>, transform_indices = @transform_3, window_bounds = array<i64: 64, 32>}, {pipeline_mode = #tpu.pipeline_mode<synchronous>, transform_indices = @transform_4, window_bounds = array<i64: 1, 32>}, {pipeline_mode = #tpu.pipeline_mode<synchronous>, transform_indices = @transform_5, window_bounds = array<i64: 1, 32>}, {pipeline_mode = #tpu.pipeline_mode<synchronous>, transform_indices = @transform_6, window_bounds = array<i64: 1, 32>}, {transform_indices = @transform_7, window_bounds = array<i64: 1, 8, 32>}]} {
    %c0 = arith.constant 0 : index
    %c0_0 = arith.constant 0 : index
    %c0_1 = arith.constant 0 : index
    %0 = vector.load %arg1[%c0, %c0_0, %c0_1] : memref<1x8x32xf32, #tpu.memory_space<vmem>>, vector<1x8x32xf32>
    %1 = vector.shape_cast %0 : vector<1x8x32xf32> to vector<8x32xf32>
    %2 = arith.truncf %1 : vector<8x32xf32> to vector<8x32xbf16>
    %c0_2 = arith.constant 0 : index
    %c0_3 = arith.constant 0 : index
    %3 = vector.load %arg2[%c0_2, %c0_3] : memref<32x64xbf16, #tpu.memory_space<vmem>>, vector<32x64xbf16>
    %cst = arith.constant dense<0.000000e+00> : vector<8x64xf32>
    %4 = tpu.matmul %2, %3, %cst {dimension_numbers = #tpu.dot_dimension_numbers<[1], [0], [0], [1], [0, 0, 1, 1], [], []>} : vector<8x32xbf16>, vector<32x64xbf16>, vector<8x64xf32> -> vector<8x64xf32>
    %c0_4 = arith.constant 0 : index
    %c0_5 = arith.constant 0 : index
    %5 = vector.load %arg3[%c0_4, %c0_5] : memref<1x64xf32, #tpu.memory_space<vmem>>, vector<1x64xf32>
    %6 = vector.broadcast %5 : vector<1x64xf32> to vector<8x64xf32>
    %7 = arith.addf %4, %6 : vector<8x64xf32>
    %cst_6 = arith.constant 0.000000e+00 : f32
    %8 = vector.broadcast %cst_6 : f32 to vector<8x64xf32>
    %9 = arith.maximumf %7, %8 : vector<8x64xf32>
    %10 = arith.truncf %9 : vector<8x64xf32> to vector<8x64xbf16>
    %c0_7 = arith.constant 0 : index
    %c0_8 = arith.constant 0 : index
    %11 = vector.load %arg4[%c0_7, %c0_8] : memref<64x32xbf16, #tpu.memory_space<vmem>>, vector<64x32xbf16>
    %cst_9 = arith.constant dense<0.000000e+00> : vector<8x32xf32>
    %12 = tpu.matmul %10, %11, %cst_9 {dimension_numbers = #tpu.dot_dimension_numbers<[1], [0], [0], [1], [0, 0, 1, 1], [], []>} : vector<8x64xbf16>, vector<64x32xbf16>, vector<8x32xf32> -> vector<8x32xf32>
    %c0_10 = arith.constant 0 : index
    %c0_11 = arith.constant 0 : index
    %13 = vector.load %arg5[%c0_10, %c0_11] : memref<1x32xf32, #tpu.memory_space<vmem>>, vector<1x32xf32>
    %14 = vector.broadcast %13 : vector<1x32xf32> to vector<8x32xf32>
    %15 = arith.addf %12, %14 : vector<8x32xf32>
    %16 = arith.addf %1, %15 : vector<8x32xf32>
    %cst_12 = arith.constant dense<0.000000e+00> : vector<8xf32>
    %17 = vector.multi_reduction <add>, %16, %cst_12 [1] : vector<8x32xf32> to vector<8xf32>
    %18 = vector.shape_cast %17 : vector<8xf32> to vector<8x1xf32>
    %cst_13 = arith.constant 3.200000e+01 : f32
    %19 = vector.broadcast %cst_13 : f32 to vector<8x1xf32>
    %20 = arith.divf %18, %19 : vector<8x1xf32>
    %21 = vector.broadcast %20 : vector<8x1xf32> to vector<8x32xf32>
    %22 = arith.subf %16, %21 : vector<8x32xf32>
    %23 = arith.mulf %22, %22 : vector<8x32xf32>
    %cst_14 = arith.constant dense<0.000000e+00> : vector<8xf32>
    %24 = vector.multi_reduction <add>, %23, %cst_14 [1] : vector<8x32xf32> to vector<8xf32>
    %25 = vector.shape_cast %24 : vector<8xf32> to vector<8x1xf32>
    %cst_15 = arith.constant 3.200000e+01 : f32
    %26 = vector.broadcast %cst_15 : f32 to vector<8x1xf32>
    %27 = arith.divf %25, %26 : vector<8x1xf32>
    %28 = vector.broadcast %20 : vector<8x1xf32> to vector<8x32xf32>
    %29 = arith.subf %16, %28 : vector<8x32xf32>
    %cst_16 = arith.constant 9.99999974E-6 : f32
    %30 = vector.broadcast %cst_16 : f32 to vector<8x1xf32>
    %31 = arith.addf %27, %30 : vector<8x1xf32>
    %32 = math.rsqrt %31 : vector<8x1xf32>
    %33 = vector.broadcast %32 : vector<8x1xf32> to vector<8x32xf32>
    %34 = arith.mulf %29, %33 : vector<8x32xf32>
    %c0_17 = arith.constant 0 : index
    %c0_18 = arith.constant 0 : index
    %35 = vector.load %arg6[%c0_17, %c0_18] : memref<1x32xf32, #tpu.memory_space<vmem>>, vector<1x32xf32>
    %36 = vector.broadcast %35 : vector<1x32xf32> to vector<8x32xf32>
    %37 = arith.mulf %34, %36 : vector<8x32xf32>
    %c0_19 = arith.constant 0 : index
    %c0_20 = arith.constant 0 : index
    %38 = vector.load %arg7[%c0_19, %c0_20] : memref<1x32xf32, #tpu.memory_space<vmem>>, vector<1x32xf32>
    %39 = vector.broadcast %38 : vector<1x32xf32> to vector<8x32xf32>
    %40 = arith.addf %37, %39 : vector<8x32xf32>
    %c0_21 = arith.constant 0 : index
    %c0_22 = arith.constant 0 : index
    %c0_23 = arith.constant 0 : index
    %41 = vector.load %arg8[%c0_21, %c0_22, %c0_23] : memref<1x8x32xf32, #tpu.memory_space<vmem>>, vector<1x8x32xf32>
    %42 = vector.shape_cast %41 : vector<1x8x32xf32> to vector<8x32xf32>
    %43 = vector.shape_cast %40 : vector<8x32xf32> to vector<1x8x32xf32>
    tpu.vector_store %arg8[%c0_21, %c0_22, %c0_23], %43 {strides = array<i32>} : memref<1x8x32xf32, #tpu.memory_space<vmem>>, vector<1x8x32xf32>,
    return
  }
  func.func @transform_0(%arg0: i32) -> (i32, i32, i32) {
    %c0_i32 = arith.constant 0 : i32
    %c0_i32_0 = arith.constant 0 : i32
    %c0_i32_1 = arith.constant 0 : i32
    return %arg0, %c0_i32, %c0_i32_0 : i32, i32, i32
  }
  func.func @transform_1(%arg0: i32) -> (i32, i32) {
    %c0_i32 = arith.constant 0 : i32
    %c0_i32_0 = arith.constant 0 : i32
    %c0_i32_1 = arith.constant 0 : i32
    return %c0_i32, %c0_i32_0 : i32, i32
  }
  func.func @transform_2(%arg0: i32) -> (i32, i32) {
    %c0_i32 = arith.constant 0 : i32
    %c0_i32_0 = arith.constant 0 : i32
    %c0_i32_1 = arith.constant 0 : i32
    return %c0_i32, %c0_i32_0 : i32, i32
  }
  func.func @transform_3(%arg0: i32) -> (i32, i32) {
    %c0_i32 = arith.constant 0 : i32
    %c0_i32_0 = arith.constant 0 : i32
    %c0_i32_1 = arith.constant 0 : i32
    return %c0_i32, %c0_i32_0 : i32, i32
  }
  func.func @transform_4(%arg0: i32) -> (i32, i32) {
    %c0_i32 = arith.constant 0 : i32
    %c0_i32_0 = arith.constant 0 : i32
    %c0_i32_1 = arith.constant 0 : i32
    return %c0_i32, %c0_i32_0 : i32, i32
  }
  func.func @transform_5(%arg0: i32) -> (i32, i32) {
    %c0_i32 = arith.constant 0 : i32
    %c0_i32_0 = arith.constant 0 : i32
    %c0_i32_1 = arith.constant 0 : i32
    return %c0_i32, %c0_i32_0 : i32, i32
  }
  func.func @transform_6(%arg0: i32) -> (i32, i32) {
    %c0_i32 = arith.constant 0 : i32
    %c0_i32_0 = arith.constant 0 : i32
    %c0_i32_1 = arith.constant 0 : i32
    return %c0_i32, %c0_i32_0 : i32, i32
  }
  func.func @transform_7(%arg0: i32) -> (i32, i32, i32) {
    %c0_i32 = arith.constant 0 : i32
    %c0_i32_0 = arith.constant 0 : i32
    %c0_i32_1 = arith.constant 0 : i32
    return %arg0, %c0_i32, %c0_i32_0 : i32, i32, i32
  }
}

module attributes {stable_mosaic.version = 11 : i64} {
  func.func @_ffn_block_kernel(%arg0: i32, %arg1: memref<1x8x32xf32, #tpu.memory_space<vmem>>, %arg2: memref<32x64xbf16, #tpu.memory_space<vmem>>, %arg3: memref<1x64xf32, #tpu.memory_space<vmem>>, %arg4: memref<64x32xbf16, #tpu.memory_space<vmem>>, %arg5: memref<1x32xf32, #tpu.memory_space<vmem>>, %arg6: memref<1x32xf32, #tpu.memory_space<vmem>>, %arg7: memref<1x32xf32, #tpu.memory_space<vmem>>, %arg8: memref<1x8x32xf32, #tpu.memory_space<vmem>>) attributes {dimension_semantics = [#tpu.dimension_semantics<parallel>], iteration_bounds = array<i64: 2>, scalar_prefetch = 0 : i64, scratch_operands = 0 : i64, tpu.core_type = #tpu.core_type<tc>, window_params = [{transform_indices = @transform_0, window_bounds = array<i64: 1, 8, 32>}, {pipeline_mode = #tpu.pipeline_mode<synchronous>, transform_indices = @transform_1, window_bounds = array<i64: 32, 64>}, {pipeline_mode = #tpu.pipeline_mode<synchronous>, transform_indices = @transform_2, window_bounds = array<i64: 1, 64>}, {pipeline_mode = #tpu.pipeline_mode<synchronous>, transform_indices = @transform_3, window_bounds = array<i64: 64, 32>}, {pipeline_mode = #tpu.pipeline_mode<synchronous>, transform_indices = @transform_4, window_bounds = array<i64: 1, 32>}, {pipeline_mode = #tpu.pipeline_mode<synchronous>, transform_indices = @transform_5, window_bounds = array<i64: 1, 32>}, {pipeline_mode = #tpu.pipeline_mode<synchronous>, transform_indices = @transform_6, window_bounds = array<i64: 1, 32>}, {transform_indices = @transform_7, window_bounds = array<i64: 1, 8, 32>}]} {
    %c0 = arith.constant 0 : index
    %c0_0 = arith.constant 0 : index
    %c0_1 = arith.constant 0 : index
    %0 = vector.load %arg1[%c0, %c0_0, %c0_1] : memref<1x8x32xf32, #tpu.memory_space<vmem>>, vector<1x8x32xf32>
    %1 = vector.shape_cast %0 : vector<1x8x32xf32> to vector<8x32xf32>
    %2 = arith.truncf %1 : vector<8x32xf32> to vector<8x32xbf16>
    %c0_2 = arith.constant 0 : index
    %c0_3 = arith.constant 0 : index
    %3 = vector.load %arg2[%c0_2, %c0_3] : memref<32x64xbf16, #tpu.memory_space<vmem>>, vector<32x64xbf16>
    %cst = arith.constant dense<0.000000e+00> : vector<8x64xf32>
    %4 = tpu.matmul %2, %3, %cst {dimension_numbers = #tpu.dot_dimension_numbers<[1], [0], [0], [1], [0, 0, 1, 1], [], []>} : vector<8x32xbf16>, vector<32x64xbf16>, vector<8x64xf32> -> vector<8x64xf32>
    %c0_4 = arith.constant 0 : index
    %c0_5 = arith.constant 0 : index
    %5 = vector.load %arg3[%c0_4, %c0_5] : memref<1x64xf32, #tpu.memory_space<vmem>>, vector<1x64xf32>
    %6 = vector.broadcast %5 : vector<1x64xf32> to vector<8x64xf32>
    %7 = arith.addf %4, %6 : vector<8x64xf32>
    %cst_6 = arith.constant 0.000000e+00 : f32
    %8 = vector.broadcast %cst_6 : f32 to vector<8x64xf32>
    %9 = arith.maximumf %7, %8 : vector<8x64xf32>
    %10 = arith.truncf %9 : vector<8x64xf32> to vector<8x64xbf16>
    %c0_7 = arith.constant 0 : index
    %c0_8 = arith.constant 0 : index
    %11 = vector.load %arg4[%c0_7, %c0_8] : memref<64x32xbf16, #tpu.memory_space<vmem>>, vector<64x32xbf16>
    %cst_9 = arith.constant dense<0.000000e+00> : vector<8x32xf32>
    %12 = tpu.matmul %10, %11, %cst_9 {dimension_numbers = #tpu.dot_dimension_numbers<[1], [0], [0], [1], [0, 0, 1, 1], [], []>} : vector<8x64xbf16>, vector<64x32xbf16>, vector<8x32xf32> -> vector<8x32xf32>
    %c0_10 = arith.constant 0 : index
    %c0_11 = arith.constant 0 : index
    %13 = vector.load %arg5[%c0_10, %c0_11] : memref<1x32xf32, #tpu.memory_space<vmem>>, vector<1x32xf32>
    %14 = vector.broadcast %13 : vector<1x32xf32> to vector<8x32xf32>
    %15 = arith.addf %12, %14 : vector<8x32xf32>
    %16 = arith.addf %1, %15 : vector<8x32xf32>
    %cst_12 = arith.constant dense<0.000000e+00> : vector<8xf32>
    %17 = vector.multi_reduction <add>, %16, %cst_12 [1] : vector<8x32xf32> to vector<8xf32>
    %18 = vector.shape_cast %17 : vector<8xf32> to vector<8x1xf32>
    %cst_13 = arith.constant 3.200000e+01 : f32
    %19 = vector.broadcast %cst_13 : f32 to vector<8x1xf32>
    %20 = arith.divf %18, %19 : vector<8x1xf32>
    %21 = vector.broadcast %20 : vector<8x1xf32> to vector<8x32xf32>
    %22 = arith.subf %16, %21 : vector<8x32xf32>
    %23 = arith.mulf %22, %22 : vector<8x32xf32>
    %cst_14 = arith.constant dense<0.000000e+00> : vector<8xf32>
    %24 = vector.multi_reduction <add>, %23, %cst_14 [1] : vector<8x32xf32> to vector<8xf32>
    %25 = vector.shape_cast %24 : vector<8xf32> to vector<8x1xf32>
    %cst_15 = arith.constant 3.200000e+01 : f32
    %26 = vector.broadcast %cst_15 : f32 to vector<8x1xf32>
    %27 = arith.divf %25, %26 : vector<8x1xf32>
    %28 = vector.broadcast %20 : vector<8x1xf32> to vector<8x32xf32>
    %29 = arith.subf %16, %28 : vector<8x32xf32>
    %cst_16 = arith.constant 9.99999974E-6 : f32
    %30 = vector.broadcast %cst_16 : f32 to vector<8x1xf32>
    %31 = arith.addf %27, %30 : vector<8x1xf32>
    %32 = math.rsqrt %31 : vector<8x1xf32>
    %33 = vector.broadcast %32 : vector<8x1xf32> to vector<8x32xf32>
    %34 = arith.mulf %29, %33 : vector<8x32xf32>
    %c0_17 = arith.constant 0 : index
    %c0_18 = arith.constant 0 : index
    %35 = vector.load %arg6[%c0_17, %c0_18] : memref<1x32xf32, #tpu.memory_space<vmem>>, vector<1x32xf32>
    %36 = vector.broadcast %35 : vector<1x32xf32> to vector<8x32xf32>
    %37 = arith.mulf %34, %36 : vector<8x32xf32>
    %c0_19 = arith.constant 0 : index
    %c0_20 = arith.constant 0 : index
    %38 = vector.load %arg7[%c0_19, %c0_20] : memref<1x32xf32, #tpu.memory_space<vmem>>, vector<1x32xf32>
    %39 = vector.broadcast %38 : vector<1x32xf32> to vector<8x32xf32>
    %40 = arith.addf %37, %39 : vector<8x32xf32>
    %c0_21 = arith.constant 0 : index
    %c0_22 = arith.constant 0 : index
    %c0_23 = arith.constant 0 : index
    %41 = vector.load %arg8[%c0_21, %c0_22, %c0_23] : memref<1x8x32xf32, #tpu.memory_space<vmem>>, vector<1x8x32xf32>
    %42 = vector.shape_cast %41 : vector<1x8x32xf32> to vector<8x32xf32>
    %43 = vector.shape_cast %40 : vector<8x32xf32> to vector<1x8x32xf32>
    tpu.vector_store %arg8[%c0_21, %c0_22, %c0_23], %43 {strides = array<i32>} : memref<1x8x32xf32, #tpu.memory_space<vmem>>, vector<1x8x32xf32>,
    return
  }
  func.func @transform_0(%arg0: i32) -> (i32, i32, i32) {
    %c0_i32 = arith.constant 0 : i32
    %c0_i32_0 = arith.constant 0 : i32
    %c0_i32_1 = arith.constant 0 : i32
    return %arg0, %c0_i32, %c0_i32_0 : i32, i32, i32
  }
  func.func @transform_1(%arg0: i32) -> (i32, i32) {
    %c0_i32 = arith.constant 0 : i32
    %c0_i32_0 = arith.constant 0 : i32
    %c0_i32_1 = arith.constant 0 : i32
    return %c0_i32, %c0_i32_0 : i32, i32
  }
  func.func @transform_2(%arg0: i32) -> (i32, i32) {
    %c0_i32 = arith.constant 0 : i32
    %c0_i32_0 = arith.constant 0 : i32
    %c0_i32_1 = arith.constant 0 : i32
    return %c0_i32, %c0_i32_0 : i32, i32
  }
  func.func @transform_3(%arg0: i32) -> (i32, i32) {
    %c0_i32 = arith.constant 0 : i32
    %c0_i32_0 = arith.constant 0 : i32
    %c0_i32_1 = arith.constant 0 : i32
    return %c0_i32, %c0_i32_0 : i32, i32
  }
  func.func @transform_4(%arg0: i32) -> (i32, i32) {
    %c0_i32 = arith.constant 0 : i32
    %c0_i32_0 = arith.constant 0 : i32
    %c0_i32_1 = arith.constant 0 : i32
    return %c0_i32, %c0_i32_0 : i32, i32
  }
  func.func @transform_5(%arg0: i32) -> (i32, i32) {
    %c0_i32 = arith.constant 0 : i32
    %c0_i32_0 = arith.constant 0 : i32
    %c0_i32_1 = arith.constant 0 : i32
    return %c0_i32, %c0_i32_0 : i32, i32
  }
  func.func @transform_6(%arg0: i32) -> (i32, i32) {
    %c0_i32 = arith.constant 0 : i32
    %c0_i32_0 = arith.constant 0 : i32
    %c0_i32_1 = arith.constant 0 : i32
    return %c0_i32, %c0_i32_0 : i32, i32
  }
  func.func @transform_7(%arg0: i32) -> (i32, i32, i32) {
    %c0_i32 = arith.constant 0 : i32
    %c0_i32_0 = arith.constant 0 : i32
    %c0_i32_1 = arith.constant 0 : i32
    return %arg0, %c0_i32, %c0_i32_0 : i32, i32, i32
  }
}

module attributes {stable_mosaic.version = 11 : i64} {
  func.func @_mha_block_kernel(%arg0: i32, %arg1: memref<1x8x32xf32, #tpu.memory_space<vmem>>, %arg2: memref<1x8x32xf32, #tpu.memory_space<vmem>>, %arg3: memref<32x32xbf16, #tpu.memory_space<vmem>>, %arg4: memref<1x32xf32, #tpu.memory_space<vmem>>, %arg5: memref<32x64xbf16, #tpu.memory_space<vmem>>, %arg6: memref<1x64xf32, #tpu.memory_space<vmem>>, %arg7: memref<32x32xbf16, #tpu.memory_space<vmem>>, %arg8: memref<1x32xf32, #tpu.memory_space<vmem>>, %arg9: memref<1x32xf32, #tpu.memory_space<vmem>>, %arg10: memref<1x32xf32, #tpu.memory_space<vmem>>, %arg11: memref<1x8x32xf32, #tpu.memory_space<vmem>>, %arg12: memref<8x32xf32, #tpu.memory_space<vmem>>) attributes {dimension_semantics = [#tpu.dimension_semantics<parallel>], iteration_bounds = array<i64: 2>, scalar_prefetch = 0 : i64, scratch_operands = 1 : i64, tpu.core_type = #tpu.core_type<tc>, window_params = [{transform_indices = @transform_0, window_bounds = array<i64: 1, 8, 32>}, {transform_indices = @transform_1, window_bounds = array<i64: 1, 8, 32>}, {pipeline_mode = #tpu.pipeline_mode<synchronous>, transform_indices = @transform_2, window_bounds = array<i64: 32, 32>}, {pipeline_mode = #tpu.pipeline_mode<synchronous>, transform_indices = @transform_3, window_bounds = array<i64: 1, 32>}, {pipeline_mode = #tpu.pipeline_mode<synchronous>, transform_indices = @transform_4, window_bounds = array<i64: 32, 64>}, {pipeline_mode = #tpu.pipeline_mode<synchronous>, transform_indices = @transform_5, window_bounds = array<i64: 1, 64>}, {pipeline_mode = #tpu.pipeline_mode<synchronous>, transform_indices = @transform_6, window_bounds = array<i64: 32, 32>}, {pipeline_mode = #tpu.pipeline_mode<synchronous>, transform_indices = @transform_7, window_bounds = array<i64: 1, 32>}, {pipeline_mode = #tpu.pipeline_mode<synchronous>, transform_indices = @transform_8, window_bounds = array<i64: 1, 32>}, {pipeline_mode = #tpu.pipeline_mode<synchronous>, transform_indices = @transform_9, window_bounds = array<i64: 1, 32>}, {transform_indices = @transform_10, window_bounds = array<i64: 1, 8, 32>}]} {
    %c0 = arith.constant 0 : index
    %c0_0 = arith.constant 0 : index
    %c0_1 = arith.constant 0 : index
    %0 = vector.load %arg1[%c0, %c0_0, %c0_1] : memref<1x8x32xf32, #tpu.memory_space<vmem>>, vector<1x8x32xf32>
    %1 = vector.shape_cast %0 : vector<1x8x32xf32> to vector<8x32xf32>
    %c0_2 = arith.constant 0 : index
    %c0_3 = arith.constant 0 : index
    %c0_4 = arith.constant 0 : index
    %2 = vector.load %arg2[%c0_2, %c0_3, %c0_4] : memref<1x8x32xf32, #tpu.memory_space<vmem>>, vector<1x8x32xf32>
    %3 = vector.shape_cast %2 : vector<1x8x32xf32> to vector<8x32xf32>
    %4 = arith.truncf %1 : vector<8x32xf32> to vector<8x32xbf16>
    %c0_5 = arith.constant 0 : index
    %c0_6 = arith.constant 0 : index
    %5 = vector.load %arg3[%c0_5, %c0_6] : memref<32x32xbf16, #tpu.memory_space<vmem>>, vector<32x32xbf16>
    %cst = arith.constant dense<0.000000e+00> : vector<8x32xf32>
    %6 = tpu.matmul %4, %5, %cst {dimension_numbers = #tpu.dot_dimension_numbers<[1], [0], [0], [1], [0, 0, 1, 1], [], []>} : vector<8x32xbf16>, vector<32x32xbf16>, vector<8x32xf32> -> vector<8x32xf32>
    %c0_7 = arith.constant 0 : index
    %c0_8 = arith.constant 0 : index
    %7 = vector.load %arg4[%c0_7, %c0_8] : memref<1x32xf32, #tpu.memory_space<vmem>>, vector<1x32xf32>
    %8 = vector.broadcast %7 : vector<1x32xf32> to vector<8x32xf32>
    %9 = arith.addf %6, %8 : vector<8x32xf32>
    %10 = arith.truncf %3 : vector<8x32xf32> to vector<8x32xbf16>
    %c0_9 = arith.constant 0 : index
    %c0_10 = arith.constant 0 : index
    %11 = vector.load %arg5[%c0_9, %c0_10] : memref<32x64xbf16, #tpu.memory_space<vmem>>, vector<32x64xbf16>
    %cst_11 = arith.constant dense<0.000000e+00> : vector<8x64xf32>
    %12 = tpu.matmul %10, %11, %cst_11 {dimension_numbers = #tpu.dot_dimension_numbers<[1], [0], [0], [1], [0, 0, 1, 1], [], []>} : vector<8x32xbf16>, vector<32x64xbf16>, vector<8x64xf32> -> vector<8x64xf32>
    %c0_12 = arith.constant 0 : index
    %c0_13 = arith.constant 0 : index
    %13 = vector.load %arg6[%c0_12, %c0_13] : memref<1x64xf32, #tpu.memory_space<vmem>>, vector<1x64xf32>
    %14 = vector.broadcast %13 : vector<1x64xf32> to vector<8x64xf32>
    %15 = arith.addf %12, %14 : vector<8x64xf32>
    %16 = vector.extract_strided_slice %15 {offsets = [0, 0], sizes = [8, 32], strides = [1, 1]} : vector<8x64xf32> to vector<8x32xf32>
    %17 = vector.extract_strided_slice %15 {offsets = [0, 32], sizes = [8, 32], strides = [1, 1]} : vector<8x64xf32> to vector<8x32xf32>
    %18 = tpu.iota {dimensions = array<i32: 0>} : vector<8x8xi32>
    %19 = tpu.iota {dimensions = array<i32: 1>} : vector<8x8xi32>
    %20 = arith.cmpi sge, %18, %19 : vector<8x8xi32>
    %cst_14 = arith.constant 0.000000e+00 : f32
    %cst_15 = arith.constant -1.000000e+09 : f32
    %21 = vector.broadcast %cst_14 : f32 to vector<8x8xf32>
    %22 = vector.broadcast %cst_15 : f32 to vector<8x8xf32>
    %23 = arith.select %20, %21, %22 : vector<8x8xi1>, vector<8x8xf32>
    %24 = vector.extract_strided_slice %9 {offsets = [0, 0], sizes = [8, 8], strides = [1, 1]} : vector<8x32xf32> to vector<8x8xf32>
    %25 = vector.extract_strided_slice %16 {offsets = [0, 0], sizes = [8, 8], strides = [1, 1]} : vector<8x32xf32> to vector<8x8xf32>
    %26 = vector.extract_strided_slice %17 {offsets = [0, 0], sizes = [8, 8], strides = [1, 1]} : vector<8x32xf32> to vector<8x8xf32>
    %27 = tpu.transpose %25, [1, 0] : vector<8x8xf32> -> vector<8x8xf32>
    %cst_16 = arith.constant dense<0.000000e+00> : vector<8x8xf32>
    %28 = tpu.matmul %24, %27, %cst_16 {dimension_numbers = #tpu.dot_dimension_numbers<[1], [0], [0], [1], [0, 0, 1, 1], [], []>} : vector<8x8xf32>, vector<8x8xf32>, vector<8x8xf32> -> vector<8x8xf32>
    %cst_17 = arith.constant 0.353553385 : f32
    %29 = vector.broadcast %cst_17 : f32 to vector<8x8xf32>
    %30 = arith.mulf %28, %29 : vector<8x8xf32>
    %31 = arith.addf %30, %23 : vector<8x8xf32>
    %cst_18 = arith.constant dense<0xFF800000> : vector<8xf32>
    %32 = vector.multi_reduction <maximumf>, %31, %cst_18 [1] : vector<8x8xf32> to vector<8xf32>
    %33 = vector.shape_cast %32 : vector<8xf32> to vector<8x1xf32>
    %34 = vector.broadcast %33 : vector<8x1xf32> to vector<8x8xf32>
    %35 = arith.subf %31, %34 : vector<8x8xf32>
    %36 = math.exp %35 : vector<8x8xf32>
    %cst_19 = arith.constant dense<0.000000e+00> : vector<8xf32>
    %37 = vector.multi_reduction <add>, %36, %cst_19 [1] : vector<8x8xf32> to vector<8xf32>
    %38 = vector.shape_cast %37 : vector<8xf32> to vector<8x1xf32>
    %39 = tpu.reciprocal %38 {approx = true} : vector<8x1xf32> -> vector<8x1xf32>
    %40 = vector.broadcast %39 : vector<8x1xf32> to vector<8x8xf32>
    %41 = arith.mulf %36, %40 : vector<8x8xf32>
    %cst_20 = arith.constant dense<0.000000e+00> : vector<8x8xf32>
    %42 = tpu.matmul %41, %26, %cst_20 {dimension_numbers = #tpu.dot_dimension_numbers<[1], [0], [0], [1], [0, 0, 1, 1], [], []>} : vector<8x8xf32>, vector<8x8xf32>, vector<8x8xf32> -> vector<8x8xf32>
    %c0_21 = arith.constant 0 : index
    %c0_22 = arith.constant 0 : index
    %43 = vector.load %arg12[%c0_21, %c0_22] : memref<8x32xf32, #tpu.memory_space<vmem>>, vector<8x8xf32>
    tpu.vector_store %arg12[%c0_21, %c0_22], %42 {strides = array<i32>} : memref<8x32xf32, #tpu.memory_space<vmem>>, vector<8x8xf32>,
    %44 = vector.extract_strided_slice %9 {offsets = [0, 8], sizes = [8, 8], strides = [1, 1]} : vector<8x32xf32> to vector<8x8xf32>
    %45 = vector.extract_strided_slice %16 {offsets = [0, 8], sizes = [8, 8], strides = [1, 1]} : vector<8x32xf32> to vector<8x8xf32>
    %46 = vector.extract_strided_slice %17 {offsets = [0, 8], sizes = [8, 8], strides = [1, 1]} : vector<8x32xf32> to vector<8x8xf32>
    %47 = tpu.transpose %45, [1, 0] : vector<8x8xf32> -> vector<8x8xf32>
    %cst_23 = arith.constant dense<0.000000e+00> : vector<8x8xf32>
    %48 = tpu.matmul %44, %47, %cst_23 {dimension_numbers = #tpu.dot_dimension_numbers<[1], [0], [0], [1], [0, 0, 1, 1], [], []>} : vector<8x8xf32>, vector<8x8xf32>, vector<8x8xf32> -> vector<8x8xf32>
    %cst_24 = arith.constant 0.353553385 : f32
    %49 = vector.broadcast %cst_24 : f32 to vector<8x8xf32>
    %50 = arith.mulf %48, %49 : vector<8x8xf32>
    %51 = arith.addf %50, %23 : vector<8x8xf32>
    %cst_25 = arith.constant dense<0xFF800000> : vector<8xf32>
    %52 = vector.multi_reduction <maximumf>, %51, %cst_25 [1] : vector<8x8xf32> to vector<8xf32>
    %53 = vector.shape_cast %52 : vector<8xf32> to vector<8x1xf32>
    %54 = vector.broadcast %53 : vector<8x1xf32> to vector<8x8xf32>
    %55 = arith.subf %51, %54 : vector<8x8xf32>
    %56 = math.exp %55 : vector<8x8xf32>
    %cst_26 = arith.constant dense<0.000000e+00> : vector<8xf32>
    %57 = vector.multi_reduction <add>, %56, %cst_26 [1] : vector<8x8xf32> to vector<8xf32>
    %58 = vector.shape_cast %57 : vector<8xf32> to vector<8x1xf32>
    %59 = tpu.reciprocal %58 {approx = true} : vector<8x1xf32> -> vector<8x1xf32>
    %60 = vector.broadcast %59 : vector<8x1xf32> to vector<8x8xf32>
    %61 = arith.mulf %56, %60 : vector<8x8xf32>
    %cst_27 = arith.constant dense<0.000000e+00> : vector<8x8xf32>
    %62 = tpu.matmul %61, %46, %cst_27 {dimension_numbers = #tpu.dot_dimension_numbers<[1], [0], [0], [1], [0, 0, 1, 1], [], []>} : vector<8x8xf32>, vector<8x8xf32>, vector<8x8xf32> -> vector<8x8xf32>
    %c0_28 = arith.constant 0 : index
    %c8 = arith.constant 8 : index
    %63 = vector.load %arg12[%c0_28, %c8] : memref<8x32xf32, #tpu.memory_space<vmem>>, vector<8x8xf32>
    tpu.vector_store %arg12[%c0_28, %c8], %62 {strides = array<i32>} : memref<8x32xf32, #tpu.memory_space<vmem>>, vector<8x8xf32>,
    %64 = vector.extract_strided_slice %9 {offsets = [0, 16], sizes = [8, 8], strides = [1, 1]} : vector<8x32xf32> to vector<8x8xf32>
    %65 = vector.extract_strided_slice %16 {offsets = [0, 16], sizes = [8, 8], strides = [1, 1]} : vector<8x32xf32> to vector<8x8xf32>
    %66 = vector.extract_strided_slice %17 {offsets = [0, 16], sizes = [8, 8], strides = [1, 1]} : vector<8x32xf32> to vector<8x8xf32>
    %67 = tpu.transpose %65, [1, 0] : vector<8x8xf32> -> vector<8x8xf32>
    %cst_29 = arith.constant dense<0.000000e+00> : vector<8x8xf32>
    %68 = tpu.matmul %64, %67, %cst_29 {dimension_numbers = #tpu.dot_dimension_numbers<[1], [0], [0], [1], [0, 0, 1, 1], [], []>} : vector<8x8xf32>, vector<8x8xf32>, vector<8x8xf32> -> vector<8x8xf32>
    %cst_30 = arith.constant 0.353553385 : f32
    %69 = vector.broadcast %cst_30 : f32 to vector<8x8xf32>
    %70 = arith.mulf %68, %69 : vector<8x8xf32>
    %71 = arith.addf %70, %23 : vector<8x8xf32>
    %cst_31 = arith.constant dense<0xFF800000> : vector<8xf32>
    %72 = vector.multi_reduction <maximumf>, %71, %cst_31 [1] : vector<8x8xf32> to vector<8xf32>
    %73 = vector.shape_cast %72 : vector<8xf32> to vector<8x1xf32>
    %74 = vector.broadcast %73 : vector<8x1xf32> to vector<8x8xf32>
    %75 = arith.subf %71, %74 : vector<8x8xf32>
    %76 = math.exp %75 : vector<8x8xf32>
    %cst_32 = arith.constant dense<0.000000e+00> : vector<8xf32>
    %77 = vector.multi_reduction <add>, %76, %cst_32 [1] : vector<8x8xf32> to vector<8xf32>
    %78 = vector.shape_cast %77 : vector<8xf32> to vector<8x1xf32>
    %79 = tpu.reciprocal %78 {approx = true} : vector<8x1xf32> -> vector<8x1xf32>
    %80 = vector.broadcast %79 : vector<8x1xf32> to vector<8x8xf32>
    %81 = arith.mulf %76, %80 : vector<8x8xf32>
    %cst_33 = arith.constant dense<0.000000e+00> : vector<8x8xf32>
    %82 = tpu.matmul %81, %66, %cst_33 {dimension_numbers = #tpu.dot_dimension_numbers<[1], [0], [0], [1], [0, 0, 1, 1], [], []>} : vector<8x8xf32>, vector<8x8xf32>, vector<8x8xf32> -> vector<8x8xf32>
    %c0_34 = arith.constant 0 : index
    %c16 = arith.constant 16 : index
    %83 = vector.load %arg12[%c0_34, %c16] : memref<8x32xf32, #tpu.memory_space<vmem>>, vector<8x8xf32>
    tpu.vector_store %arg12[%c0_34, %c16], %82 {strides = array<i32>} : memref<8x32xf32, #tpu.memory_space<vmem>>, vector<8x8xf32>,
    %84 = vector.extract_strided_slice %9 {offsets = [0, 24], sizes = [8, 8], strides = [1, 1]} : vector<8x32xf32> to vector<8x8xf32>
    %85 = vector.extract_strided_slice %16 {offsets = [0, 24], sizes = [8, 8], strides = [1, 1]} : vector<8x32xf32> to vector<8x8xf32>
    %86 = vector.extract_strided_slice %17 {offsets = [0, 24], sizes = [8, 8], strides = [1, 1]} : vector<8x32xf32> to vector<8x8xf32>
    %87 = tpu.transpose %85, [1, 0] : vector<8x8xf32> -> vector<8x8xf32>
    %cst_35 = arith.constant dense<0.000000e+00> : vector<8x8xf32>
    %88 = tpu.matmul %84, %87, %cst_35 {dimension_numbers = #tpu.dot_dimension_numbers<[1], [0], [0], [1], [0, 0, 1, 1], [], []>} : vector<8x8xf32>, vector<8x8xf32>, vector<8x8xf32> -> vector<8x8xf32>
    %cst_36 = arith.constant 0.353553385 : f32
    %89 = vector.broadcast %cst_36 : f32 to vector<8x8xf32>
    %90 = arith.mulf %88, %89 : vector<8x8xf32>
    %91 = arith.addf %90, %23 : vector<8x8xf32>
    %cst_37 = arith.constant dense<0xFF800000> : vector<8xf32>
    %92 = vector.multi_reduction <maximumf>, %91, %cst_37 [1] : vector<8x8xf32> to vector<8xf32>
    %93 = vector.shape_cast %92 : vector<8xf32> to vector<8x1xf32>
    %94 = vector.broadcast %93 : vector<8x1xf32> to vector<8x8xf32>
    %95 = arith.subf %91, %94 : vector<8x8xf32>
    %96 = math.exp %95 : vector<8x8xf32>
    %cst_38 = arith.constant dense<0.000000e+00> : vector<8xf32>
    %97 = vector.multi_reduction <add>, %96, %cst_38 [1] : vector<8x8xf32> to vector<8xf32>
    %98 = vector.shape_cast %97 : vector<8xf32> to vector<8x1xf32>
    %99 = tpu.reciprocal %98 {approx = true} : vector<8x1xf32> -> vector<8x1xf32>
    %100 = vector.broadcast %99 : vector<8x1xf32> to vector<8x8xf32>
    %101 = arith.mulf %96, %100 : vector<8x8xf32>
    %cst_39 = arith.constant dense<0.000000e+00> : vector<8x8xf32>
    %102 = tpu.matmul %101, %86, %cst_39 {dimension_numbers = #tpu.dot_dimension_numbers<[1], [0], [0], [1], [0, 0, 1, 1], [], []>} : vector<8x8xf32>, vector<8x8xf32>, vector<8x8xf32> -> vector<8x8xf32>
    %c0_40 = arith.constant 0 : index
    %c24 = arith.constant 24 : index
    %103 = vector.load %arg12[%c0_40, %c24] : memref<8x32xf32, #tpu.memory_space<vmem>>, vector<8x8xf32>
    tpu.vector_store %arg12[%c0_40, %c24], %102 {strides = array<i32>} : memref<8x32xf32, #tpu.memory_space<vmem>>, vector<8x8xf32>,
    %c0_41 = arith.constant 0 : index
    %c0_42 = arith.constant 0 : index
    %104 = vector.load %arg12[%c0_41, %c0_42] : memref<8x32xf32, #tpu.memory_space<vmem>>, vector<8x32xf32>
    %105 = arith.truncf %104 : vector<8x32xf32> to vector<8x32xbf16>
    %c0_43 = arith.constant 0 : index
    %c0_44 = arith.constant 0 : index
    %106 = vector.load %arg7[%c0_43, %c0_44] : memref<32x32xbf16, #tpu.memory_space<vmem>>, vector<32x32xbf16>
    %cst_45 = arith.constant dense<0.000000e+00> : vector<8x32xf32>
    %107 = tpu.matmul %105, %106, %cst_45 {dimension_numbers = #tpu.dot_dimension_numbers<[1], [0], [0], [1], [0, 0, 1, 1], [], []>} : vector<8x32xbf16>, vector<32x32xbf16>, vector<8x32xf32> -> vector<8x32xf32>
    %c0_46 = arith.constant 0 : index
    %c0_47 = arith.constant 0 : index
    %108 = vector.load %arg8[%c0_46, %c0_47] : memref<1x32xf32, #tpu.memory_space<vmem>>, vector<1x32xf32>
    %109 = vector.broadcast %108 : vector<1x32xf32> to vector<8x32xf32>
    %110 = arith.addf %107, %109 : vector<8x32xf32>
    %111 = arith.addf %1, %110 : vector<8x32xf32>
    %cst_48 = arith.constant dense<0.000000e+00> : vector<8xf32>
    %112 = vector.multi_reduction <add>, %111, %cst_48 [1] : vector<8x32xf32> to vector<8xf32>
    %113 = vector.shape_cast %112 : vector<8xf32> to vector<8x1xf32>
    %cst_49 = arith.constant 3.200000e+01 : f32
    %114 = vector.broadcast %cst_49 : f32 to vector<8x1xf32>
    %115 = arith.divf %113, %114 : vector<8x1xf32>
    %116 = vector.broadcast %115 : vector<8x1xf32> to vector<8x32xf32>
    %117 = arith.subf %111, %116 : vector<8x32xf32>
    %118 = arith.mulf %117, %117 : vector<8x32xf32>
    %cst_50 = arith.constant dense<0.000000e+00> : vector<8xf32>
    %119 = vector.multi_reduction <add>, %118, %cst_50 [1] : vector<8x32xf32> to vector<8xf32>
    %120 = vector.shape_cast %119 : vector<8xf32> to vector<8x1xf32>
    %cst_51 = arith.constant 3.200000e+01 : f32
    %121 = vector.broadcast %cst_51 : f32 to vector<8x1xf32>
    %122 = arith.divf %120, %121 : vector<8x1xf32>
    %123 = vector.broadcast %115 : vector<8x1xf32> to vector<8x32xf32>
    %124 = arith.subf %111, %123 : vector<8x32xf32>
    %cst_52 = arith.constant 9.99999974E-6 : f32
    %125 = vector.broadcast %cst_52 : f32 to vector<8x1xf32>
    %126 = arith.addf %122, %125 : vector<8x1xf32>
    %127 = math.rsqrt %126 : vector<8x1xf32>
    %128 = vector.broadcast %127 : vector<8x1xf32> to vector<8x32xf32>
    %129 = arith.mulf %124, %128 : vector<8x32xf32>
    %c0_53 = arith.constant 0 : index
    %c0_54 = arith.constant 0 : index
    %130 = vector.load %arg9[%c0_53, %c0_54] : memref<1x32xf32, #tpu.memory_space<vmem>>, vector<1x32xf32>
    %131 = vector.broadcast %130 : vector<1x32xf32> to vector<8x32xf32>
    %132 = arith.mulf %129, %131 : vector<8x32xf32>
    %c0_55 = arith.constant 0 : index
    %c0_56 = arith.constant 0 : index
    %133 = vector.load %arg10[%c0_55, %c0_56] : memref<1x32xf32, #tpu.memory_space<vmem>>, vector<1x32xf32>
    %134 = vector.broadcast %133 : vector<1x32xf32> to vector<8x32xf32>
    %135 = arith.addf %132, %134 : vector<8x32xf32>
    %c0_57 = arith.constant 0 : index
    %c0_58 = arith.constant 0 : index
    %c0_59 = arith.constant 0 : index
    %136 = vector.load %arg11[%c0_57, %c0_58, %c0_59] : memref<1x8x32xf32, #tpu.memory_space<vmem>>, vector<1x8x32xf32>
    %137 = vector.shape_cast %136 : vector<1x8x32xf32> to vector<8x32xf32>
    %138 = vector.shape_cast %135 : vector<8x32xf32> to vector<1x8x32xf32>
    tpu.vector_store %arg11[%c0_57, %c0_58, %c0_59], %138 {strides = array<i32>} : memref<1x8x32xf32, #tpu.memory_space<vmem>>, vector<1x8x32xf32>,
    return
  }
  func.func @transform_0(%arg0: i32) -> (i32, i32, i32) {
    %c0_i32 = arith.constant 0 : i32
    %c0_i32_0 = arith.constant 0 : i32
    %c0_i32_1 = arith.constant 0 : i32
    return %arg0, %c0_i32, %c0_i32_0 : i32, i32, i32
  }
  func.func @transform_1(%arg0: i32) -> (i32, i32, i32) {
    %c0_i32 = arith.constant 0 : i32
    %c0_i32_0 = arith.constant 0 : i32
    %c0_i32_1 = arith.constant 0 : i32
    return %arg0, %c0_i32, %c0_i32_0 : i32, i32, i32
  }
  func.func @transform_2(%arg0: i32) -> (i32, i32) {
    %c0_i32 = arith.constant 0 : i32
    %c0_i32_0 = arith.constant 0 : i32
    %c0_i32_1 = arith.constant 0 : i32
    return %c0_i32, %c0_i32_0 : i32, i32
  }
  func.func @transform_3(%arg0: i32) -> (i32, i32) {
    %c0_i32 = arith.constant 0 : i32
    %c0_i32_0 = arith.constant 0 : i32
    %c0_i32_1 = arith.constant 0 : i32
    return %c0_i32, %c0_i32_0 : i32, i32
  }
  func.func @transform_4(%arg0: i32) -> (i32, i32) {
    %c0_i32 = arith.constant 0 : i32
    %c0_i32_0 = arith.constant 0 : i32
    %c0_i32_1 = arith.constant 0 : i32
    return %c0_i32, %c0_i32_0 : i32, i32
  }
  func.func @transform_5(%arg0: i32) -> (i32, i32) {
    %c0_i32 = arith.constant 0 : i32
    %c0_i32_0 = arith.constant 0 : i32
    %c0_i32_1 = arith.constant 0 : i32
    return %c0_i32, %c0_i32_0 : i32, i32
  }
  func.func @transform_6(%arg0: i32) -> (i32, i32) {
    %c0_i32 = arith.constant 0 : i32
    %c0_i32_0 = arith.constant 0 : i32
    %c0_i32_1 = arith.constant 0 : i32
    return %c0_i32, %c0_i32_0 : i32, i32
  }
  func.func @transform_7(%arg0: i32) -> (i32, i32) {
    %c0_i32 = arith.constant 0 : i32
    %c0_i32_0 = arith.constant 0 : i32
    %c0_i32_1 = arith.constant 0 : i32
    return %c0_i32, %c0_i32_0 : i32, i32
  }
  func.func @transform_8(%arg0: i32) -> (i32, i32) {
    %c0_i32 = arith.constant 0 : i32
    %c0_i32_0 = arith.constant 0 : i32
    %c0_i32_1 = arith.constant 0 : i32
    return %c0_i32, %c0_i32_0 : i32, i32
  }
  func.func @transform_9(%arg0: i32) -> (i32, i32) {
    %c0_i32 = arith.constant 0 : i32
    %c0_i32_0 = arith.constant 0 : i32
    %c0_i32_1 = arith.constant 0 : i32
    return %c0_i32, %c0_i32_0 : i32, i32
  }
  func.func @transform_10(%arg0: i32) -> (i32, i32, i32) {
    %c0_i32 = arith.constant 0 : i32
    %c0_i32_0 = arith.constant 0 : i32
    %c0_i32_1 = arith.constant 0 : i32
    return %arg0, %c0_i32, %c0_i32_0 : i32, i32, i32
  }
}

module attributes {stable_mosaic.version = 11 : i64} {
  func.func @_ffn_block_kernel(%arg0: i32, %arg1: memref<1x8x32xf32, #tpu.memory_space<vmem>>, %arg2: memref<32x64xbf16, #tpu.memory_space<vmem>>, %arg3: memref<1x64xf32, #tpu.memory_space<vmem>>, %arg4: memref<64x32xbf16, #tpu.memory_space<vmem>>, %arg5: memref<1x32xf32, #tpu.memory_space<vmem>>, %arg6: memref<1x32xf32, #tpu.memory_space<vmem>>, %arg7: memref<1x32xf32, #tpu.memory_space<vmem>>, %arg8: memref<1x8x32xf32, #tpu.memory_space<vmem>>) attributes {dimension_semantics = [#tpu.dimension_semantics<parallel>], iteration_bounds = array<i64: 2>, scalar_prefetch = 0 : i64, scratch_operands = 0 : i64, tpu.core_type = #tpu.core_type<tc>, window_params = [{transform_indices = @transform_0, window_bounds = array<i64: 1, 8, 32>}, {pipeline_mode = #tpu.pipeline_mode<synchronous>, transform_indices = @transform_1, window_bounds = array<i64: 32, 64>}, {pipeline_mode = #tpu.pipeline_mode<synchronous>, transform_indices = @transform_2, window_bounds = array<i64: 1, 64>}, {pipeline_mode = #tpu.pipeline_mode<synchronous>, transform_indices = @transform_3, window_bounds = array<i64: 64, 32>}, {pipeline_mode = #tpu.pipeline_mode<synchronous>, transform_indices = @transform_4, window_bounds = array<i64: 1, 32>}, {pipeline_mode = #tpu.pipeline_mode<synchronous>, transform_indices = @transform_5, window_bounds = array<i64: 1, 32>}, {pipeline_mode = #tpu.pipeline_mode<synchronous>, transform_indices = @transform_6, window_bounds = array<i64: 1, 32>}, {transform_indices = @transform_7, window_bounds = array<i64: 1, 8, 32>}]} {
    %c0 = arith.constant 0 : index
    %c0_0 = arith.constant 0 : index
    %c0_1 = arith.constant 0 : index
    %0 = vector.load %arg1[%c0, %c0_0, %c0_1] : memref<1x8x32xf32, #tpu.memory_space<vmem>>, vector<1x8x32xf32>
    %1 = vector.shape_cast %0 : vector<1x8x32xf32> to vector<8x32xf32>
    %2 = arith.truncf %1 : vector<8x32xf32> to vector<8x32xbf16>
    %c0_2 = arith.constant 0 : index
    %c0_3 = arith.constant 0 : index
    %3 = vector.load %arg2[%c0_2, %c0_3] : memref<32x64xbf16, #tpu.memory_space<vmem>>, vector<32x64xbf16>
    %cst = arith.constant dense<0.000000e+00> : vector<8x64xf32>
    %4 = tpu.matmul %2, %3, %cst {dimension_numbers = #tpu.dot_dimension_numbers<[1], [0], [0], [1], [0, 0, 1, 1], [], []>} : vector<8x32xbf16>, vector<32x64xbf16>, vector<8x64xf32> -> vector<8x64xf32>
    %c0_4 = arith.constant 0 : index
    %c0_5 = arith.constant 0 : index
    %5 = vector.load %arg3[%c0_4, %c0_5] : memref<1x64xf32, #tpu.memory_space<vmem>>, vector<1x64xf32>
    %6 = vector.broadcast %5 : vector<1x64xf32> to vector<8x64xf32>
    %7 = arith.addf %4, %6 : vector<8x64xf32>
    %cst_6 = arith.constant 0.000000e+00 : f32
    %8 = vector.broadcast %cst_6 : f32 to vector<8x64xf32>
    %9 = arith.maximumf %7, %8 : vector<8x64xf32>
    %10 = arith.truncf %9 : vector<8x64xf32> to vector<8x64xbf16>
    %c0_7 = arith.constant 0 : index
    %c0_8 = arith.constant 0 : index
    %11 = vector.load %arg4[%c0_7, %c0_8] : memref<64x32xbf16, #tpu.memory_space<vmem>>, vector<64x32xbf16>
    %cst_9 = arith.constant dense<0.000000e+00> : vector<8x32xf32>
    %12 = tpu.matmul %10, %11, %cst_9 {dimension_numbers = #tpu.dot_dimension_numbers<[1], [0], [0], [1], [0, 0, 1, 1], [], []>} : vector<8x64xbf16>, vector<64x32xbf16>, vector<8x32xf32> -> vector<8x32xf32>
    %c0_10 = arith.constant 0 : index
    %c0_11 = arith.constant 0 : index
    %13 = vector.load %arg5[%c0_10, %c0_11] : memref<1x32xf32, #tpu.memory_space<vmem>>, vector<1x32xf32>
    %14 = vector.broadcast %13 : vector<1x32xf32> to vector<8x32xf32>
    %15 = arith.addf %12, %14 : vector<8x32xf32>
    %16 = arith.addf %1, %15 : vector<8x32xf32>
    %cst_12 = arith.constant dense<0.000000e+00> : vector<8xf32>
    %17 = vector.multi_reduction <add>, %16, %cst_12 [1] : vector<8x32xf32> to vector<8xf32>
    %18 = vector.shape_cast %17 : vector<8xf32> to vector<8x1xf32>
    %cst_13 = arith.constant 3.200000e+01 : f32
    %19 = vector.broadcast %cst_13 : f32 to vector<8x1xf32>
    %20 = arith.divf %18, %19 : vector<8x1xf32>
    %21 = vector.broadcast %20 : vector<8x1xf32> to vector<8x32xf32>
    %22 = arith.subf %16, %21 : vector<8x32xf32>
    %23 = arith.mulf %22, %22 : vector<8x32xf32>
    %cst_14 = arith.constant dense<0.000000e+00> : vector<8xf32>
    %24 = vector.multi_reduction <add>, %23, %cst_14 [1] : vector<8x32xf32> to vector<8xf32>
    %25 = vector.shape_cast %24 : vector<8xf32> to vector<8x1xf32>
    %cst_15 = arith.constant 3.200000e+01 : f32
    %26 = vector.broadcast %cst_15 : f32 to vector<8x1xf32>
    %27 = arith.divf %25, %26 : vector<8x1xf32>
    %28 = vector.broadcast %20 : vector<8x1xf32> to vector<8x32xf32>
    %29 = arith.subf %16, %28 : vector<8x32xf32>
    %cst_16 = arith.constant 9.99999974E-6 : f32
    %30 = vector.broadcast %cst_16 : f32 to vector<8x1xf32>
    %31 = arith.addf %27, %30 : vector<8x1xf32>
    %32 = math.rsqrt %31 : vector<8x1xf32>
    %33 = vector.broadcast %32 : vector<8x1xf32> to vector<8x32xf32>
    %34 = arith.mulf %29, %33 : vector<8x32xf32>
    %c0_17 = arith.constant 0 : index
    %c0_18 = arith.constant 0 : index
    %35 = vector.load %arg6[%c0_17, %c0_18] : memref<1x32xf32, #tpu.memory_space<vmem>>, vector<1x32xf32>
    %36 = vector.broadcast %35 : vector<1x32xf32> to vector<8x32xf32>
    %37 = arith.mulf %34, %36 : vector<8x32xf32>
    %c0_19 = arith.constant 0 : index
    %c0_20 = arith.constant 0 : index
    %38 = vector.load %arg7[%c0_19, %c0_20] : memref<1x32xf32, #tpu.memory_space<vmem>>, vector<1x32xf32>
    %39 = vector.broadcast %38 : vector<1x32xf32> to vector<8x32xf32>
    %40 = arith.addf %37, %39 : vector<8x32xf32>
    %c0_21 = arith.constant 0 : index
    %c0_22 = arith.constant 0 : index
    %c0_23 = arith.constant 0 : index
    %41 = vector.load %arg8[%c0_21, %c0_22, %c0_23] : memref<1x8x32xf32, #tpu.memory_space<vmem>>, vector<1x8x32xf32>
    %42 = vector.shape_cast %41 : vector<1x8x32xf32> to vector<8x32xf32>
    %43 = vector.shape_cast %40 : vector<8x32xf32> to vector<1x8x32xf32>
    tpu.vector_store %arg8[%c0_21, %c0_22, %c0_23], %43 {strides = array<i32>} : memref<1x8x32xf32, #tpu.memory_space<vmem>>, vector<1x8x32xf32>,
    return
  }
  func.func @transform_0(%arg0: i32) -> (i32, i32, i32) {
    %c0_i32 = arith.constant 0 : i32
    %c0_i32_0 = arith.constant 0 : i32
    %c0_i32_1 = arith.constant 0 : i32
    return %arg0, %c0_i32, %c0_i32_0 : i32, i32, i32
  }
  func.func @transform_1(%arg0: i32) -> (i32, i32) {
    %c0_i32 = arith.constant 0 : i32
    %c0_i32_0 = arith.constant 0 : i32
    %c0_i32_1 = arith.constant 0 : i32
    return %c0_i32, %c0_i32_0 : i32, i32
  }
  func.func @transform_2(%arg0: i32) -> (i32, i32) {
    %c0_i32 = arith.constant 0 : i32
    %c0_i32_0 = arith.constant 0 : i32
    %c0_i32_1 = arith.constant 0 : i32
    return %c0_i32, %c0_i32_0 : i32, i32
  }
  func.func @transform_3(%arg0: i32) -> (i32, i32) {
    %c0_i32 = arith.constant 0 : i32
    %c0_i32_0 = arith.constant 0 : i32
    %c0_i32_1 = arith.constant 0 : i32
    return %c0_i32, %c0_i32_0 : i32, i32
  }
  func.func @transform_4(%arg0: i32) -> (i32, i32) {
    %c0_i32 = arith.constant 0 : i32
    %c0_i32_0 = arith.constant 0 : i32
    %c0_i32_1 = arith.constant 0 : i32
    return %c0_i32, %c0_i32_0 : i32, i32
  }
  func.func @transform_5(%arg0: i32) -> (i32, i32) {
    %c0_i32 = arith.constant 0 : i32
    %c0_i32_0 = arith.constant 0 : i32
    %c0_i32_1 = arith.constant 0 : i32
    return %c0_i32, %c0_i32_0 : i32, i32
  }
  func.func @transform_6(%arg0: i32) -> (i32, i32) {
    %c0_i32 = arith.constant 0 : i32
    %c0_i32_0 = arith.constant 0 : i32
    %c0_i32_1 = arith.constant 0 : i32
    return %c0_i32, %c0_i32_0 : i32, i32
  }
  func.func @transform_7(%arg0: i32) -> (i32, i32, i32) {
    %c0_i32 = arith.constant 0 : i32
    %c0_i32_0 = arith.constant 0 : i32
    %c0_i32_1 = arith.constant 0 : i32
    return %arg0, %c0_i32, %c0_i32_0 : i32, i32, i32
  }
}

module attributes {stable_mosaic.version = 11 : i64} {
  func.func @_mha_block_kernel(%arg0: i32, %arg1: memref<1x8x32xf32, #tpu.memory_space<vmem>>, %arg2: memref<1x8x32xf32, #tpu.memory_space<vmem>>, %arg3: memref<32x32xbf16, #tpu.memory_space<vmem>>, %arg4: memref<1x32xf32, #tpu.memory_space<vmem>>, %arg5: memref<32x64xbf16, #tpu.memory_space<vmem>>, %arg6: memref<1x64xf32, #tpu.memory_space<vmem>>, %arg7: memref<32x32xbf16, #tpu.memory_space<vmem>>, %arg8: memref<1x32xf32, #tpu.memory_space<vmem>>, %arg9: memref<1x32xf32, #tpu.memory_space<vmem>>, %arg10: memref<1x32xf32, #tpu.memory_space<vmem>>, %arg11: memref<1x8x32xf32, #tpu.memory_space<vmem>>, %arg12: memref<8x32xf32, #tpu.memory_space<vmem>>) attributes {dimension_semantics = [#tpu.dimension_semantics<parallel>], iteration_bounds = array<i64: 2>, scalar_prefetch = 0 : i64, scratch_operands = 1 : i64, tpu.core_type = #tpu.core_type<tc>, window_params = [{transform_indices = @transform_0, window_bounds = array<i64: 1, 8, 32>}, {transform_indices = @transform_1, window_bounds = array<i64: 1, 8, 32>}, {pipeline_mode = #tpu.pipeline_mode<synchronous>, transform_indices = @transform_2, window_bounds = array<i64: 32, 32>}, {pipeline_mode = #tpu.pipeline_mode<synchronous>, transform_indices = @transform_3, window_bounds = array<i64: 1, 32>}, {pipeline_mode = #tpu.pipeline_mode<synchronous>, transform_indices = @transform_4, window_bounds = array<i64: 32, 64>}, {pipeline_mode = #tpu.pipeline_mode<synchronous>, transform_indices = @transform_5, window_bounds = array<i64: 1, 64>}, {pipeline_mode = #tpu.pipeline_mode<synchronous>, transform_indices = @transform_6, window_bounds = array<i64: 32, 32>}, {pipeline_mode = #tpu.pipeline_mode<synchronous>, transform_indices = @transform_7, window_bounds = array<i64: 1, 32>}, {pipeline_mode = #tpu.pipeline_mode<synchronous>, transform_indices = @transform_8, window_bounds = array<i64: 1, 32>}, {pipeline_mode = #tpu.pipeline_mode<synchronous>, transform_indices = @transform_9, window_bounds = array<i64: 1, 32>}, {transform_indices = @transform_10, window_bounds = array<i64: 1, 8, 32>}]} {
    %c0 = arith.constant 0 : index
    %c0_0 = arith.constant 0 : index
    %c0_1 = arith.constant 0 : index
    %0 = vector.load %arg1[%c0, %c0_0, %c0_1] : memref<1x8x32xf32, #tpu.memory_space<vmem>>, vector<1x8x32xf32>
    %1 = vector.shape_cast %0 : vector<1x8x32xf32> to vector<8x32xf32>
    %c0_2 = arith.constant 0 : index
    %c0_3 = arith.constant 0 : index
    %c0_4 = arith.constant 0 : index
    %2 = vector.load %arg2[%c0_2, %c0_3, %c0_4] : memref<1x8x32xf32, #tpu.memory_space<vmem>>, vector<1x8x32xf32>
    %3 = vector.shape_cast %2 : vector<1x8x32xf32> to vector<8x32xf32>
    %4 = arith.truncf %1 : vector<8x32xf32> to vector<8x32xbf16>
    %c0_5 = arith.constant 0 : index
    %c0_6 = arith.constant 0 : index
    %5 = vector.load %arg3[%c0_5, %c0_6] : memref<32x32xbf16, #tpu.memory_space<vmem>>, vector<32x32xbf16>
    %cst = arith.constant dense<0.000000e+00> : vector<8x32xf32>
    %6 = tpu.matmul %4, %5, %cst {dimension_numbers = #tpu.dot_dimension_numbers<[1], [0], [0], [1], [0, 0, 1, 1], [], []>} : vector<8x32xbf16>, vector<32x32xbf16>, vector<8x32xf32> -> vector<8x32xf32>
    %c0_7 = arith.constant 0 : index
    %c0_8 = arith.constant 0 : index
    %7 = vector.load %arg4[%c0_7, %c0_8] : memref<1x32xf32, #tpu.memory_space<vmem>>, vector<1x32xf32>
    %8 = vector.broadcast %7 : vector<1x32xf32> to vector<8x32xf32>
    %9 = arith.addf %6, %8 : vector<8x32xf32>
    %10 = arith.truncf %3 : vector<8x32xf32> to vector<8x32xbf16>
    %c0_9 = arith.constant 0 : index
    %c0_10 = arith.constant 0 : index
    %11 = vector.load %arg5[%c0_9, %c0_10] : memref<32x64xbf16, #tpu.memory_space<vmem>>, vector<32x64xbf16>
    %cst_11 = arith.constant dense<0.000000e+00> : vector<8x64xf32>
    %12 = tpu.matmul %10, %11, %cst_11 {dimension_numbers = #tpu.dot_dimension_numbers<[1], [0], [0], [1], [0, 0, 1, 1], [], []>} : vector<8x32xbf16>, vector<32x64xbf16>, vector<8x64xf32> -> vector<8x64xf32>
    %c0_12 = arith.constant 0 : index
    %c0_13 = arith.constant 0 : index
    %13 = vector.load %arg6[%c0_12, %c0_13] : memref<1x64xf32, #tpu.memory_space<vmem>>, vector<1x64xf32>
    %14 = vector.broadcast %13 : vector<1x64xf32> to vector<8x64xf32>
    %15 = arith.addf %12, %14 : vector<8x64xf32>
    %16 = vector.extract_strided_slice %15 {offsets = [0, 0], sizes = [8, 32], strides = [1, 1]} : vector<8x64xf32> to vector<8x32xf32>
    %17 = vector.extract_strided_slice %15 {offsets = [0, 32], sizes = [8, 32], strides = [1, 1]} : vector<8x64xf32> to vector<8x32xf32>
    %18 = vector.extract_strided_slice %9 {offsets = [0, 0], sizes = [8, 8], strides = [1, 1]} : vector<8x32xf32> to vector<8x8xf32>
    %19 = vector.extract_strided_slice %16 {offsets = [0, 0], sizes = [8, 8], strides = [1, 1]} : vector<8x32xf32> to vector<8x8xf32>
    %20 = vector.extract_strided_slice %17 {offsets = [0, 0], sizes = [8, 8], strides = [1, 1]} : vector<8x32xf32> to vector<8x8xf32>
    %21 = tpu.transpose %19, [1, 0] : vector<8x8xf32> -> vector<8x8xf32>
    %cst_14 = arith.constant dense<0.000000e+00> : vector<8x8xf32>
    %22 = tpu.matmul %18, %21, %cst_14 {dimension_numbers = #tpu.dot_dimension_numbers<[1], [0], [0], [1], [0, 0, 1, 1], [], []>} : vector<8x8xf32>, vector<8x8xf32>, vector<8x8xf32> -> vector<8x8xf32>
    %cst_15 = arith.constant 0.353553385 : f32
    %23 = vector.broadcast %cst_15 : f32 to vector<8x8xf32>
    %24 = arith.mulf %22, %23 : vector<8x8xf32>
    %cst_16 = arith.constant dense<0xFF800000> : vector<8xf32>
    %25 = vector.multi_reduction <maximumf>, %24, %cst_16 [1] : vector<8x8xf32> to vector<8xf32>
    %26 = vector.shape_cast %25 : vector<8xf32> to vector<8x1xf32>
    %27 = vector.broadcast %26 : vector<8x1xf32> to vector<8x8xf32>
    %28 = arith.subf %24, %27 : vector<8x8xf32>
    %29 = math.exp %28 : vector<8x8xf32>
    %cst_17 = arith.constant dense<0.000000e+00> : vector<8xf32>
    %30 = vector.multi_reduction <add>, %29, %cst_17 [1] : vector<8x8xf32> to vector<8xf32>
    %31 = vector.shape_cast %30 : vector<8xf32> to vector<8x1xf32>
    %32 = tpu.reciprocal %31 {approx = true} : vector<8x1xf32> -> vector<8x1xf32>
    %33 = vector.broadcast %32 : vector<8x1xf32> to vector<8x8xf32>
    %34 = arith.mulf %29, %33 : vector<8x8xf32>
    %cst_18 = arith.constant dense<0.000000e+00> : vector<8x8xf32>
    %35 = tpu.matmul %34, %20, %cst_18 {dimension_numbers = #tpu.dot_dimension_numbers<[1], [0], [0], [1], [0, 0, 1, 1], [], []>} : vector<8x8xf32>, vector<8x8xf32>, vector<8x8xf32> -> vector<8x8xf32>
    %c0_19 = arith.constant 0 : index
    %c0_20 = arith.constant 0 : index
    %36 = vector.load %arg12[%c0_19, %c0_20] : memref<8x32xf32, #tpu.memory_space<vmem>>, vector<8x8xf32>
    tpu.vector_store %arg12[%c0_19, %c0_20], %35 {strides = array<i32>} : memref<8x32xf32, #tpu.memory_space<vmem>>, vector<8x8xf32>,
    %37 = vector.extract_strided_slice %9 {offsets = [0, 8], sizes = [8, 8], strides = [1, 1]} : vector<8x32xf32> to vector<8x8xf32>
    %38 = vector.extract_strided_slice %16 {offsets = [0, 8], sizes = [8, 8], strides = [1, 1]} : vector<8x32xf32> to vector<8x8xf32>
    %39 = vector.extract_strided_slice %17 {offsets = [0, 8], sizes = [8, 8], strides = [1, 1]} : vector<8x32xf32> to vector<8x8xf32>
    %40 = tpu.transpose %38, [1, 0] : vector<8x8xf32> -> vector<8x8xf32>
    %cst_21 = arith.constant dense<0.000000e+00> : vector<8x8xf32>
    %41 = tpu.matmul %37, %40, %cst_21 {dimension_numbers = #tpu.dot_dimension_numbers<[1], [0], [0], [1], [0, 0, 1, 1], [], []>} : vector<8x8xf32>, vector<8x8xf32>, vector<8x8xf32> -> vector<8x8xf32>
    %cst_22 = arith.constant 0.353553385 : f32
    %42 = vector.broadcast %cst_22 : f32 to vector<8x8xf32>
    %43 = arith.mulf %41, %42 : vector<8x8xf32>
    %cst_23 = arith.constant dense<0xFF800000> : vector<8xf32>
    %44 = vector.multi_reduction <maximumf>, %43, %cst_23 [1] : vector<8x8xf32> to vector<8xf32>
    %45 = vector.shape_cast %44 : vector<8xf32> to vector<8x1xf32>
    %46 = vector.broadcast %45 : vector<8x1xf32> to vector<8x8xf32>
    %47 = arith.subf %43, %46 : vector<8x8xf32>
    %48 = math.exp %47 : vector<8x8xf32>
    %cst_24 = arith.constant dense<0.000000e+00> : vector<8xf32>
    %49 = vector.multi_reduction <add>, %48, %cst_24 [1] : vector<8x8xf32> to vector<8xf32>
    %50 = vector.shape_cast %49 : vector<8xf32> to vector<8x1xf32>
    %51 = tpu.reciprocal %50 {approx = true} : vector<8x1xf32> -> vector<8x1xf32>
    %52 = vector.broadcast %51 : vector<8x1xf32> to vector<8x8xf32>
    %53 = arith.mulf %48, %52 : vector<8x8xf32>
    %cst_25 = arith.constant dense<0.000000e+00> : vector<8x8xf32>
    %54 = tpu.matmul %53, %39, %cst_25 {dimension_numbers = #tpu.dot_dimension_numbers<[1], [0], [0], [1], [0, 0, 1, 1], [], []>} : vector<8x8xf32>, vector<8x8xf32>, vector<8x8xf32> -> vector<8x8xf32>
    %c0_26 = arith.constant 0 : index
    %c8 = arith.constant 8 : index
    %55 = vector.load %arg12[%c0_26, %c8] : memref<8x32xf32, #tpu.memory_space<vmem>>, vector<8x8xf32>
    tpu.vector_store %arg12[%c0_26, %c8], %54 {strides = array<i32>} : memref<8x32xf32, #tpu.memory_space<vmem>>, vector<8x8xf32>,
    %56 = vector.extract_strided_slice %9 {offsets = [0, 16], sizes = [8, 8], strides = [1, 1]} : vector<8x32xf32> to vector<8x8xf32>
    %57 = vector.extract_strided_slice %16 {offsets = [0, 16], sizes = [8, 8], strides = [1, 1]} : vector<8x32xf32> to vector<8x8xf32>
    %58 = vector.extract_strided_slice %17 {offsets = [0, 16], sizes = [8, 8], strides = [1, 1]} : vector<8x32xf32> to vector<8x8xf32>
    %59 = tpu.transpose %57, [1, 0] : vector<8x8xf32> -> vector<8x8xf32>
    %cst_27 = arith.constant dense<0.000000e+00> : vector<8x8xf32>
    %60 = tpu.matmul %56, %59, %cst_27 {dimension_numbers = #tpu.dot_dimension_numbers<[1], [0], [0], [1], [0, 0, 1, 1], [], []>} : vector<8x8xf32>, vector<8x8xf32>, vector<8x8xf32> -> vector<8x8xf32>
    %cst_28 = arith.constant 0.353553385 : f32
    %61 = vector.broadcast %cst_28 : f32 to vector<8x8xf32>
    %62 = arith.mulf %60, %61 : vector<8x8xf32>
    %cst_29 = arith.constant dense<0xFF800000> : vector<8xf32>
    %63 = vector.multi_reduction <maximumf>, %62, %cst_29 [1] : vector<8x8xf32> to vector<8xf32>
    %64 = vector.shape_cast %63 : vector<8xf32> to vector<8x1xf32>
    %65 = vector.broadcast %64 : vector<8x1xf32> to vector<8x8xf32>
    %66 = arith.subf %62, %65 : vector<8x8xf32>
    %67 = math.exp %66 : vector<8x8xf32>
    %cst_30 = arith.constant dense<0.000000e+00> : vector<8xf32>
    %68 = vector.multi_reduction <add>, %67, %cst_30 [1] : vector<8x8xf32> to vector<8xf32>
    %69 = vector.shape_cast %68 : vector<8xf32> to vector<8x1xf32>
    %70 = tpu.reciprocal %69 {approx = true} : vector<8x1xf32> -> vector<8x1xf32>
    %71 = vector.broadcast %70 : vector<8x1xf32> to vector<8x8xf32>
    %72 = arith.mulf %67, %71 : vector<8x8xf32>
    %cst_31 = arith.constant dense<0.000000e+00> : vector<8x8xf32>
    %73 = tpu.matmul %72, %58, %cst_31 {dimension_numbers = #tpu.dot_dimension_numbers<[1], [0], [0], [1], [0, 0, 1, 1], [], []>} : vector<8x8xf32>, vector<8x8xf32>, vector<8x8xf32> -> vector<8x8xf32>
    %c0_32 = arith.constant 0 : index
    %c16 = arith.constant 16 : index
    %74 = vector.load %arg12[%c0_32, %c16] : memref<8x32xf32, #tpu.memory_space<vmem>>, vector<8x8xf32>
    tpu.vector_store %arg12[%c0_32, %c16], %73 {strides = array<i32>} : memref<8x32xf32, #tpu.memory_space<vmem>>, vector<8x8xf32>,
    %75 = vector.extract_strided_slice %9 {offsets = [0, 24], sizes = [8, 8], strides = [1, 1]} : vector<8x32xf32> to vector<8x8xf32>
    %76 = vector.extract_strided_slice %16 {offsets = [0, 24], sizes = [8, 8], strides = [1, 1]} : vector<8x32xf32> to vector<8x8xf32>
    %77 = vector.extract_strided_slice %17 {offsets = [0, 24], sizes = [8, 8], strides = [1, 1]} : vector<8x32xf32> to vector<8x8xf32>
    %78 = tpu.transpose %76, [1, 0] : vector<8x8xf32> -> vector<8x8xf32>
    %cst_33 = arith.constant dense<0.000000e+00> : vector<8x8xf32>
    %79 = tpu.matmul %75, %78, %cst_33 {dimension_numbers = #tpu.dot_dimension_numbers<[1], [0], [0], [1], [0, 0, 1, 1], [], []>} : vector<8x8xf32>, vector<8x8xf32>, vector<8x8xf32> -> vector<8x8xf32>
    %cst_34 = arith.constant 0.353553385 : f32
    %80 = vector.broadcast %cst_34 : f32 to vector<8x8xf32>
    %81 = arith.mulf %79, %80 : vector<8x8xf32>
    %cst_35 = arith.constant dense<0xFF800000> : vector<8xf32>
    %82 = vector.multi_reduction <maximumf>, %81, %cst_35 [1] : vector<8x8xf32> to vector<8xf32>
    %83 = vector.shape_cast %82 : vector<8xf32> to vector<8x1xf32>
    %84 = vector.broadcast %83 : vector<8x1xf32> to vector<8x8xf32>
    %85 = arith.subf %81, %84 : vector<8x8xf32>
    %86 = math.exp %85 : vector<8x8xf32>
    %cst_36 = arith.constant dense<0.000000e+00> : vector<8xf32>
    %87 = vector.multi_reduction <add>, %86, %cst_36 [1] : vector<8x8xf32> to vector<8xf32>
    %88 = vector.shape_cast %87 : vector<8xf32> to vector<8x1xf32>
    %89 = tpu.reciprocal %88 {approx = true} : vector<8x1xf32> -> vector<8x1xf32>
    %90 = vector.broadcast %89 : vector<8x1xf32> to vector<8x8xf32>
    %91 = arith.mulf %86, %90 : vector<8x8xf32>
    %cst_37 = arith.constant dense<0.000000e+00> : vector<8x8xf32>
    %92 = tpu.matmul %91, %77, %cst_37 {dimension_numbers = #tpu.dot_dimension_numbers<[1], [0], [0], [1], [0, 0, 1, 1], [], []>} : vector<8x8xf32>, vector<8x8xf32>, vector<8x8xf32> -> vector<8x8xf32>
    %c0_38 = arith.constant 0 : index
    %c24 = arith.constant 24 : index
    %93 = vector.load %arg12[%c0_38, %c24] : memref<8x32xf32, #tpu.memory_space<vmem>>, vector<8x8xf32>
    tpu.vector_store %arg12[%c0_38, %c24], %92 {strides = array<i32>} : memref<8x32xf32, #tpu.memory_space<vmem>>, vector<8x8xf32>,
    %c0_39 = arith.constant 0 : index
    %c0_40 = arith.constant 0 : index
    %94 = vector.load %arg12[%c0_39, %c0_40] : memref<8x32xf32, #tpu.memory_space<vmem>>, vector<8x32xf32>
    %95 = arith.truncf %94 : vector<8x32xf32> to vector<8x32xbf16>
    %c0_41 = arith.constant 0 : index
    %c0_42 = arith.constant 0 : index
    %96 = vector.load %arg7[%c0_41, %c0_42] : memref<32x32xbf16, #tpu.memory_space<vmem>>, vector<32x32xbf16>
    %cst_43 = arith.constant dense<0.000000e+00> : vector<8x32xf32>
    %97 = tpu.matmul %95, %96, %cst_43 {dimension_numbers = #tpu.dot_dimension_numbers<[1], [0], [0], [1], [0, 0, 1, 1], [], []>} : vector<8x32xbf16>, vector<32x32xbf16>, vector<8x32xf32> -> vector<8x32xf32>
    %c0_44 = arith.constant 0 : index
    %c0_45 = arith.constant 0 : index
    %98 = vector.load %arg8[%c0_44, %c0_45] : memref<1x32xf32, #tpu.memory_space<vmem>>, vector<1x32xf32>
    %99 = vector.broadcast %98 : vector<1x32xf32> to vector<8x32xf32>
    %100 = arith.addf %97, %99 : vector<8x32xf32>
    %101 = arith.addf %1, %100 : vector<8x32xf32>
    %cst_46 = arith.constant dense<0.000000e+00> : vector<8xf32>
    %102 = vector.multi_reduction <add>, %101, %cst_46 [1] : vector<8x32xf32> to vector<8xf32>
    %103 = vector.shape_cast %102 : vector<8xf32> to vector<8x1xf32>
    %cst_47 = arith.constant 3.200000e+01 : f32
    %104 = vector.broadcast %cst_47 : f32 to vector<8x1xf32>
    %105 = arith.divf %103, %104 : vector<8x1xf32>
    %106 = vector.broadcast %105 : vector<8x1xf32> to vector<8x32xf32>
    %107 = arith.subf %101, %106 : vector<8x32xf32>
    %108 = arith.mulf %107, %107 : vector<8x32xf32>
    %cst_48 = arith.constant dense<0.000000e+00> : vector<8xf32>
    %109 = vector.multi_reduction <add>, %108, %cst_48 [1] : vector<8x32xf32> to vector<8xf32>
    %110 = vector.shape_cast %109 : vector<8xf32> to vector<8x1xf32>
    %cst_49 = arith.constant 3.200000e+01 : f32
    %111 = vector.broadcast %cst_49 : f32 to vector<8x1xf32>
    %112 = arith.divf %110, %111 : vector<8x1xf32>
    %113 = vector.broadcast %105 : vector<8x1xf32> to vector<8x32xf32>
    %114 = arith.subf %101, %113 : vector<8x32xf32>
    %cst_50 = arith.constant 9.99999974E-6 : f32
    %115 = vector.broadcast %cst_50 : f32 to vector<8x1xf32>
    %116 = arith.addf %112, %115 : vector<8x1xf32>
    %117 = math.rsqrt %116 : vector<8x1xf32>
    %118 = vector.broadcast %117 : vector<8x1xf32> to vector<8x32xf32>
    %119 = arith.mulf %114, %118 : vector<8x32xf32>
    %c0_51 = arith.constant 0 : index
    %c0_52 = arith.constant 0 : index
    %120 = vector.load %arg9[%c0_51, %c0_52] : memref<1x32xf32, #tpu.memory_space<vmem>>, vector<1x32xf32>
    %121 = vector.broadcast %120 : vector<1x32xf32> to vector<8x32xf32>
    %122 = arith.mulf %119, %121 : vector<8x32xf32>
    %c0_53 = arith.constant 0 : index
    %c0_54 = arith.constant 0 : index
    %123 = vector.load %arg10[%c0_53, %c0_54] : memref<1x32xf32, #tpu.memory_space<vmem>>, vector<1x32xf32>
    %124 = vector.broadcast %123 : vector<1x32xf32> to vector<8x32xf32>
    %125 = arith.addf %122, %124 : vector<8x32xf32>
    %c0_55 = arith.constant 0 : index
    %c0_56 = arith.constant 0 : index
    %c0_57 = arith.constant 0 : index
    %126 = vector.load %arg11[%c0_55, %c0_56, %c0_57] : memref<1x8x32xf32, #tpu.memory_space<vmem>>, vector<1x8x32xf32>
    %127 = vector.shape_cast %126 : vector<1x8x32xf32> to vector<8x32xf32>
    %128 = vector.shape_cast %125 : vector<8x32xf32> to vector<1x8x32xf32>
    tpu.vector_store %arg11[%c0_55, %c0_56, %c0_57], %128 {strides = array<i32>} : memref<1x8x32xf32, #tpu.memory_space<vmem>>, vector<1x8x32xf32>,
    return
  }
  func.func @transform_0(%arg0: i32) -> (i32, i32, i32) {
    %c0_i32 = arith.constant 0 : i32
    %c0_i32_0 = arith.constant 0 : i32
    %c0_i32_1 = arith.constant 0 : i32
    return %arg0, %c0_i32, %c0_i32_0 : i32, i32, i32
  }
  func.func @transform_1(%arg0: i32) -> (i32, i32, i32) {
    %c0_i32 = arith.constant 0 : i32
    %c0_i32_0 = arith.constant 0 : i32
    %c0_i32_1 = arith.constant 0 : i32
    return %arg0, %c0_i32, %c0_i32_0 : i32, i32, i32
  }
  func.func @transform_2(%arg0: i32) -> (i32, i32) {
    %c0_i32 = arith.constant 0 : i32
    %c0_i32_0 = arith.constant 0 : i32
    %c0_i32_1 = arith.constant 0 : i32
    return %c0_i32, %c0_i32_0 : i32, i32
  }
  func.func @transform_3(%arg0: i32) -> (i32, i32) {
    %c0_i32 = arith.constant 0 : i32
    %c0_i32_0 = arith.constant 0 : i32
    %c0_i32_1 = arith.constant 0 : i32
    return %c0_i32, %c0_i32_0 : i32, i32
  }
  func.func @transform_4(%arg0: i32) -> (i32, i32) {
    %c0_i32 = arith.constant 0 : i32
    %c0_i32_0 = arith.constant 0 : i32
    %c0_i32_1 = arith.constant 0 : i32
    return %c0_i32, %c0_i32_0 : i32, i32
  }
  func.func @transform_5(%arg0: i32) -> (i32, i32) {
    %c0_i32 = arith.constant 0 : i32
    %c0_i32_0 = arith.constant 0 : i32
    %c0_i32_1 = arith.constant 0 : i32
    return %c0_i32, %c0_i32_0 : i32, i32
  }
  func.func @transform_6(%arg0: i32) -> (i32, i32) {
    %c0_i32 = arith.constant 0 : i32
    %c0_i32_0 = arith.constant 0 : i32
    %c0_i32_1 = arith.constant 0 : i32
    return %c0_i32, %c0_i32_0 : i32, i32
  }
  func.func @transform_7(%arg0: i32) -> (i32, i32) {
    %c0_i32 = arith.constant 0 : i32
    %c0_i32_0 = arith.constant 0 : i32
    %c0_i32_1 = arith.constant 0 : i32
    return %c0_i32, %c0_i32_0 : i32, i32
  }
  func.func @transform_8(%arg0: i32) -> (i32, i32) {
    %c0_i32 = arith.constant 0 : i32
    %c0_i32_0 = arith.constant 0 : i32
    %c0_i32_1 = arith.constant 0 : i32
    return %c0_i32, %c0_i32_0 : i32, i32
  }
  func.func @transform_9(%arg0: i32) -> (i32, i32) {
    %c0_i32 = arith.constant 0 : i32
    %c0_i32_0 = arith.constant 0 : i32
    %c0_i32_1 = arith.constant 0 : i32
    return %c0_i32, %c0_i32_0 : i32, i32
  }
  func.func @transform_10(%arg0: i32) -> (i32, i32, i32) {
    %c0_i32 = arith.constant 0 : i32
    %c0_i32_0 = arith.constant 0 : i32
    %c0_i32_1 = arith.constant 0 : i32
    return %arg0, %c0_i32, %c0_i32_0 : i32, i32, i32
  }
}

module attributes {stable_mosaic.version = 11 : i64} {
  func.func @_linear_pad_kernel(%arg0: i32, %arg1: memref<16x32xf32, #tpu.memory_space<vmem>>, %arg2: memref<32x128xbf16, #tpu.memory_space<vmem>>, %arg3: memref<1x128xf32, #tpu.memory_space<vmem>>, %arg4: memref<16x128xf32, #tpu.memory_space<vmem>>) attributes {dimension_semantics = [#tpu.dimension_semantics<arbitrary>], iteration_bounds = array<i64: 1>, scalar_prefetch = 0 : i64, scratch_operands = 0 : i64, tpu.core_type = #tpu.core_type<tc>, window_params = [{pipeline_mode = #tpu.pipeline_mode<synchronous>, transform_indices = @transform_0, window_bounds = array<i64: 16, 32>}, {pipeline_mode = #tpu.pipeline_mode<synchronous>, transform_indices = @transform_1, window_bounds = array<i64: 32, 128>}, {pipeline_mode = #tpu.pipeline_mode<synchronous>, transform_indices = @transform_2, window_bounds = array<i64: 1, 128>}, {pipeline_mode = #tpu.pipeline_mode<synchronous>, transform_indices = @transform_3, window_bounds = array<i64: 16, 128>}]} {
    %c0 = arith.constant 0 : index
    %c0_0 = arith.constant 0 : index
    %0 = vector.load %arg1[%c0, %c0_0] : memref<16x32xf32, #tpu.memory_space<vmem>>, vector<16x32xf32>
    %1 = arith.truncf %0 : vector<16x32xf32> to vector<16x32xbf16>
    %c0_1 = arith.constant 0 : index
    %c0_2 = arith.constant 0 : index
    %2 = vector.load %arg2[%c0_1, %c0_2] : memref<32x128xbf16, #tpu.memory_space<vmem>>, vector<32x128xbf16>
    %cst = arith.constant dense<0.000000e+00> : vector<16x128xf32>
    %3 = tpu.matmul %1, %2, %cst {dimension_numbers = #tpu.dot_dimension_numbers<[1], [0], [0], [1], [0, 0, 1, 1], [], []>} : vector<16x32xbf16>, vector<32x128xbf16>, vector<16x128xf32> -> vector<16x128xf32>
    %c0_3 = arith.constant 0 : index
    %c0_4 = arith.constant 0 : index
    %4 = vector.load %arg3[%c0_3, %c0_4] : memref<1x128xf32, #tpu.memory_space<vmem>>, vector<1x128xf32>
    %5 = vector.broadcast %4 : vector<1x128xf32> to vector<16x128xf32>
    %6 = arith.addf %3, %5 : vector<16x128xf32>
    %c0_5 = arith.constant 0 : index
    %c0_6 = arith.constant 0 : index
    %7 = vector.load %arg4[%c0_5, %c0_6] : memref<16x128xf32, #tpu.memory_space<vmem>>, vector<16x128xf32>
    tpu.vector_store %arg4[%c0_5, %c0_6], %6 {strides = array<i32>} : memref<16x128xf32, #tpu.memory_space<vmem>>, vector<16x128xf32>,
    return
  }
  func.func @transform_0(%arg0: i32) -> (i32, i32) {
    %c0_i32 = arith.constant 0 : i32
    %c0_i32_0 = arith.constant 0 : i32
    %c0_i32_1 = arith.constant 0 : i32
    return %c0_i32, %c0_i32_0 : i32, i32
  }
  func.func @transform_1(%arg0: i32) -> (i32, i32) {
    %c0_i32 = arith.constant 0 : i32
    %c0_i32_0 = arith.constant 0 : i32
    %c0_i32_1 = arith.constant 0 : i32
    return %c0_i32, %c0_i32_0 : i32, i32
  }
  func.func @transform_2(%arg0: i32) -> (i32, i32) {
    %c0_i32 = arith.constant 0 : i32
    %c0_i32_0 = arith.constant 0 : i32
    %c0_i32_1 = arith.constant 0 : i32
    return %c0_i32, %c0_i32_0 : i32, i32
  }
  func.func @transform_3(%arg0: i32) -> (i32, i32) {
    %c0_i32 = arith.constant 0 : i32
    %c0_i32_0 = arith.constant 0 : i32
    %c0_i32_1 = arith.constant 0 : i32
    return %c0_i32, %c0_i32_0 : i32, i32
  }
}

</mosaic_0001>

<llo_original>
// kernel: transformer_forward.14
$region0: #{transformer_forward.14}
  #allocation0 [shape = 'u32[]', space=smem, size = 0x4, offset = 0x4, fixed_abs, tag = 'smem constant byte address 0x4 - core index']
  #allocation1 [shape = 'u32[72,128]{1,0:T(1,128)}', space=vmem, size = 0x9000, scoped, tag = 'internal scratch']
  %s0 = inlined_call_operand.vmem [shape: f32[2,8,32], index: 0, kind: input, shape index: {}]
  %s1 = inlined_call_operand.vmem [shape: bf16[32,64], index: 1, kind: input, shape index: {}]
  %s2 = inlined_call_operand.vmem [shape: f32[1,64], index: 2, kind: input, shape index: {}]
  %s3 = inlined_call_operand.vmem [shape: bf16[64,32], index: 3, kind: input, shape index: {}]
  %s4 = inlined_call_operand.vmem [shape: f32[1,32], index: 4, kind: input, shape index: {}]
  %s5 = inlined_call_operand.vmem [shape: f32[1,32], index: 5, kind: input, shape index: {}]
  %s6 = inlined_call_operand.hbm [shape: f32[1,32], index: 6, kind: input, shape index: {}]
  %s7 = inlined_call_operand.vmem [shape: f32[2,8,32], index: 7, kind: output, shape index: {}]
  %s8 = sld [smem:[#allocation0]]
  $region65: #{transformer_forward.14} parent=0
    _
  %s10 = ssub.s32 1, %s8
  %s11 = scalar_select 0, %s10, %s8
  $region1: #{transformer_forward.14} parent=0
    #allocation2 [shape = 'u8[512]{0}', space=vmem, size = 0x400, scoped, tag = 'input window, operand 6, single buffered']
    #allocation3 [shape = 's32[2]{0}', space=sflag, size = 0x8, scoped, tag = 'scoped memory for transformer_forward.14']
    %12 = vsyncpa [#allocation3], 0
    loop: start=0, step=1, limit=4
    $region2: #{transformer_forward.14} parent=1 // loop_pre_header
      _
    $region3: #{transformer_forward.14} parent=1 // loop_header
      %s14 = sphi 0, %s18
      %p15 = scmp.ge.s32.totalorder %s14, 4
      %s24 = sphi 0, %s26
      %s27 = sphi 0, %s24
      %s28 = sphi 0, %s27
      %s44 = sphi 0, %s28
      %s48 = sphi 0, %s48
      %s50 = sphi 0, %s48
      %s51 = sphi 0, %s50
      %s65 = sphi 0, %s51
      %s69 = sphi 0, %s69
      %s71 = sphi 0, %s69
      %s72 = sphi 0, %s71
      %s86 = sphi 0, %s72
      %s90 = sphi 0, %s90
      %s92 = sphi 0, %s90
      %s93 = sphi 0, %s92
      %s107 = sphi 0, %s93
      %s111 = sphi 0, %s111
      %s113 = sphi 0, %s111
      %s114 = sphi 0, %s113
      %s128 = sphi 0, %s114
      %s132 = sphi 0, %s132
      %s134 = sphi 0, %s132
      %s135 = sphi 0, %s134
      %s149 = sphi 0, %s135
      %s153 = sphi 0, %s153
      %s155 = sphi 0, %s153
      %s156 = sphi 0, %s155
      %s170 = sphi 0, %s156
      %s176 = sphi 0, %s178
      %s179 = sphi 0, %s176
      %s180 = sphi 0, %s179
      %s196 = sphi 0, %s180
    $region4: #{transformer_forward.14} parent=1 // loop_header_branch
      %17 = sbr.rel (%p15) target = $region8
    $region5: #{transformer_forward.14} parent=1 // loop_body
      %s19 = ssub.s32 %s14, 1
      %s20 = ssub.s32 %s14, 2
      %s21 = sadd.s32 %s14, 1
      %s22 = ssub.s32 %s14, %s21
      %p23 = scmp.eq.s32.totalorder %s22, 0
      %s25 = sadd.s32 %s24, 1
      %s26 = scalar_select %p23, %s24, %s25
      %p29 = pneg %p23
      %p30 = scmp.eq.s32.totalorder %s14, 1
      %p31 = por %p29, %p30
      %p32 = scmp.ne.s32.totalorder %s24, %s27
      %p33 = scmp.eq.s32.totalorder %s14, 0
      %p34 = por %p32, %p33
      %p35 = scmp.ne.s32.totalorder %s24, %s27
      %p36 = scmp.eq.s32.totalorder %s19, 1
      %p37 = por %p35, %p36
      %p38 = scmp.ne.s32.totalorder %s27, %s28
      %p39 = scmp.eq.s32.totalorder %s19, 0
      %p40 = por %p38, %p39
      %p41 = scmp.ne.s32.totalorder %s27, %s28
      %p42 = scmp.eq.s32.totalorder %s20, 1
      %p43 = por %p41, %p42
      %p45 = scmp.ne.s32.totalorder %s28, %s44
      %p46 = scmp.eq.s32.totalorder %s20, 0
      %p47 = por %p45, %p46
      %s49 = sadd.s32 %s48, 1
      %p52 = scmp.eq.s32.totalorder %s14, 1
      %p53 = scmp.ne.s32.totalorder %s48, %s50
      %p54 = scmp.eq.s32.totalorder %s14, 0
      %p55 = por %p53, %p54
      %p56 = scmp.ne.s32.totalorder %s48, %s50
      %p57 = scmp.eq.s32.totalorder %s19, 1
      %p58 = por %p56, %p57
      %p59 = scmp.ne.s32.totalorder %s50, %s51
      %p60 = scmp.eq.s32.totalorder %s19, 0
      %p61 = por %p59, %p60
      %p62 = scmp.ne.s32.totalorder %s50, %s51
      %p63 = scmp.eq.s32.totalorder %s20, 1
      %p64 = por %p62, %p63
      %p66 = scmp.ne.s32.totalorder %s51, %s65
      %p67 = scmp.eq.s32.totalorder %s20, 0
      %p68 = por %p66, %p67
      %s70 = sadd.s32 %s69, 1
      %p73 = scmp.eq.s32.totalorder %s14, 1
      %p74 = scmp.ne.s32.totalorder %s69, %s71
      %p75 = scmp.eq.s32.totalorder %s14, 0
      %p76 = por %p74, %p75
      %p77 = scmp.ne.s32.totalorder %s69, %s71
      %p78 = scmp.eq.s32.totalorder %s19, 1
      %p79 = por %p77, %p78
      %p80 = scmp.ne.s32.totalorder %s71, %s72
      %p81 = scmp.eq.s32.totalorder %s19, 0
      %p82 = por %p80, %p81
      %p83 = scmp.ne.s32.totalorder %s71, %s72
      %p84 = scmp.eq.s32.totalorder %s20, 1
      %p85 = por %p83, %p84
      %p87 = scmp.ne.s32.totalorder %s72, %s86
      %p88 = scmp.eq.s32.totalorder %s20, 0
      %p89 = por %p87, %p88
      %s91 = sadd.s32 %s90, 1
      %p94 = scmp.eq.s32.totalorder %s14, 1
      %p95 = scmp.ne.s32.totalorder %s90, %s92
      %p96 = scmp.eq.s32.totalorder %s14, 0
      %p97 = por %p95, %p96
      %p98 = scmp.ne.s32.totalorder %s90, %s92
      %p99 = scmp.eq.s32.totalorder %s19, 1
      %p100 = por %p98, %p99
      %p101 = scmp.ne.s32.totalorder %s92, %s93
      %p102 = scmp.eq.s32.totalorder %s19, 0
      %p103 = por %p101, %p102
      %p104 = scmp.ne.s32.totalorder %s92, %s93
      %p105 = scmp.eq.s32.totalorder %s20, 1
      %p106 = por %p104, %p105
      %p108 = scmp.ne.s32.totalorder %s93, %s107
      %p109 = scmp.eq.s32.totalorder %s20, 0
      %p110 = por %p108, %p109
      %s112 = sadd.s32 %s111, 1
      %p115 = scmp.eq.s32.totalorder %s14, 1
      %p116 = scmp.ne.s32.totalorder %s111, %s113
      %p117 = scmp.eq.s32.totalorder %s14, 0
      %p118 = por %p116, %p117
      %p119 = scmp.ne.s32.totalorder %s111, %s113
      %p120 = scmp.eq.s32.totalorder %s19, 1
      %p121 = por %p119, %p120
      %p122 = scmp.ne.s32.totalorder %s113, %s114
      %p123 = scmp.eq.s32.totalorder %s19, 0
      %p124 = por %p122, %p123
      %p125 = scmp.ne.s32.totalorder %s113, %s114
      %p126 = scmp.eq.s32.totalorder %s20, 1
      %p127 = por %p125, %p126
      %p129 = scmp.ne.s32.totalorder %s114, %s128
      %p130 = scmp.eq.s32.totalorder %s20, 0
      %p131 = por %p129, %p130
      %s133 = sadd.s32 %s132, 1
      %p136 = scmp.eq.s32.totalorder %s14, 1
      %p137 = scmp.ne.s32.totalorder %s132, %s134
      %p138 = scmp.eq.s32.totalorder %s14, 0
      %p139 = por %p137, %p138
      %p140 = scmp.ne.s32.totalorder %s132, %s134
      %p141 = scmp.eq.s32.totalorder %s19, 1
      %p142 = por %p140, %p141
      %p143 = scmp.ne.s32.totalorder %s134, %s135
      %p144 = scmp.eq.s32.totalorder %s19, 0
      %p145 = por %p143, %p144
      %p146 = scmp.ne.s32.totalorder %s134, %s135
      %p147 = scmp.eq.s32.totalorder %s20, 1
      %p148 = por %p146, %p147
      %p150 = scmp.ne.s32.totalorder %s135, %s149
      %p151 = scmp.eq.s32.totalorder %s20, 0
      %p152 = por %p150, %p151
      %s154 = sadd.s32 %s153, 1
      %p157 = scmp.eq.s32.totalorder %s14, 1
      %p158 = scmp.ne.s32.totalorder %s153, %s155
      %p159 = scmp.eq.s32.totalorder %s14, 0
      %p160 = por %p158, %p159
      %p161 = scmp.ne.s32.totalorder %s153, %s155
      %p162 = scmp.eq.s32.totalorder %s19, 1
      %p163 = por %p161, %p162
      %p164 = scmp.ne.s32.totalorder %s155, %s156
      %p165 = scmp.eq.s32.totalorder %s19, 0
      %p166 = por %p164, %p165
      %p167 = scmp.ne.s32.totalorder %s155, %s156
      %p168 = scmp.eq.s32.totalorder %s20, 1
      %p169 = por %p167, %p168
      %p171 = scmp.ne.s32.totalorder %s156, %s170
      %p172 = scmp.eq.s32.totalorder %s20, 0
      %p173 = por %p171, %p172
      %s174 = ssub.s32 %s14, %s21
      %p175 = scmp.eq.s32.totalorder %s174, 0
      %s177 = sadd.s32 %s176, 1
      %s178 = scalar_select %p175, %s176, %s177
      %p181 = pneg %p175
      %p182 = scmp.eq.s32.totalorder %s14, 1
      %p183 = por %p181, %p182
      %p184 = scmp.ne.s32.totalorder %s176, %s179
      %p185 = scmp.eq.s32.totalorder %s14, 0
      %p186 = por %p184, %p185
      %p187 = scmp.ne.s32.totalorder %s176, %s179
      %p188 = scmp.eq.s32.totalorder %s19, 1
      %p189 = por %p187, %p188
      %p190 = scmp.ne.s32.totalorder %s179, %s180
      %p191 = scmp.eq.s32.totalorder %s19, 0
      %p192 = por %p190, %p191
      %p193 = scmp.ne.s32.totalorder %s179, %s180
      %p194 = scmp.eq.s32.totalorder %s20, 1
      %p195 = por %p193, %p194
      %p197 = scmp.ne.s32.totalorder %s180, %s196
      %p198 = scmp.eq.s32.totalorder %s20, 0
      %p199 = por %p197, %p198
      %p200 = scmp.le.s32.totalorder 1, %s14
      %p201 = scmp.lt.s32.totalorder %s14, 3
      %p202 = pnand %p200, %p201
      %p203 = pneg %p202
      // Predicated region
      $region9: #{transformer_forward.14} parent=5 // pred_check
        _
      $region10: #{transformer_forward.14} parent=5 // pred_check_branch
        %205 = sbr.rel (%p202) target = $region12
      $region11: #{transformer_forward.14} parent=5 // pred_region
        %s206 = ssub.s32 %s14, 1
        // Predicated region
        $region13: #{transformer_forward.14} parent=11 // pred_check
          %p207 = pneg %p61
        $region14: #{transformer_forward.14} parent=11 // pred_check_branch
          %209 = sbr.rel (%p207) target = $region16
        $region15: #{transformer_forward.14} parent=11 // pred_region
          _
        $region16: #{transformer_forward.14} parent=11 // pred_fallthru
          _
        // Predicated region
        $region17: #{transformer_forward.14} parent=11 // pred_check
          %p210 = pneg %p82
        $region18: #{transformer_forward.14} parent=11 // pred_check_branch
          %212 = sbr.rel (%p210) target = $region20
        $region19: #{transformer_forward.14} parent=11 // pred_region
          _
        $region20: #{transformer_forward.14} parent=11 // pred_fallthru
          _
        // Predicated region
        $region21: #{transformer_forward.14} parent=11 // pred_check
          %p213 = pneg %p103
        $region22: #{transformer_forward.14} parent=11 // pred_check_branch
          %215 = sbr.rel (%p213) target = $region24
        $region23: #{transformer_forward.14} parent=11 // pred_region
          _
        $region24: #{transformer_forward.14} parent=11 // pred_fallthru
          _
        // Predicated region
        $region25: #{transformer_forward.14} parent=11 // pred_check
          %p216 = pneg %p124
        $region26: #{transformer_forward.14} parent=11 // pred_check_branch
          %218 = sbr.rel (%p216) target = $region28
        $region27: #{transformer_forward.14} parent=11 // pred_region
          _
        $region28: #{transformer_forward.14} parent=11 // pred_fallthru
          _
        // Predicated region
        $region29: #{transformer_forward.14} parent=11 // pred_check
          %p219 = pneg %p145
        $region30: #{transformer_forward.14} parent=11 // pred_check_branch
          %221 = sbr.rel (%p219) target = $region32
        $region31: #{transformer_forward.14} parent=11 // pred_region
          _
        $region32: #{transformer_forward.14} parent=11 // pred_fallthru
          _
        // Predicated region
        $region33: #{transformer_forward.14} parent=11 // pred_check
          %p222 = pneg %p166
        $region34: #{transformer_forward.14} parent=11 // pred_check_branch
          %224 = sbr.rel (%p222) target = $region36
        $region35: #{transformer_forward.14} parent=11 // pred_region
          %226 = vsyncadd [#allocation3], 0
          %s228 = sshll.u32 %s6, 4
          %s229 = int_to_ptr.hbm [resolvable:$true] %s228
          %s230 = sshll.u32 [#allocation2], 4
          %s231 = int_to_ptr.vmem [resolvable:$true] %s230
          %233 = dma.hbm_to_vmem [thread:$0]  %s229, 16, %s231, [#allocation3]
        $region36: #{transformer_forward.14} parent=11 // pred_fallthru
          _
      $region12: #{transformer_forward.14} parent=5 // pred_fallthru
        _
      %p234 = scmp.lt.s32.totalorder %s14, 2
      // Predicated region
      $region37: #{transformer_forward.14} parent=5 // pred_check
        %p235 = pneg %p234
      $region38: #{transformer_forward.14} parent=5 // pred_check_branch
        %237 = sbr.rel (%p235) target = $region40
      $region39: #{transformer_forward.14} parent=5 // pred_region
        // Predicated region
        $region41: #{transformer_forward.14} parent=39 // pred_check
          %p238 = pneg %p34
        $region42: #{transformer_forward.14} parent=39 // pred_check_branch
          %240 = sbr.rel (%p238) target = $region44
        $region43: #{transformer_forward.14} parent=39 // pred_region
          %p241 = scmp.lt.s32.totalorder %s14, 1
          %s242 = scalar_select %p241, %s14, 1
          %s243 = smul.addr %s242, 8
          %s244 = scalar_lea.vmem %s0, %s243
        $region44: #{transformer_forward.14} parent=39 // pred_fallthru
          _
      $region40: #{transformer_forward.14} parent=5 // pred_fallthru
        _
      %p245 = scmp.le.s32.totalorder 1, %s14
      %p246 = scmp.lt.s32.totalorder %s14, 3
      %p247 = pnand %p245, %p246
      %p248 = pneg %p247
      // Predicated region
      $region45: #{transformer_forward.14} parent=5 // pred_check
        _
      $region46: #{transformer_forward.14} parent=5 // pred_check_branch
        %250 = sbr.rel (%p247) target = $region48
      $region47: #{transformer_forward.14} parent=5 // pred_region
        %s251 = ssub.s32 %s14, 1
        // Predicated region
        $region49: #{transformer_forward.14} parent=47 // pred_check
          %p252 = pneg %p166
        $region50: #{transformer_forward.14} parent=47 // pred_check_branch
          %254 = sbr.rel (%p252) target = $region52
        $region51: #{transformer_forward.14} parent=47 // pred_region
          %256 = dma.done [#allocation3], 16
        $region52: #{transformer_forward.14} parent=47 // pred_fallthru
          _
        %p257 = scmp.lt.s32.totalorder %s19, 1
        %s258 = scalar_select %p257, %s19, 1
        %s259 = smul.addr %s258, 8
        %s260 = scalar_lea.vmem %s0, %s259
        %p261 = pneg %p40
        %p262 = pneg %p37
        %p263 = pneg %p61
        %p264 = pneg %p58
        %p265 = pneg %p82
        %p266 = pneg %p79
        %p267 = pneg %p103
        %p268 = pneg %p100
        %p269 = pneg %p124
        %p270 = pneg %p121
        %p271 = pneg %p145
        %p272 = pneg %p142
        %p273 = pneg %p166
        %p274 = pneg %p163
        %p275 = pneg %p192
        %p276 = pneg %p189
        %p277 = scmp.lt.s32.totalorder %s19, 1
        %s278 = scalar_select %p277, %s19, 1
        %s279 = smul.addr %s278, 8
        %s280 = scalar_lea.vmem %s7, %s279
        %p281 = scmp.lt.s32.totalorder %s19, 1
        %s282 = scalar_select %p281, %s19, 1
        %s283 = smul.addr %s282, 8
        %s284 = scalar_lea.vmem %s0, %s283
        %p285 = scmp.lt.s32.totalorder %s19, 1
        %s286 = scalar_select %p285, %s19, 1
        %s287 = smul.addr %s286, 8
        %s288 = scalar_lea.vmem %s7, %s287
        %v290 = vld [vmem:[%s284] sm:$0xff]
        %v291 = vpack.c.bf16 %v290, %v290
        %v292 = vld [vmem:[%s1] sm:$0xf]
        %v293 = vld [vmem:[%s1 + $0x4] sm:$0xf]
        %v294 = vld [vmem:[%s1 + $0x8] sm:$0xf]
        %v295 = vld [vmem:[%s1 + $0xc] sm:$0xf]
        %v296 = vld [vmem:[%s2] sm:$0x1]
        %v298 = vperm.slane %v296, 0
        %v304 = vunpack.c.l.b16 %v292
        %v305 = vunpack.c.l.b16 %v293
        %v306 = vunpack.c.l.b16 %v294
        %v307 = vunpack.c.l.b16 %v295
        %v308 = vpack.c.b16 %v305, %v304
        %v309 = vpack.c.b16 %v307, %v306
        %vm312 = vcmask 261120
        %v314 = vsel %vm312, %v291, 0
        %316 = vmatpush.bf16.msra.mxu0 0
        %317 = vmatpush.bf16.msra.mxu0 0
        %318 = vmatpush.bf16.msra.mxu0 0
        %319 = vmatpush.bf16.msra.mxu0 0
        %320 = vmatpush.bf16.msra.mxu0 0
        %321 = vmatpush.bf16.msra.mxu0 0
        %322 = vmatpush.bf16.msra.mxu0 %v309
        %323 = vmatpush.bf16.msra.mxu0 %v308
        %324 = vmatmul.bf16.gmra.mxu0 %v314
        %v325 = vpop.f32.mrf.mxu0
        %v326 = vadd.f32 %v298, %v325
        %v327 = vpop.f32.mrf.mxu0
        %328 = vdwg.mxu0
        %v329 = vmax.f32 %v326, 0.0
        %v330 = vpack.c.bf16 %v329, %v329
        %v331 = vld [vmem:[%s3] sm:$0xf]
        %v332 = vld [vmem:[%s3 + $0x4] sm:$0xf]
        %v333 = vld [vmem:[%s3 + $0x8] sm:$0xf]
        %v334 = vld [vmem:[%s3 + $0xc] sm:$0xf]
        %v335 = vld [vmem:[%s3 + $0x10] sm:$0xf]
        %v336 = vld [vmem:[%s3 + $0x14] sm:$0xf]
        %v337 = vld [vmem:[%s3 + $0x18] sm:$0xf]
        %v338 = vld [vmem:[%s3 + $0x1c] sm:$0xf]
        %v339 = vld [vmem:[%s4] sm:$0x1]
        %v341 = vperm.slane %v339, 0
        %v351 = vunpack.c.l.b16 %v331
        %v352 = vunpack.c.l.b16 %v332
        %v353 = vunpack.c.l.b16 %v333
        %v354 = vunpack.c.l.b16 %v334
        %v355 = vunpack.c.l.b16 %v335
        %v356 = vunpack.c.l.b16 %v336
        %v357 = vunpack.c.l.b16 %v337
        %v358 = vunpack.c.l.b16 %v338
        %v359 = vpack.c.b16 %v352, %v351
        %v360 = vpack.c.b16 %v354, %v353
        %v361 = vpack.c.b16 %v356, %v355
        %v362 = vpack.c.b16 %v358, %v357
        %vm367 = vcmask 523264
        %v369 = vsel %vm367, %v330, 0
        %371 = vmatpush.bf16.msra.mxu0 0
        %372 = vmatpush.bf16.msra.mxu0 0
        %373 = vmatpush.bf16.msra.mxu0 0
        %374 = vmatpush.bf16.msra.mxu0 0
        %375 = vmatpush.bf16.msra.mxu0 %v362
        %376 = vmatpush.bf16.msra.mxu0 %v361
        %377 = vmatpush.bf16.msra.mxu0 %v360
        %378 = vmatpush.bf16.msra.mxu0 %v359
        %379 = vmatmul.bf16.gmra.mxu0 %v369
        %v380 = vpop.f32.mrf.mxu0
        %v381 = vadd.f32 %v341, %v380
        %v382 = vpop.f32.mrf.mxu0
        %383 = vdwg.mxu0
        %v384 = vadd.f32 %v290, %v381
        %v385 = vsel %vm312, %v384, 0.0
        %386 = vadd.xlane.f32.xlu0 %v385
        %v387 = vpop.xlane.xlu0 %386
        %v388 = vrcp.pop 32.0
        %v389 = vmul.f32 32.0, %v388
        %v390 = vsub.f32 1.0, %v389
        %v391 = vmul.f32 %v388, %v390
        %v392 = vadd.f32 %v388, %v391
        %vm393 = vweird.f32 %v388
        %v394 = vsel %vm393, %v388, %v392
        %v395 = vmul.f32 %v387, %v394
        %v396 = vsub.f32 %v384, %v395
        %v397 = vmul.f32 %v396, %v396
        %v398 = vsel %vm312, %v397, 0.0
        %399 = vadd.xlane.f32.xlu0 %v398
        %v400 = vpop.xlane.xlu0 %399
        %v401 = vmul.f32 %v400, %v394
        %v402 = vadd.f32 %v401, 1e-05
        %v403 = vrsqrt.pop %v402
        %v404 = vmul.f32 %v403, %v402
        %v405 = vmul.f32 %v404, %v403
        %v406 = vmul.f32 0.5, %v405
        %v407 = vsub.f32 1.5, %v406
        %v408 = vmul.f32 %v403, %v407
        %vm409 = vweird.f32 %v402
        %vm410 = vweird.f32 %v403
        %vm411 = vmor %vm409, %vm410
        %v412 = vsel %vm411, %v403, %v408
        %v413 = vmul.f32 %v396, %v412
        %v414 = vld [vmem:[%s5] sm:$0x1]
        %v416 = vperm.slane %v414, 0
        %v418 = vmul.f32 %v413, %v416
        %v419 = vld [vmem:[#allocation2] sm:$0x1]
        %v421 = vperm.slane %v419, 0
        %v423 = vadd.f32 %v418, %v421
        %424 = vst.msk [vmem:[%s288] sm:$0xff] %vm312, %v423
        %p425 = scmp.lt.s32.totalorder %s19, 1
        %s426 = scalar_select %p425, %s19, 1
        %s427 = smul.addr %s426, 8
        %s428 = scalar_lea.vmem %s7, %s427
        // Predicated region
        $region53: #{transformer_forward.14} parent=47 // pred_check
          %p429 = pneg %p189
        $region54: #{transformer_forward.14} parent=47 // pred_check_branch
          %431 = sbr.rel (%p429) target = $region56
        $region55: #{transformer_forward.14} parent=47 // pred_region
          _
        $region56: #{transformer_forward.14} parent=47 // pred_fallthru
          _
      $region48: #{transformer_forward.14} parent=5 // pred_fallthru
        _
      %p432 = scmp.le.s32.totalorder 2, %s14
      // Predicated region
      $region57: #{transformer_forward.14} parent=5 // pred_check
        %p433 = pneg %p432
      $region58: #{transformer_forward.14} parent=5 // pred_check_branch
        %435 = sbr.rel (%p433) target = $region60
      $region59: #{transformer_forward.14} parent=5 // pred_region
        %s436 = ssub.s32 %s14, 2
        // Predicated region
        $region61: #{transformer_forward.14} parent=59 // pred_check
          %p437 = pneg %p195
        $region62: #{transformer_forward.14} parent=59 // pred_check_branch
          %439 = sbr.rel (%p437) target = $region64
        $region63: #{transformer_forward.14} parent=59 // pred_region
          %p440 = scmp.lt.s32.totalorder %s20, 1
          %s441 = scalar_select %p440, %s20, 1
          %s442 = smul.addr %s441, 8
          %s443 = scalar_lea.vmem %s7, %s442
        $region64: #{transformer_forward.14} parent=59 // pred_fallthru
          _
      $region60: #{transformer_forward.14} parent=5 // pred_fallthru
        _
    $region6: #{transformer_forward.14} parent=1 // loop_footer
      %s18 = sadd.s32 1, %s14
    $region7: #{transformer_forward.14} parent=1 // loop_footer_branch
      %13 = sbr.rel target = $region3
    $region8: #{transformer_forward.14} parent=1 // loop_exit
      _
    %444 = vsyncpa [#allocation3], 1
    %s445 = scalar_lea.sflag [#allocation3], 1
    %446 = vsyncpa %s445, 1

// kernel: transformer_forward.12
$region0: #{transformer_forward.12}
  #allocation0 [shape = 'u32[]', space=smem, size = 0x4, offset = 0x4, fixed_abs, tag = 'smem constant byte address 0x4 - core index']
  #allocation1 [shape = 'u32[72,128]{1,0:T(1,128)}', space=vmem, size = 0x9000, scoped, tag = 'internal scratch']
  %s0 = inlined_call_operand.vmem [shape: f32[2,8,32], index: 0, kind: input, shape index: {}]
  %s1 = inlined_call_operand.vmem [shape: bf16[32,64], index: 1, kind: input, shape index: {}]
  %s2 = inlined_call_operand.vmem [shape: f32[1,64], index: 2, kind: input, shape index: {}]
  %s3 = inlined_call_operand.vmem [shape: bf16[64,32], index: 3, kind: input, shape index: {}]
  %s4 = inlined_call_operand.vmem [shape: f32[1,32], index: 4, kind: input, shape index: {}]
  %s5 = inlined_call_operand.vmem [shape: f32[1,32], index: 5, kind: input, shape index: {}]
  %s6 = inlined_call_operand.vmem [shape: f32[1,32], index: 6, kind: input, shape index: {}]
  %s7 = inlined_call_operand.vmem [shape: f32[2,8,32], index: 7, kind: output, shape index: {}]
  %s8 = sld [smem:[#allocation0]]
  $region61: #{transformer_forward.12} parent=0
    _
  %s10 = ssub.s32 1, %s8
  %s11 = scalar_select 0, %s10, %s8
  loop: start=0, step=1, limit=4
  $region2: #{transformer_forward.12} parent=0 // loop_pre_header
    _
  $region3: #{transformer_forward.12} parent=0 // loop_header
    %s13 = sphi 0, %s17
    %p14 = scmp.ge.s32.totalorder %s13, 4
    %s23 = sphi 0, %s25
    %s26 = sphi 0, %s23
    %s27 = sphi 0, %s26
    %s43 = sphi 0, %s27
    %s47 = sphi 0, %s47
    %s49 = sphi 0, %s47
    %s50 = sphi 0, %s49
    %s64 = sphi 0, %s50
    %s68 = sphi 0, %s68
    %s70 = sphi 0, %s68
    %s71 = sphi 0, %s70
    %s85 = sphi 0, %s71
    %s89 = sphi 0, %s89
    %s91 = sphi 0, %s89
    %s92 = sphi 0, %s91
    %s106 = sphi 0, %s92
    %s110 = sphi 0, %s110
    %s112 = sphi 0, %s110
    %s113 = sphi 0, %s112
    %s127 = sphi 0, %s113
    %s131 = sphi 0, %s131
    %s133 = sphi 0, %s131
    %s134 = sphi 0, %s133
    %s148 = sphi 0, %s134
    %s152 = sphi 0, %s152
    %s154 = sphi 0, %s152
    %s155 = sphi 0, %s154
    %s169 = sphi 0, %s155
    %s175 = sphi 0, %s177
    %s178 = sphi 0, %s175
    %s179 = sphi 0, %s178
    %s195 = sphi 0, %s179
  $region4: #{transformer_forward.12} parent=0 // loop_header_branch
    %16 = sbr.rel (%p14) target = $region8
  $region5: #{transformer_forward.12} parent=0 // loop_body
    %s18 = ssub.s32 %s13, 1
    %s19 = ssub.s32 %s13, 2
    %s20 = sadd.s32 %s13, 1
    %s21 = ssub.s32 %s13, %s20
    %p22 = scmp.eq.s32.totalorder %s21, 0
    %s24 = sadd.s32 %s23, 1
    %s25 = scalar_select %p22, %s23, %s24
    %p28 = pneg %p22
    %p29 = scmp.eq.s32.totalorder %s13, 1
    %p30 = por %p28, %p29
    %p31 = scmp.ne.s32.totalorder %s23, %s26
    %p32 = scmp.eq.s32.totalorder %s13, 0
    %p33 = por %p31, %p32
    %p34 = scmp.ne.s32.totalorder %s23, %s26
    %p35 = scmp.eq.s32.totalorder %s18, 1
    %p36 = por %p34, %p35
    %p37 = scmp.ne.s32.totalorder %s26, %s27
    %p38 = scmp.eq.s32.totalorder %s18, 0
    %p39 = por %p37, %p38
    %p40 = scmp.ne.s32.totalorder %s26, %s27
    %p41 = scmp.eq.s32.totalorder %s19, 1
    %p42 = por %p40, %p41
    %p44 = scmp.ne.s32.totalorder %s27, %s43
    %p45 = scmp.eq.s32.totalorder %s19, 0
    %p46 = por %p44, %p45
    %s48 = sadd.s32 %s47, 1
    %p51 = scmp.eq.s32.totalorder %s13, 1
    %p52 = scmp.ne.s32.totalorder %s47, %s49
    %p53 = scmp.eq.s32.totalorder %s13, 0
    %p54 = por %p52, %p53
    %p55 = scmp.ne.s32.totalorder %s47, %s49
    %p56 = scmp.eq.s32.totalorder %s18, 1
    %p57 = por %p55, %p56
    %p58 = scmp.ne.s32.totalorder %s49, %s50
    %p59 = scmp.eq.s32.totalorder %s18, 0
    %p60 = por %p58, %p59
    %p61 = scmp.ne.s32.totalorder %s49, %s50
    %p62 = scmp.eq.s32.totalorder %s19, 1
    %p63 = por %p61, %p62
    %p65 = scmp.ne.s32.totalorder %s50, %s64
    %p66 = scmp.eq.s32.totalorder %s19, 0
    %p67 = por %p65, %p66
    %s69 = sadd.s32 %s68, 1
    %p72 = scmp.eq.s32.totalorder %s13, 1
    %p73 = scmp.ne.s32.totalorder %s68, %s70
    %p74 = scmp.eq.s32.totalorder %s13, 0
    %p75 = por %p73, %p74
    %p76 = scmp.ne.s32.totalorder %s68, %s70
    %p77 = scmp.eq.s32.totalorder %s18, 1
    %p78 = por %p76, %p77
    %p79 = scmp.ne.s32.totalorder %s70, %s71
    %p80 = scmp.eq.s32.totalorder %s18, 0
    %p81 = por %p79, %p80
    %p82 = scmp.ne.s32.totalorder %s70, %s71
    %p83 = scmp.eq.s32.totalorder %s19, 1
    %p84 = por %p82, %p83
    %p86 = scmp.ne.s32.totalorder %s71, %s85
    %p87 = scmp.eq.s32.totalorder %s19, 0
    %p88 = por %p86, %p87
    %s90 = sadd.s32 %s89, 1
    %p93 = scmp.eq.s32.totalorder %s13, 1
    %p94 = scmp.ne.s32.totalorder %s89, %s91
    %p95 = scmp.eq.s32.totalorder %s13, 0
    %p96 = por %p94, %p95
    %p97 = scmp.ne.s32.totalorder %s89, %s91
    %p98 = scmp.eq.s32.totalorder %s18, 1
    %p99 = por %p97, %p98
    %p100 = scmp.ne.s32.totalorder %s91, %s92
    %p101 = scmp.eq.s32.totalorder %s18, 0
    %p102 = por %p100, %p101
    %p103 = scmp.ne.s32.totalorder %s91, %s92
    %p104 = scmp.eq.s32.totalorder %s19, 1
    %p105 = por %p103, %p104
    %p107 = scmp.ne.s32.totalorder %s92, %s106
    %p108 = scmp.eq.s32.totalorder %s19, 0
    %p109 = por %p107, %p108
    %s111 = sadd.s32 %s110, 1
    %p114 = scmp.eq.s32.totalorder %s13, 1
    %p115 = scmp.ne.s32.totalorder %s110, %s112
    %p116 = scmp.eq.s32.totalorder %s13, 0
    %p117 = por %p115, %p116
    %p118 = scmp.ne.s32.totalorder %s110, %s112
    %p119 = scmp.eq.s32.totalorder %s18, 1
    %p120 = por %p118, %p119
    %p121 = scmp.ne.s32.totalorder %s112, %s113
    %p122 = scmp.eq.s32.totalorder %s18, 0
    %p123 = por %p121, %p122
    %p124 = scmp.ne.s32.totalorder %s112, %s113
    %p125 = scmp.eq.s32.totalorder %s19, 1
    %p126 = por %p124, %p125
    %p128 = scmp.ne.s32.totalorder %s113, %s127
    %p129 = scmp.eq.s32.totalorder %s19, 0
    %p130 = por %p128, %p129
    %s132 = sadd.s32 %s131, 1
    %p135 = scmp.eq.s32.totalorder %s13, 1
    %p136 = scmp.ne.s32.totalorder %s131, %s133
    %p137 = scmp.eq.s32.totalorder %s13, 0
    %p138 = por %p136, %p137
    %p139 = scmp.ne.s32.totalorder %s131, %s133
    %p140 = scmp.eq.s32.totalorder %s18, 1
    %p141 = por %p139, %p140
    %p142 = scmp.ne.s32.totalorder %s133, %s134
    %p143 = scmp.eq.s32.totalorder %s18, 0
    %p144 = por %p142, %p143
    %p145 = scmp.ne.s32.totalorder %s133, %s134
    %p146 = scmp.eq.s32.totalorder %s19, 1
    %p147 = por %p145, %p146
    %p149 = scmp.ne.s32.totalorder %s134, %s148
    %p150 = scmp.eq.s32.totalorder %s19, 0
    %p151 = por %p149, %p150
    %s153 = sadd.s32 %s152, 1
    %p156 = scmp.eq.s32.totalorder %s13, 1
    %p157 = scmp.ne.s32.totalorder %s152, %s154
    %p158 = scmp.eq.s32.totalorder %s13, 0
    %p159 = por %p157, %p158
    %p160 = scmp.ne.s32.totalorder %s152, %s154
    %p161 = scmp.eq.s32.totalorder %s18, 1
    %p162 = por %p160, %p161
    %p163 = scmp.ne.s32.totalorder %s154, %s155
    %p164 = scmp.eq.s32.totalorder %s18, 0
    %p165 = por %p163, %p164
    %p166 = scmp.ne.s32.totalorder %s154, %s155
    %p167 = scmp.eq.s32.totalorder %s19, 1
    %p168 = por %p166, %p167
    %p170 = scmp.ne.s32.totalorder %s155, %s169
    %p171 = scmp.eq.s32.totalorder %s19, 0
    %p172 = por %p170, %p171
    %s173 = ssub.s32 %s13, %s20
    %p174 = scmp.eq.s32.totalorder %s173, 0
    %s176 = sadd.s32 %s175, 1
    %s177 = scalar_select %p174, %s175, %s176
    %p180 = pneg %p174
    %p181 = scmp.eq.s32.totalorder %s13, 1
    %p182 = por %p180, %p181
    %p183 = scmp.ne.s32.totalorder %s175, %s178
    %p184 = scmp.eq.s32.totalorder %s13, 0
    %p185 = por %p183, %p184
    %p186 = scmp.ne.s32.totalorder %s175, %s178
    %p187 = scmp.eq.s32.totalorder %s18, 1
    %p188 = por %p186, %p187
    %p189 = scmp.ne.s32.totalorder %s178, %s179
    %p190 = scmp.eq.s32.totalorder %s18, 0
    %p191 = por %p189, %p190
    %p192 = scmp.ne.s32.totalorder %s178, %s179
    %p193 = scmp.eq.s32.totalorder %s19, 1
    %p194 = por %p192, %p193
    %p196 = scmp.ne.s32.totalorder %s179, %s195
    %p197 = scmp.eq.s32.totalorder %s19, 0
    %p198 = por %p196, %p197
    %p199 = scmp.le.s32.totalorder 1, %s13
    %p200 = scmp.lt.s32.totalorder %s13, 3
    %p201 = pnand %p199, %p200
    %p202 = pneg %p201
    // Predicated region
    $region9: #{transformer_forward.12} parent=5 // pred_check
      _
    $region10: #{transformer_forward.12} parent=5 // pred_check_branch
      %204 = sbr.rel (%p201) target = $region12
    $region11: #{transformer_forward.12} parent=5 // pred_region
      %s205 = ssub.s32 %s13, 1
      // Predicated region
      $region13: #{transformer_forward.12} parent=11 // pred_check
        %p206 = pneg %p60
      $region14: #{transformer_forward.12} parent=11 // pred_check_branch
        %208 = sbr.rel (%p206) target = $region16
      $region15: #{transformer_forward.12} parent=11 // pred_region
        _
      $region16: #{transformer_forward.12} parent=11 // pred_fallthru
        _
      // Predicated region
      $region17: #{transformer_forward.12} parent=11 // pred_check
        %p209 = pneg %p81
      $region18: #{transformer_forward.12} parent=11 // pred_check_branch
        %211 = sbr.rel (%p209) target = $region20
      $region19: #{transformer_forward.12} parent=11 // pred_region
        _
      $region20: #{transformer_forward.12} parent=11 // pred_fallthru
        _
      // Predicated region
      $region21: #{transformer_forward.12} parent=11 // pred_check
        %p212 = pneg %p102
      $region22: #{transformer_forward.12} parent=11 // pred_check_branch
        %214 = sbr.rel (%p212) target = $region24
      $region23: #{transformer_forward.12} parent=11 // pred_region
        _
      $region24: #{transformer_forward.12} parent=11 // pred_fallthru
        _
      // Predicated region
      $region25: #{transformer_forward.12} parent=11 // pred_check
        %p215 = pneg %p123
      $region26: #{transformer_forward.12} parent=11 // pred_check_branch
        %217 = sbr.rel (%p215) target = $region28
      $region27: #{transformer_forward.12} parent=11 // pred_region
        _
      $region28: #{transformer_forward.12} parent=11 // pred_fallthru
        _
      // Predicated region
      $region29: #{transformer_forward.12} parent=11 // pred_check
        %p218 = pneg %p144
      $region30: #{transformer_forward.12} parent=11 // pred_check_branch
        %220 = sbr.rel (%p218) target = $region32
      $region31: #{transformer_forward.12} parent=11 // pred_region
        _
      $region32: #{transformer_forward.12} parent=11 // pred_fallthru
        _
      // Predicated region
      $region33: #{transformer_forward.12} parent=11 // pred_check
        %p221 = pneg %p165
      $region34: #{transformer_forward.12} parent=11 // pred_check_branch
        %223 = sbr.rel (%p221) target = $region36
      $region35: #{transformer_forward.12} parent=11 // pred_region
        _
      $region36: #{transformer_forward.12} parent=11 // pred_fallthru
        _
    $region12: #{transformer_forward.12} parent=5 // pred_fallthru
      _
    %p224 = scmp.lt.s32.totalorder %s13, 2
    // Predicated region
    $region37: #{transformer_forward.12} parent=5 // pred_check
      %p225 = pneg %p224
    $region38: #{transformer_forward.12} parent=5 // pred_check_branch
      %227 = sbr.rel (%p225) target = $region40
    $region39: #{transformer_forward.12} parent=5 // pred_region
      // Predicated region
      $region41: #{transformer_forward.12} parent=39 // pred_check
        %p228 = pneg %p33
      $region42: #{transformer_forward.12} parent=39 // pred_check_branch
        %230 = sbr.rel (%p228) target = $region44
      $region43: #{transformer_forward.12} parent=39 // pred_region
        %p231 = scmp.lt.s32.totalorder %s13, 1
        %s232 = scalar_select %p231, %s13, 1
        %s233 = smul.addr %s232, 8
        %s234 = scalar_lea.vmem %s0, %s233
      $region44: #{transformer_forward.12} parent=39 // pred_fallthru
        _
    $region40: #{transformer_forward.12} parent=5 // pred_fallthru
      _
    %p235 = scmp.le.s32.totalorder 1, %s13
    %p236 = scmp.lt.s32.totalorder %s13, 3
    %p237 = pnand %p235, %p236
    %p238 = pneg %p237
    // Predicated region
    $region45: #{transformer_forward.12} parent=5 // pred_check
      _
    $region46: #{transformer_forward.12} parent=5 // pred_check_branch
      %240 = sbr.rel (%p237) target = $region48
    $region47: #{transformer_forward.12} parent=5 // pred_region
      %s241 = ssub.s32 %s13, 1
      %p242 = scmp.lt.s32.totalorder %s18, 1
      %s243 = scalar_select %p242, %s18, 1
      %s244 = smul.addr %s243, 8
      %s245 = scalar_lea.vmem %s0, %s244
      %p246 = pneg %p39
      %p247 = pneg %p36
      %p248 = pneg %p60
      %p249 = pneg %p57
      %p250 = pneg %p81
      %p251 = pneg %p78
      %p252 = pneg %p102
      %p253 = pneg %p99
      %p254 = pneg %p123
      %p255 = pneg %p120
      %p256 = pneg %p144
      %p257 = pneg %p141
      %p258 = pneg %p165
      %p259 = pneg %p162
      %p260 = pneg %p191
      %p261 = pneg %p188
      %p262 = scmp.lt.s32.totalorder %s18, 1
      %s263 = scalar_select %p262, %s18, 1
      %s264 = smul.addr %s263, 8
      %s265 = scalar_lea.vmem %s7, %s264
      %p266 = scmp.lt.s32.totalorder %s18, 1
      %s267 = scalar_select %p266, %s18, 1
      %s268 = smul.addr %s267, 8
      %s269 = scalar_lea.vmem %s0, %s268
      %p270 = scmp.lt.s32.totalorder %s18, 1
      %s271 = scalar_select %p270, %s18, 1
      %s272 = smul.addr %s271, 8
      %s273 = scalar_lea.vmem %s7, %s272
      %v275 = vld [vmem:[%s269] sm:$0xff]
      %v276 = vpack.c.bf16 %v275, %v275
      %v277 = vld [vmem:[%s1] sm:$0xf]
      %v278 = vld [vmem:[%s1 + $0x4] sm:$0xf]
      %v279 = vld [vmem:[%s1 + $0x8] sm:$0xf]
      %v280 = vld [vmem:[%s1 + $0xc] sm:$0xf]
      %v281 = vld [vmem:[%s2] sm:$0x1]
      %v283 = vperm.slane %v281, 0
      %v289 = vunpack.c.l.b16 %v277
      %v290 = vunpack.c.l.b16 %v278
      %v291 = vunpack.c.l.b16 %v279
      %v292 = vunpack.c.l.b16 %v280
      %v293 = vpack.c.b16 %v290, %v289
      %v294 = vpack.c.b16 %v292, %v291
      %vm297 = vcmask 261120
      %v299 = vsel %vm297, %v276, 0
      %301 = vmatpush.bf16.msra.mxu0 0
      %302 = vmatpush.bf16.msra.mxu0 0
      %303 = vmatpush.bf16.msra.mxu0 0
      %304 = vmatpush.bf16.msra.mxu0 0
      %305 = vmatpush.bf16.msra.mxu0 0
      %306 = vmatpush.bf16.msra.mxu0 0
      %307 = vmatpush.bf16.msra.mxu0 %v294
      %308 = vmatpush.bf16.msra.mxu0 %v293
      %309 = vmatmul.bf16.gmra.mxu0 %v299
      %v310 = vpop.f32.mrf.mxu0
      %v311 = vadd.f32 %v283, %v310
      %v312 = vpop.f32.mrf.mxu0
      %313 = vdwg.mxu0
      %v314 = vmax.f32 %v311, 0.0
      %v315 = vpack.c.bf16 %v314, %v314
      %v316 = vld [vmem:[%s3] sm:$0xf]
      %v317 = vld [vmem:[%s3 + $0x4] sm:$0xf]
      %v318 = vld [vmem:[%s3 + $0x8] sm:$0xf]
      %v319 = vld [vmem:[%s3 + $0xc] sm:$0xf]
      %v320 = vld [vmem:[%s3 + $0x10] sm:$0xf]
      %v321 = vld [vmem:[%s3 + $0x14] sm:$0xf]
      %v322 = vld [vmem:[%s3 + $0x18] sm:$0xf]
      %v323 = vld [vmem:[%s3 + $0x1c] sm:$0xf]
      %v324 = vld [vmem:[%s4] sm:$0x1]
      %v326 = vperm.slane %v324, 0
      %v336 = vunpack.c.l.b16 %v316
      %v337 = vunpack.c.l.b16 %v317
      %v338 = vunpack.c.l.b16 %v318
      %v339 = vunpack.c.l.b16 %v319
      %v340 = vunpack.c.l.b16 %v320
      %v341 = vunpack.c.l.b16 %v321
      %v342 = vunpack.c.l.b16 %v322
      %v343 = vunpack.c.l.b16 %v323
      %v344 = vpack.c.b16 %v337, %v336
      %v345 = vpack.c.b16 %v339, %v338
      %v346 = vpack.c.b16 %v341, %v340
      %v347 = vpack.c.b16 %v343, %v342
      %vm352 = vcmask 523264
      %v354 = vsel %vm352, %v315, 0
      %356 = vmatpush.bf16.msra.mxu0 0
      %357 = vmatpush.bf16.msra.mxu0 0
      %358 = vmatpush.bf16.msra.mxu0 0
      %359 = vmatpush.bf16.msra.mxu0 0
      %360 = vmatpush.bf16.msra.mxu0 %v347
      %361 = vmatpush.bf16.msra.mxu0 %v346
      %362 = vmatpush.bf16.msra.mxu0 %v345
      %363 = vmatpush.bf16.msra.mxu0 %v344
      %364 = vmatmul.bf16.gmra.mxu0 %v354
      %v365 = vpop.f32.mrf.mxu0
      %v366 = vadd.f32 %v326, %v365
      %v367 = vpop.f32.mrf.mxu0
      %368 = vdwg.mxu0
      %v369 = vadd.f32 %v275, %v366
      %v370 = vsel %vm297, %v369, 0.0
      %371 = vadd.xlane.f32.xlu0 %v370
      %v372 = vpop.xlane.xlu0 %371
      %v373 = vrcp.pop 32.0
      %v374 = vmul.f32 32.0, %v373
      %v375 = vsub.f32 1.0, %v374
      %v376 = vmul.f32 %v373, %v375
      %v377 = vadd.f32 %v373, %v376
      %vm378 = vweird.f32 %v373
      %v379 = vsel %vm378, %v373, %v377
      %v380 = vmul.f32 %v372, %v379
      %v381 = vsub.f32 %v369, %v380
      %v382 = vmul.f32 %v381, %v381
      %v383 = vsel %vm297, %v382, 0.0
      %384 = vadd.xlane.f32.xlu0 %v383
      %v385 = vpop.xlane.xlu0 %384
      %v386 = vmul.f32 %v385, %v379
      %v387 = vadd.f32 %v386, 1e-05
      %v388 = vrsqrt.pop %v387
      %v389 = vmul.f32 %v388, %v387
      %v390 = vmul.f32 %v389, %v388
      %v391 = vmul.f32 0.5, %v390
      %v392 = vsub.f32 1.5, %v391
      %v393 = vmul.f32 %v388, %v392
      %vm394 = vweird.f32 %v387
      %vm395 = vweird.f32 %v388
      %vm396 = vmor %vm394, %vm395
      %v397 = vsel %vm396, %v388, %v393
      %v398 = vmul.f32 %v381, %v397
      %v399 = vld [vmem:[%s5] sm:$0x1]
      %v401 = vperm.slane %v399, 0
      %v403 = vmul.f32 %v398, %v401
      %v404 = vld [vmem:[%s6] sm:$0x1]
      %v406 = vperm.slane %v404, 0
      %v408 = vadd.f32 %v403, %v406
      %409 = vst.msk [vmem:[%s273] sm:$0xff] %vm297, %v408
      %p410 = scmp.lt.s32.totalorder %s18, 1
      %s411 = scalar_select %p410, %s18, 1
      %s412 = smul.addr %s411, 8
      %s413 = scalar_lea.vmem %s7, %s412
      // Predicated region
      $region49: #{transformer_forward.12} parent=47 // pred_check
        %p414 = pneg %p188
      $region50: #{transformer_forward.12} parent=47 // pred_check_branch
        %416 = sbr.rel (%p414) target = $region52
      $region51: #{transformer_forward.12} parent=47 // pred_region
        _
      $region52: #{transformer_forward.12} parent=47 // pred_fallthru
        _
    $region48: #{transformer_forward.12} parent=5 // pred_fallthru
      _
    %p417 = scmp.le.s32.totalorder 2, %s13
    // Predicated region
    $region53: #{transformer_forward.12} parent=5 // pred_check
      %p418 = pneg %p417
    $region54: #{transformer_forward.12} parent=5 // pred_check_branch
      %420 = sbr.rel (%p418) target = $region56
    $region55: #{transformer_forward.12} parent=5 // pred_region
      %s421 = ssub.s32 %s13, 2
      // Predicated region
      $region57: #{transformer_forward.12} parent=55 // pred_check
        %p422 = pneg %p194
      $region58: #{transformer_forward.12} parent=55 // pred_check_branch
        %424 = sbr.rel (%p422) target = $region60
      $region59: #{transformer_forward.12} parent=55 // pred_region
        %p425 = scmp.lt.s32.totalorder %s19, 1
        %s426 = scalar_select %p425, %s19, 1
        %s427 = smul.addr %s426, 8
        %s428 = scalar_lea.vmem %s7, %s427
      $region60: #{transformer_forward.12} parent=55 // pred_fallthru
        _
    $region56: #{transformer_forward.12} parent=5 // pred_fallthru
      _
  $region6: #{transformer_forward.12} parent=0 // loop_footer
    %s17 = sadd.s32 1, %s13
  $region7: #{transformer_forward.12} parent=0 // loop_footer_branch
    %12 = sbr.rel target = $region3
  $region8: #{transformer_forward.12} parent=0 // loop_exit
    _

// kernel: transformer_forward.11
$region0: #{transformer_forward.11}
  #allocation0 [shape = 'u32[]', space=smem, size = 0x4, offset = 0x4, fixed_abs, tag = 'smem constant byte address 0x4 - core index']
  #allocation1 [shape = 'u32[72,128]{1,0:T(1,128)}', space=vmem, size = 0x9000, scoped, tag = 'internal scratch']
  #allocation2 [shape = 'f32[8,32]{1,0:T(8,128)}', space=vmem, size = 0x1000, scoped, tag = 'scratch operand']
  %s0 = inlined_call_operand.vmem [shape: f32[2,8,32], index: 0, kind: input, shape index: {}, may-alias: {0,1}]
  %s1 = inlined_call_operand.vmem [shape: f32[2,8,32], index: 1, kind: input, shape index: {}, may-alias: {0,1}]
  %s2 = inlined_call_operand.vmem [shape: bf16[32,32], index: 2, kind: input, shape index: {}]
  %s3 = inlined_call_operand.vmem [shape: f32[1,32], index: 3, kind: input, shape index: {}]
  %s4 = inlined_call_operand.vmem [shape: bf16[32,64], index: 4, kind: input, shape index: {}]
  %s5 = inlined_call_operand.vmem [shape: f32[1,64], index: 5, kind: input, shape index: {}]
  %s6 = inlined_call_operand.vmem [shape: bf16[32,32], index: 6, kind: input, shape index: {}]
  %s7 = inlined_call_operand.vmem [shape: f32[1,32], index: 7, kind: input, shape index: {}]
  %s8 = inlined_call_operand.vmem [shape: f32[1,32], index: 8, kind: input, shape index: {}]
  %s9 = inlined_call_operand.vmem [shape: f32[1,32], index: 9, kind: input, shape index: {}]
  %s10 = inlined_call_operand.vmem [shape: f32[2,8,32], index: 10, kind: output, shape index: {}]
  %s11 = sld [smem:[#allocation0]]
  $region73: #{transformer_forward.11} parent=0
    _
  %s13 = ssub.s32 1, %s11
  %s14 = scalar_select 0, %s13, %s11
  loop: start=0, step=1, limit=4
  $region2: #{transformer_forward.11} parent=0 // loop_pre_header
    _
  $region3: #{transformer_forward.11} parent=0 // loop_header
    %s16 = sphi 0, %s20
    %p17 = scmp.ge.s32.totalorder %s16, 4
    %s26 = sphi 0, %s28
    %s29 = sphi 0, %s26
    %s30 = sphi 0, %s29
    %s46 = sphi 0, %s30
    %s52 = sphi 0, %s54
    %s55 = sphi 0, %s52
    %s56 = sphi 0, %s55
    %s72 = sphi 0, %s56
    %s76 = sphi 0, %s76
    %s78 = sphi 0, %s76
    %s79 = sphi 0, %s78
    %s93 = sphi 0, %s79
    %s97 = sphi 0, %s97
    %s99 = sphi 0, %s97
    %s100 = sphi 0, %s99
    %s114 = sphi 0, %s100
    %s118 = sphi 0, %s118
    %s120 = sphi 0, %s118
    %s121 = sphi 0, %s120
    %s135 = sphi 0, %s121
    %s139 = sphi 0, %s139
    %s141 = sphi 0, %s139
    %s142 = sphi 0, %s141
    %s156 = sphi 0, %s142
    %s160 = sphi 0, %s160
    %s162 = sphi 0, %s160
    %s163 = sphi 0, %s162
    %s177 = sphi 0, %s163
    %s181 = sphi 0, %s181
    %s183 = sphi 0, %s181
    %s184 = sphi 0, %s183
    %s198 = sphi 0, %s184
    %s202 = sphi 0, %s202
    %s204 = sphi 0, %s202
    %s205 = sphi 0, %s204
    %s219 = sphi 0, %s205
    %s223 = sphi 0, %s223
    %s225 = sphi 0, %s223
    %s226 = sphi 0, %s225
    %s240 = sphi 0, %s226
    %s246 = sphi 0, %s248
    %s249 = sphi 0, %s246
    %s250 = sphi 0, %s249
    %s266 = sphi 0, %s250
  $region4: #{transformer_forward.11} parent=0 // loop_header_branch
    %19 = sbr.rel (%p17) target = $region8
  $region5: #{transformer_forward.11} parent=0 // loop_body
    %s21 = ssub.s32 %s16, 1
    %s22 = ssub.s32 %s16, 2
    %s23 = sadd.s32 %s16, 1
    %s24 = ssub.s32 %s16, %s23
    %p25 = scmp.eq.s32.totalorder %s24, 0
    %s27 = sadd.s32 %s26, 1
    %s28 = scalar_select %p25, %s26, %s27
    %p31 = pneg %p25
    %p32 = scmp.eq.s32.totalorder %s16, 1
    %p33 = por %p31, %p32
    %p34 = scmp.ne.s32.totalorder %s26, %s29
    %p35 = scmp.eq.s32.totalorder %s16, 0
    %p36 = por %p34, %p35
    %p37 = scmp.ne.s32.totalorder %s26, %s29
    %p38 = scmp.eq.s32.totalorder %s21, 1
    %p39 = por %p37, %p38
    %p40 = scmp.ne.s32.totalorder %s29, %s30
    %p41 = scmp.eq.s32.totalorder %s21, 0
    %p42 = por %p40, %p41
    %p43 = scmp.ne.s32.totalorder %s29, %s30
    %p44 = scmp.eq.s32.totalorder %s22, 1
    %p45 = por %p43, %p44
    %p47 = scmp.ne.s32.totalorder %s30, %s46
    %p48 = scmp.eq.s32.totalorder %s22, 0
    %p49 = por %p47, %p48
    %s50 = ssub.s32 %s16, %s23
    %p51 = scmp.eq.s32.totalorder %s50, 0
    %s53 = sadd.s32 %s52, 1
    %s54 = scalar_select %p51, %s52, %s53
    %p57 = pneg %p51
    %p58 = scmp.eq.s32.totalorder %s16, 1
    %p59 = por %p57, %p58
    %p60 = scmp.ne.s32.totalorder %s52, %s55
    %p61 = scmp.eq.s32.totalorder %s16, 0
    %p62 = por %p60, %p61
    %p63 = scmp.ne.s32.totalorder %s52, %s55
    %p64 = scmp.eq.s32.totalorder %s21, 1
    %p65 = por %p63, %p64
    %p66 = scmp.ne.s32.totalorder %s55, %s56
    %p67 = scmp.eq.s32.totalorder %s21, 0
    %p68 = por %p66, %p67
    %p69 = scmp.ne.s32.totalorder %s55, %s56
    %p70 = scmp.eq.s32.totalorder %s22, 1
    %p71 = por %p69, %p70
    %p73 = scmp.ne.s32.totalorder %s56, %s72
    %p74 = scmp.eq.s32.totalorder %s22, 0
    %p75 = por %p73, %p74
    %s77 = sadd.s32 %s76, 1
    %p80 = scmp.eq.s32.totalorder %s16, 1
    %p81 = scmp.ne.s32.totalorder %s76, %s78
    %p82 = scmp.eq.s32.totalorder %s16, 0
    %p83 = por %p81, %p82
    %p84 = scmp.ne.s32.totalorder %s76, %s78
    %p85 = scmp.eq.s32.totalorder %s21, 1
    %p86 = por %p84, %p85
    %p87 = scmp.ne.s32.totalorder %s78, %s79
    %p88 = scmp.eq.s32.totalorder %s21, 0
    %p89 = por %p87, %p88
    %p90 = scmp.ne.s32.totalorder %s78, %s79
    %p91 = scmp.eq.s32.totalorder %s22, 1
    %p92 = por %p90, %p91
    %p94 = scmp.ne.s32.totalorder %s79, %s93
    %p95 = scmp.eq.s32.totalorder %s22, 0
    %p96 = por %p94, %p95
    %s98 = sadd.s32 %s97, 1
    %p101 = scmp.eq.s32.totalorder %s16, 1
    %p102 = scmp.ne.s32.totalorder %s97, %s99
    %p103 = scmp.eq.s32.totalorder %s16, 0
    %p104 = por %p102, %p103
    %p105 = scmp.ne.s32.totalorder %s97, %s99
    %p106 = scmp.eq.s32.totalorder %s21, 1
    %p107 = por %p105, %p106
    %p108 = scmp.ne.s32.totalorder %s99, %s100
    %p109 = scmp.eq.s32.totalorder %s21, 0
    %p110 = por %p108, %p109
    %p111 = scmp.ne.s32.totalorder %s99, %s100
    %p112 = scmp.eq.s32.totalorder %s22, 1
    %p113 = por %p111, %p112
    %p115 = scmp.ne.s32.totalorder %s100, %s114
    %p116 = scmp.eq.s32.totalorder %s22, 0
    %p117 = por %p115, %p116
    %s119 = sadd.s32 %s118, 1
    %p122 = scmp.eq.s32.totalorder %s16, 1
    %p123 = scmp.ne.s32.totalorder %s118, %s120
    %p124 = scmp.eq.s32.totalorder %s16, 0
    %p125 = por %p123, %p124
    %p126 = scmp.ne.s32.totalorder %s118, %s120
    %p127 = scmp.eq.s32.totalorder %s21, 1
    %p128 = por %p126, %p127
    %p129 = scmp.ne.s32.totalorder %s120, %s121
    %p130 = scmp.eq.s32.totalorder %s21, 0
    %p131 = por %p129, %p130
    %p132 = scmp.ne.s32.totalorder %s120, %s121
    %p133 = scmp.eq.s32.totalorder %s22, 1
    %p134 = por %p132, %p133
    %p136 = scmp.ne.s32.totalorder %s121, %s135
    %p137 = scmp.eq.s32.totalorder %s22, 0
    %p138 = por %p136, %p137
    %s140 = sadd.s32 %s139, 1
    %p143 = scmp.eq.s32.totalorder %s16, 1
    %p144 = scmp.ne.s32.totalorder %s139, %s141
    %p145 = scmp.eq.s32.totalorder %s16, 0
    %p146 = por %p144, %p145
    %p147 = scmp.ne.s32.totalorder %s139, %s141
    %p148 = scmp.eq.s32.totalorder %s21, 1
    %p149 = por %p147, %p148
    %p150 = scmp.ne.s32.totalorder %s141, %s142
    %p151 = scmp.eq.s32.totalorder %s21, 0
    %p152 = por %p150, %p151
    %p153 = scmp.ne.s32.totalorder %s141, %s142
    %p154 = scmp.eq.s32.totalorder %s22, 1
    %p155 = por %p153, %p154
    %p157 = scmp.ne.s32.totalorder %s142, %s156
    %p158 = scmp.eq.s32.totalorder %s22, 0
    %p159 = por %p157, %p158
    %s161 = sadd.s32 %s160, 1
    %p164 = scmp.eq.s32.totalorder %s16, 1
    %p165 = scmp.ne.s32.totalorder %s160, %s162
    %p166 = scmp.eq.s32.totalorder %s16, 0
    %p167 = por %p165, %p166
    %p168 = scmp.ne.s32.totalorder %s160, %s162
    %p169 = scmp.eq.s32.totalorder %s21, 1
    %p170 = por %p168, %p169
    %p171 = scmp.ne.s32.totalorder %s162, %s163
    %p172 = scmp.eq.s32.totalorder %s21, 0
    %p173 = por %p171, %p172
    %p174 = scmp.ne.s32.totalorder %s162, %s163
    %p175 = scmp.eq.s32.totalorder %s22, 1
    %p176 = por %p174, %p175
    %p178 = scmp.ne.s32.totalorder %s163, %s177
    %p179 = scmp.eq.s32.totalorder %s22, 0
    %p180 = por %p178, %p179
    %s182 = sadd.s32 %s181, 1
    %p185 = scmp.eq.s32.totalorder %s16, 1
    %p186 = scmp.ne.s32.totalorder %s181, %s183
    %p187 = scmp.eq.s32.totalorder %s16, 0
    %p188 = por %p186, %p187
    %p189 = scmp.ne.s32.totalorder %s181, %s183
    %p190 = scmp.eq.s32.totalorder %s21, 1
    %p191 = por %p189, %p190
    %p192 = scmp.ne.s32.totalorder %s183, %s184
    %p193 = scmp.eq.s32.totalorder %s21, 0
    %p194 = por %p192, %p193
    %p195 = scmp.ne.s32.totalorder %s183, %s184
    %p196 = scmp.eq.s32.totalorder %s22, 1
    %p197 = por %p195, %p196
    %p199 = scmp.ne.s32.totalorder %s184, %s198
    %p200 = scmp.eq.s32.totalorder %s22, 0
    %p201 = por %p199, %p200
    %s203 = sadd.s32 %s202, 1
    %p206 = scmp.eq.s32.totalorder %s16, 1
    %p207 = scmp.ne.s32.totalorder %s202, %s204
    %p208 = scmp.eq.s32.totalorder %s16, 0
    %p209 = por %p207, %p208
    %p210 = scmp.ne.s32.totalorder %s202, %s204
    %p211 = scmp.eq.s32.totalorder %s21, 1
    %p212 = por %p210, %p211
    %p213 = scmp.ne.s32.totalorder %s204, %s205
    %p214 = scmp.eq.s32.totalorder %s21, 0
    %p215 = por %p213, %p214
    %p216 = scmp.ne.s32.totalorder %s204, %s205
    %p217 = scmp.eq.s32.totalorder %s22, 1
    %p218 = por %p216, %p217
    %p220 = scmp.ne.s32.totalorder %s205, %s219
    %p221 = scmp.eq.s32.totalorder %s22, 0
    %p222 = por %p220, %p221
    %s224 = sadd.s32 %s223, 1
    %p227 = scmp.eq.s32.totalorder %s16, 1
    %p228 = scmp.ne.s32.totalorder %s223, %s225
    %p229 = scmp.eq.s32.totalorder %s16, 0
    %p230 = por %p228, %p229
    %p231 = scmp.ne.s32.totalorder %s223, %s225
    %p232 = scmp.eq.s32.totalorder %s21, 1
    %p233 = por %p231, %p232
    %p234 = scmp.ne.s32.totalorder %s225, %s226
    %p235 = scmp.eq.s32.totalorder %s21, 0
    %p236 = por %p234, %p235
    %p237 = scmp.ne.s32.totalorder %s225, %s226
    %p238 = scmp.eq.s32.totalorder %s22, 1
    %p239 = por %p237, %p238
    %p241 = scmp.ne.s32.totalorder %s226, %s240
    %p242 = scmp.eq.s32.totalorder %s22, 0
    %p243 = por %p241, %p242
    %s244 = ssub.s32 %s16, %s23
    %p245 = scmp.eq.s32.totalorder %s244, 0
    %s247 = sadd.s32 %s246, 1
    %s248 = scalar_select %p245, %s246, %s247
    %p251 = pneg %p245
    %p252 = scmp.eq.s32.totalorder %s16, 1
    %p253 = por %p251, %p252
    %p254 = scmp.ne.s32.totalorder %s246, %s249
    %p255 = scmp.eq.s32.totalorder %s16, 0
    %p256 = por %p254, %p255
    %p257 = scmp.ne.s32.totalorder %s246, %s249
    %p258 = scmp.eq.s32.totalorder %s21, 1
    %p259 = por %p257, %p258
    %p260 = scmp.ne.s32.totalorder %s249, %s250
    %p261 = scmp.eq.s32.totalorder %s21, 0
    %p262 = por %p260, %p261
    %p263 = scmp.ne.s32.totalorder %s249, %s250
    %p264 = scmp.eq.s32.totalorder %s22, 1
    %p265 = por %p263, %p264
    %p267 = scmp.ne.s32.totalorder %s250, %s266
    %p268 = scmp.eq.s32.totalorder %s22, 0
    %p269 = por %p267, %p268
    %p270 = scmp.le.s32.totalorder 1, %s16
    %p271 = scmp.lt.s32.totalorder %s16, 3
    %p272 = pnand %p270, %p271
    %p273 = pneg %p272
    // Predicated region
    $region9: #{transformer_forward.11} parent=5 // pred_check
      _
    $region10: #{transformer_forward.11} parent=5 // pred_check_branch
      %275 = sbr.rel (%p272) target = $region12
    $region11: #{transformer_forward.11} parent=5 // pred_region
      %s276 = ssub.s32 %s16, 1
      // Predicated region
      $region13: #{transformer_forward.11} parent=11 // pred_check
        %p277 = pneg %p89
      $region14: #{transformer_forward.11} parent=11 // pred_check_branch
        %279 = sbr.rel (%p277) target = $region16
      $region15: #{transformer_forward.11} parent=11 // pred_region
        _
      $region16: #{transformer_forward.11} parent=11 // pred_fallthru
        _
      // Predicated region
      $region17: #{transformer_forward.11} parent=11 // pred_check
        %p280 = pneg %p110
      $region18: #{transformer_forward.11} parent=11 // pred_check_branch
        %282 = sbr.rel (%p280) target = $region20
      $region19: #{transformer_forward.11} parent=11 // pred_region
        _
      $region20: #{transformer_forward.11} parent=11 // pred_fallthru
        _
      // Predicated region
      $region21: #{transformer_forward.11} parent=11 // pred_check
        %p283 = pneg %p131
      $region22: #{transformer_forward.11} parent=11 // pred_check_branch
        %285 = sbr.rel (%p283) target = $region24
      $region23: #{transformer_forward.11} parent=11 // pred_region
        _
      $region24: #{transformer_forward.11} parent=11 // pred_fallthru
        _
      // Predicated region
      $region25: #{transformer_forward.11} parent=11 // pred_check
        %p286 = pneg %p152
      $region26: #{transformer_forward.11} parent=11 // pred_check_branch
        %288 = sbr.rel (%p286) target = $region28
      $region27: #{transformer_forward.11} parent=11 // pred_region
        _
      $region28: #{transformer_forward.11} parent=11 // pred_fallthru
        _
      // Predicated region
      $region29: #{transformer_forward.11} parent=11 // pred_check
        %p289 = pneg %p173
      $region30: #{transformer_forward.11} parent=11 // pred_check_branch
        %291 = sbr.rel (%p289) target = $region32
      $region31: #{transformer_forward.11} parent=11 // pred_region
        _
      $region32: #{transformer_forward.11} parent=11 // pred_fallthru
        _
      // Predicated region
      $region33: #{transformer_forward.11} parent=11 // pred_check
        %p292 = pneg %p194
      $region34: #{transformer_forward.11} parent=11 // pred_check_branch
        %294 = sbr.rel (%p292) target = $region36
      $region35: #{transformer_forward.11} parent=11 // pred_region
        _
      $region36: #{transformer_forward.11} parent=11 // pred_fallthru
        _
      // Predicated region
      $region37: #{transformer_forward.11} parent=11 // pred_check
        %p295 = pneg %p215
      $region38: #{transformer_forward.11} parent=11 // pred_check_branch
        %297 = sbr.rel (%p295) target = $region40
      $region39: #{transformer_forward.11} parent=11 // pred_region
        _
      $region40: #{transformer_forward.11} parent=11 // pred_fallthru
        _
      // Predicated region
      $region41: #{transformer_forward.11} parent=11 // pred_check
        %p298 = pneg %p236
      $region42: #{transformer_forward.11} parent=11 // pred_check_branch
        %300 = sbr.rel (%p298) target = $region44
      $region43: #{transformer_forward.11} parent=11 // pred_region
        _
      $region44: #{transformer_forward.11} parent=11 // pred_fallthru
        _
    $region12: #{transformer_forward.11} parent=5 // pred_fallthru
      _
    %p301 = scmp.lt.s32.totalorder %s16, 2
    // Predicated region
    $region45: #{transformer_forward.11} parent=5 // pred_check
      %p302 = pneg %p301
    $region46: #{transformer_forward.11} parent=5 // pred_check_branch
      %304 = sbr.rel (%p302) target = $region48
    $region47: #{transformer_forward.11} parent=5 // pred_region
      // Predicated region
      $region49: #{transformer_forward.11} parent=47 // pred_check
        %p305 = pneg %p36
      $region50: #{transformer_forward.11} parent=47 // pred_check_branch
        %307 = sbr.rel (%p305) target = $region52
      $region51: #{transformer_forward.11} parent=47 // pred_region
        %p308 = scmp.lt.s32.totalorder %s16, 1
        %s309 = scalar_select %p308, %s16, 1
        %s310 = smul.addr %s309, 8
        %s311 = scalar_lea.vmem %s0, %s310
      $region52: #{transformer_forward.11} parent=47 // pred_fallthru
        _
      // Predicated region
      $region53: #{transformer_forward.11} parent=47 // pred_check
        %p312 = pneg %p62
      $region54: #{transformer_forward.11} parent=47 // pred_check_branch
        %314 = sbr.rel (%p312) target = $region56
      $region55: #{transformer_forward.11} parent=47 // pred_region
        %p315 = scmp.lt.s32.totalorder %s16, 1
        %s316 = scalar_select %p315, %s16, 1
        %s317 = smul.addr %s316, 8
        %s318 = scalar_lea.vmem %s1, %s317
      $region56: #{transformer_forward.11} parent=47 // pred_fallthru
        _
    $region48: #{transformer_forward.11} parent=5 // pred_fallthru
      _
    %p319 = scmp.le.s32.totalorder 1, %s16
    %p320 = scmp.lt.s32.totalorder %s16, 3
    %p321 = pnand %p319, %p320
    %p322 = pneg %p321
    // Predicated region
    $region57: #{transformer_forward.11} parent=5 // pred_check
      _
    $region58: #{transformer_forward.11} parent=5 // pred_check_branch
      %324 = sbr.rel (%p321) target = $region60
    $region59: #{transformer_forward.11} parent=5 // pred_region
      %s325 = ssub.s32 %s16, 1
      %p326 = scmp.lt.s32.totalorder %s21, 1
      %s327 = scalar_select %p326, %s21, 1
      %s328 = smul.addr %s327, 8
      %s329 = scalar_lea.vmem %s0, %s328
      %p330 = pneg %p42
      %p331 = pneg %p39
      %p332 = scmp.lt.s32.totalorder %s21, 1
      %s333 = scalar_select %p332, %s21, 1
      %s334 = smul.addr %s333, 8
      %s335 = scalar_lea.vmem %s1, %s334
      %p336 = pneg %p68
      %p337 = pneg %p65
      %p338 = pneg %p89
      %p339 = pneg %p86
      %p340 = pneg %p110
      %p341 = pneg %p107
      %p342 = pneg %p131
      %p343 = pneg %p128
      %p344 = pneg %p152
      %p345 = pneg %p149
      %p346 = pneg %p173
      %p347 = pneg %p170
      %p348 = pneg %p194
      %p349 = pneg %p191
      %p350 = pneg %p215
      %p351 = pneg %p212
      %p352 = pneg %p236
      %p353 = pneg %p233
      %p354 = pneg %p262
      %p355 = pneg %p259
      %p356 = scmp.lt.s32.totalorder %s21, 1
      %s357 = scalar_select %p356, %s21, 1
      %s358 = smul.addr %s357, 8
      %s359 = scalar_lea.vmem %s10, %s358
      %p360 = scmp.lt.s32.totalorder %s21, 1
      %s361 = scalar_select %p360, %s21, 1
      %s362 = smul.addr %s361, 8
      %s363 = scalar_lea.vmem %s0, %s362
      %p364 = scmp.lt.s32.totalorder %s21, 1
      %s365 = scalar_select %p364, %s21, 1
      %s366 = smul.addr %s365, 8
      %s367 = scalar_lea.vmem %s1, %s366
      %p368 = scmp.lt.s32.totalorder %s21, 1
      %s369 = scalar_select %p368, %s21, 1
      %s370 = smul.addr %s369, 8
      %s371 = scalar_lea.vmem %s10, %s370
      %v373 = vld [vmem:[%s363] sm:$0xff]
      %v374 = vld [vmem:[%s367] sm:$0xff]
      %v375 = vpack.c.bf16 %v373, %v373
      %v376 = vld [vmem:[%s2] sm:$0xf]
      %v377 = vld [vmem:[%s2 + $0x4] sm:$0xf]
      %v378 = vld [vmem:[%s2 + $0x8] sm:$0xf]
      %v379 = vld [vmem:[%s2 + $0xc] sm:$0xf]
      %v380 = vld [vmem:[%s3] sm:$0x1]
      %v382 = vperm.slane %v380, 0
      %v388 = vunpack.c.l.b16 %v376
      %v389 = vunpack.c.l.b16 %v377
      %v390 = vunpack.c.l.b16 %v378
      %v391 = vunpack.c.l.b16 %v379
      %v392 = vpack.c.b16 %v389, %v388
      %v393 = vpack.c.b16 %v391, %v390
      %vm396 = vcmask 261120
      %v398 = vsel %vm396, %v375, 0
      %400 = vmatpush.bf16.msra.mxu0 0
      %401 = vmatpush.bf16.msra.mxu0 0
      %402 = vmatpush.bf16.msra.mxu0 0
      %403 = vmatpush.bf16.msra.mxu0 0
      %404 = vmatpush.bf16.msra.mxu0 0
      %405 = vmatpush.bf16.msra.mxu0 0
      %406 = vmatpush.bf16.msra.mxu0 %v393
      %407 = vmatpush.bf16.msra.mxu0 %v392
      %408 = vmatmul.bf16.gmra.mxu0 %v398
      %v409 = vpop.f32.mrf.mxu0
      %v410 = vadd.f32 %v382, %v409
      %v411 = vpop.f32.mrf.mxu0
      %412 = vdwg.mxu0
      %v413 = vpack.c.bf16 %v374, %v374
      %v414 = vld [vmem:[%s4] sm:$0xf]
      %v415 = vld [vmem:[%s4 + $0x4] sm:$0xf]
      %v416 = vld [vmem:[%s4 + $0x8] sm:$0xf]
      %v417 = vld [vmem:[%s4 + $0xc] sm:$0xf]
      %v418 = vld [vmem:[%s5] sm:$0x1]
      %v420 = vperm.slane %v418, 0
      %v426 = vunpack.c.l.b16 %v414
      %v427 = vunpack.c.l.b16 %v415
      %v428 = vunpack.c.l.b16 %v416
      %v429 = vunpack.c.l.b16 %v417
      %v430 = vpack.c.b16 %v427, %v426
      %v431 = vpack.c.b16 %v429, %v428
      %v435 = vsel %vm396, %v413, 0
      %437 = vmatpush.bf16.msra.mxu0 0
      %438 = vmatpush.bf16.msra.mxu0 0
      %439 = vmatpush.bf16.msra.mxu0 0
      %440 = vmatpush.bf16.msra.mxu0 0
      %441 = vmatpush.bf16.msra.mxu0 0
      %442 = vmatpush.bf16.msra.mxu0 0
      %443 = vmatpush.bf16.msra.mxu0 %v431
      %444 = vmatpush.bf16.msra.mxu0 %v430
      %445 = vmatmul.bf16.gmra.mxu0 %v435
      %v446 = vpop.f32.mrf.mxu0
      %v447 = vadd.f32 %v420, %v446
      %v448 = vpop.f32.mrf.mxu0
      %449 = vdwg.mxu0
      %vm450 = vcmask 64512
      %v452 = vsel %vm450, %v410, 0
      %v455 = vsel %vm450, %v447, 0
      %457 = vmatpush.xpose.msra.mxu0 0.0
      %458 = vmatpush.xpose.msra.mxu0 0.0
      %459 = vmatpush.xpose.msra.mxu0 0.0
      %460 = vmatpush.xpose.msra.mxu0 0.0
      %461 = vmatpush.xpose.msra.mxu0 0.0
      %462 = vmatpush.xpose.msra.mxu0 0.0
      %463 = vmatpush.xpose.msra.mxu0 0.0
      %464 = vmatpush.xpose.msra.mxu0 0.0
      %465 = vmatpush.xpose.msra.mxu0 0.0
      %466 = vmatpush.xpose.msra.mxu0 0.0
      %467 = vmatpush.xpose.msra.mxu0 0.0
      %468 = vmatpush.xpose.msra.mxu0 0.0
      %469 = vmatpush.xpose.msra.mxu0 0.0
      %470 = vmatpush.xpose.msra.mxu0 0.0
      %471 = vmatpush.xpose.msra.mxu0 0.0
      %472 = vmatpush.xpose.msra.mxu0 %v455
      %473 = vmatmul.f32.gmra.mxu0 %v452
      %v474 = vpop.f32.mrf.mxu0
      %v475 = vadd.f32 0.0, %v474
      %476 = vdwg.mxu0
      %v477 = vmul.f32 %v475, 0.35355338
      %v478 = vsel %vm450, %v477, -inf
      %479 = vmax.xlane.f32.xlu0 %v478
      %v480 = vpop.xlane.xlu0 %479
      %v481 = vsub.f32 %v477, %v480
      %v482 = vmul.f32 %v481, 1.442695
      %v483 = vpow.pop %v482
      %v484 = vsel %vm450, %v483, 0.0
      %485 = vadd.xlane.f32.xlu0 %v484
      %v486 = vpop.xlane.xlu0 %485
      %v487 = vrcp.pop %v486
      %v488 = vmul.f32 %v483, %v487
      %489 = vrot.lane.b32.xlu0 %v447, 96
      %v490 = vpop.permute.xlu0 %489
      %v493 = vsel %vm450, %v488, 0
      %495 = vmatpush.msra.mxu0 0.0
      %496 = vmatpush.msra.mxu0 0.0
      %497 = vmatpush.msra.mxu0 0.0
      %498 = vmatpush.msra.mxu0 0.0
      %499 = vmatpush.msra.mxu0 0.0
      %500 = vmatpush.msra.mxu0 0.0
      %501 = vmatpush.msra.mxu0 0.0
      %502 = vmatpush.msra.mxu0 0.0
      %503 = vmatpush.msra.mxu0 0.0
      %504 = vmatpush.msra.mxu0 0.0
      %505 = vmatpush.msra.mxu0 0.0
      %506 = vmatpush.msra.mxu0 0.0
      %507 = vmatpush.msra.mxu0 0.0
      %508 = vmatpush.msra.mxu0 0.0
      %509 = vmatpush.msra.mxu0 0.0
      %510 = vmatpush.msra.mxu0 %v490
      %511 = vmatmul.f32.gmra.mxu0 %v493
      %v512 = vpop.f32.mrf.mxu0
      %v513 = vadd.f32 0.0, %v512
      %514 = vdwg.mxu0
      %515 = vst.msk [vmem:[#allocation2] sm:$0xff] %vm450, %v513
      %516 = vrot.lane.b32.xlu0 %v410, 120
      %v517 = vpop.permute.xlu0 %516
      %518 = vrot.lane.b32.xlu0 %v447, 120
      %v519 = vpop.permute.xlu0 %518
      %v520 = vsel %vm450, %v517, 0
      %v522 = vsel %vm450, %v519, 0
      %524 = vmatpush.xpose.msra.mxu0 0.0
      %525 = vmatpush.xpose.msra.mxu0 0.0
      %526 = vmatpush.xpose.msra.mxu0 0.0
      %527 = vmatpush.xpose.msra.mxu0 0.0
      %528 = vmatpush.xpose.msra.mxu0 0.0
      %529 = vmatpush.xpose.msra.mxu0 0.0
      %530 = vmatpush.xpose.msra.mxu0 0.0
      %531 = vmatpush.xpose.msra.mxu0 0.0
      %532 = vmatpush.xpose.msra.mxu0 0.0
      %533 = vmatpush.xpose.msra.mxu0 0.0
      %534 = vmatpush.xpose.msra.mxu0 0.0
      %535 = vmatpush.xpose.msra.mxu0 0.0
      %536 = vmatpush.xpose.msra.mxu0 0.0
      %537 = vmatpush.xpose.msra.mxu0 0.0
      %538 = vmatpush.xpose.msra.mxu0 0.0
      %539 = vmatpush.xpose.msra.mxu0 %v522
      %540 = vmatmul.f32.gmra.mxu0 %v520
      %v541 = vpop.f32.mrf.mxu0
      %v542 = vadd.f32 0.0, %v541
      %543 = vdwg.mxu0
      %v544 = vmul.f32 %v542, 0.35355338
      %v545 = vsel %vm450, %v544, -inf
      %546 = vmax.xlane.f32.xlu0 %v545
      %v547 = vpop.xlane.xlu0 %546
      %v548 = vsub.f32 %v544, %v547
      %v549 = vmul.f32 %v548, 1.442695
      %v550 = vpow.pop %v549
      %v551 = vsel %vm450, %v550, 0.0
      %552 = vadd.xlane.f32.xlu0 %v551
      %v553 = vpop.xlane.xlu0 %552
      %v554 = vrcp.pop %v553
      %v555 = vmul.f32 %v550, %v554
      %556 = vrot.lane.b32.xlu0 %v447, 88
      %v557 = vpop.permute.xlu0 %556
      %v560 = vsel %vm450, %v555, 0
      %562 = vmatpush.msra.mxu0 0.0
      %563 = vmatpush.msra.mxu0 0.0
      %564 = vmatpush.msra.mxu0 0.0
      %565 = vmatpush.msra.mxu0 0.0
      %566 = vmatpush.msra.mxu0 0.0
      %567 = vmatpush.msra.mxu0 0.0
      %568 = vmatpush.msra.mxu0 0.0
      %569 = vmatpush.msra.mxu0 0.0
      %570 = vmatpush.msra.mxu0 0.0
      %571 = vmatpush.msra.mxu0 0.0
      %572 = vmatpush.msra.mxu0 0.0
      %573 = vmatpush.msra.mxu0 0.0
      %574 = vmatpush.msra.mxu0 0.0
      %575 = vmatpush.msra.mxu0 0.0
      %576 = vmatpush.msra.mxu0 0.0
      %577 = vmatpush.msra.mxu0 %v557
      %578 = vmatmul.f32.gmra.mxu0 %v560
      %v579 = vpop.f32.mrf.mxu0
      %v580 = vadd.f32 0.0, %v579
      %581 = vdwg.mxu0
      %583 = vrot.lane.b32.xlu0 %v580, 8
      %v584 = vpop.permute.xlu0 %583
      %vm586 = vcmask 130112
      %587 = vst.msk [vmem:[#allocation2] sm:$0xff] %vm586, %v584
      %588 = vrot.lane.b32.xlu0 %v410, 112
      %v589 = vpop.permute.xlu0 %588
      %590 = vrot.lane.b32.xlu0 %v447, 112
      %v591 = vpop.permute.xlu0 %590
      %v592 = vsel %vm450, %v589, 0
      %v594 = vsel %vm450, %v591, 0
      %596 = vmatpush.xpose.msra.mxu0 0.0
      %597 = vmatpush.xpose.msra.mxu0 0.0
      %598 = vmatpush.xpose.msra.mxu0 0.0
      %599 = vmatpush.xpose.msra.mxu0 0.0
      %600 = vmatpush.xpose.msra.mxu0 0.0
      %601 = vmatpush.xpose.msra.mxu0 0.0
      %602 = vmatpush.xpose.msra.mxu0 0.0
      %603 = vmatpush.xpose.msra.mxu0 0.0
      %604 = vmatpush.xpose.msra.mxu0 0.0
      %605 = vmatpush.xpose.msra.mxu0 0.0
      %606 = vmatpush.xpose.msra.mxu0 0.0
      %607 = vmatpush.xpose.msra.mxu0 0.0
      %608 = vmatpush.xpose.msra.mxu0 0.0
      %609 = vmatpush.xpose.msra.mxu0 0.0
      %610 = vmatpush.xpose.msra.mxu0 0.0
      %611 = vmatpush.xpose.msra.mxu0 %v594
      %612 = vmatmul.f32.gmra.mxu0 %v592
      %v613 = vpop.f32.mrf.mxu0
      %v614 = vadd.f32 0.0, %v613
      %615 = vdwg.mxu0
      %v616 = vmul.f32 %v614, 0.35355338
      %v617 = vsel %vm450, %v616, -inf
      %618 = vmax.xlane.f32.xlu0 %v617
      %v619 = vpop.xlane.xlu0 %618
      %v620 = vsub.f32 %v616, %v619
      %v621 = vmul.f32 %v620, 1.442695
      %v622 = vpow.pop %v621
      %v623 = vsel %vm450, %v622, 0.0
      %624 = vadd.xlane.f32.xlu0 %v623
      %v625 = vpop.xlane.xlu0 %624
      %v626 = vrcp.pop %v625
      %v627 = vmul.f32 %v622, %v626
      %628 = vrot.lane.b32.xlu0 %v447, 80
      %v629 = vpop.permute.xlu0 %628
      %v632 = vsel %vm450, %v627, 0
      %634 = vmatpush.msra.mxu0 0.0
      %635 = vmatpush.msra.mxu0 0.0
      %636 = vmatpush.msra.mxu0 0.0
      %637 = vmatpush.msra.mxu0 0.0
      %638 = vmatpush.msra.mxu0 0.0
      %639 = vmatpush.msra.mxu0 0.0
      %640 = vmatpush.msra.mxu0 0.0
      %641 = vmatpush.msra.mxu0 0.0
      %642 = vmatpush.msra.mxu0 0.0
      %643 = vmatpush.msra.mxu0 0.0
      %644 = vmatpush.msra.mxu0 0.0
      %645 = vmatpush.msra.mxu0 0.0
      %646 = vmatpush.msra.mxu0 0.0
      %647 = vmatpush.msra.mxu0 0.0
      %648 = vmatpush.msra.mxu0 0.0
      %649 = vmatpush.msra.mxu0 %v629
      %650 = vmatmul.f32.gmra.mxu0 %v632
      %v651 = vpop.f32.mrf.mxu0
      %v652 = vadd.f32 0.0, %v651
      %653 = vdwg.mxu0
      %655 = vrot.lane.b32.xlu0 %v652, 16
      %v656 = vpop.permute.xlu0 %655
      %vm658 = vcmask 195712
      %659 = vst.msk [vmem:[#allocation2] sm:$0xff] %vm658, %v656
      %660 = vrot.lane.b32.xlu0 %v410, 104
      %v661 = vpop.permute.xlu0 %660
      %662 = vrot.lane.b32.xlu0 %v447, 104
      %v663 = vpop.permute.xlu0 %662
      %v664 = vsel %vm450, %v661, 0
      %v666 = vsel %vm450, %v663, 0
      %668 = vmatpush.xpose.msra.mxu0 0.0
      %669 = vmatpush.xpose.msra.mxu0 0.0
      %670 = vmatpush.xpose.msra.mxu0 0.0
      %671 = vmatpush.xpose.msra.mxu0 0.0
      %672 = vmatpush.xpose.msra.mxu0 0.0
      %673 = vmatpush.xpose.msra.mxu0 0.0
      %674 = vmatpush.xpose.msra.mxu0 0.0
      %675 = vmatpush.xpose.msra.mxu0 0.0
      %676 = vmatpush.xpose.msra.mxu0 0.0
      %677 = vmatpush.xpose.msra.mxu0 0.0
      %678 = vmatpush.xpose.msra.mxu0 0.0
      %679 = vmatpush.xpose.msra.mxu0 0.0
      %680 = vmatpush.xpose.msra.mxu0 0.0
      %681 = vmatpush.xpose.msra.mxu0 0.0
      %682 = vmatpush.xpose.msra.mxu0 0.0
      %683 = vmatpush.xpose.msra.mxu0 %v666
      %684 = vmatmul.f32.gmra.mxu0 %v664
      %v685 = vpop.f32.mrf.mxu0
      %v686 = vadd.f32 0.0, %v685
      %687 = vdwg.mxu0
      %v688 = vmul.f32 %v686, 0.35355338
      %v689 = vsel %vm450, %v688, -inf
      %690 = vmax.xlane.f32.xlu0 %v689
      %v691 = vpop.xlane.xlu0 %690
      %v692 = vsub.f32 %v688, %v691
      %v693 = vmul.f32 %v692, 1.442695
      %v694 = vpow.pop %v693
      %v695 = vsel %vm450, %v694, 0.0
      %696 = vadd.xlane.f32.xlu0 %v695
      %v697 = vpop.xlane.xlu0 %696
      %v698 = vrcp.pop %v697
      %v699 = vmul.f32 %v694, %v698
      %700 = vrot.lane.b32.xlu0 %v447, 72
      %v701 = vpop.permute.xlu0 %700
      %v704 = vsel %vm450, %v699, 0
      %706 = vmatpush.msra.mxu0 0.0
      %707 = vmatpush.msra.mxu0 0.0
      %708 = vmatpush.msra.mxu0 0.0
      %709 = vmatpush.msra.mxu0 0.0
      %710 = vmatpush.msra.mxu0 0.0
      %711 = vmatpush.msra.mxu0 0.0
      %712 = vmatpush.msra.mxu0 0.0
      %713 = vmatpush.msra.mxu0 0.0
      %714 = vmatpush.msra.mxu0 0.0
      %715 = vmatpush.msra.mxu0 0.0
      %716 = vmatpush.msra.mxu0 0.0
      %717 = vmatpush.msra.mxu0 0.0
      %718 = vmatpush.msra.mxu0 0.0
      %719 = vmatpush.msra.mxu0 0.0
      %720 = vmatpush.msra.mxu0 0.0
      %721 = vmatpush.msra.mxu0 %v701
      %722 = vmatmul.f32.gmra.mxu0 %v704
      %v723 = vpop.f32.mrf.mxu0
      %v724 = vadd.f32 0.0, %v723
      %725 = vdwg.mxu0
      %727 = vrot.lane.b32.xlu0 %v724, 24
      %v728 = vpop.permute.xlu0 %727
      %vm730 = vcmask 261312
      %731 = vst.msk [vmem:[#allocation2] sm:$0xff] %vm730, %v728
      %v732 = vld [vmem:[#allocation2] sm:$0xff]
      %v733 = vpack.c.bf16 %v732, %v732
      %v734 = vld [vmem:[%s6] sm:$0xf]
      %v735 = vld [vmem:[%s6 + $0x4] sm:$0xf]
      %v736 = vld [vmem:[%s6 + $0x8] sm:$0xf]
      %v737 = vld [vmem:[%s6 + $0xc] sm:$0xf]
      %v738 = vld [vmem:[%s7] sm:$0x1]
      %v740 = vperm.slane %v738, 0
      %v746 = vunpack.c.l.b16 %v734
      %v747 = vunpack.c.l.b16 %v735
      %v748 = vunpack.c.l.b16 %v736
      %v749 = vunpack.c.l.b16 %v737
      %v750 = vpack.c.b16 %v747, %v746
      %v751 = vpack.c.b16 %v749, %v748
      %v755 = vsel %vm396, %v733, 0
      %757 = vmatpush.bf16.msra.mxu0 0
      %758 = vmatpush.bf16.msra.mxu0 0
      %759 = vmatpush.bf16.msra.mxu0 0
      %760 = vmatpush.bf16.msra.mxu0 0
      %761 = vmatpush.bf16.msra.mxu0 0
      %762 = vmatpush.bf16.msra.mxu0 0
      %763 = vmatpush.bf16.msra.mxu0 %v751
      %764 = vmatpush.bf16.msra.mxu0 %v750
      %765 = vmatmul.bf16.gmra.mxu0 %v755
      %v766 = vpop.f32.mrf.mxu0
      %v767 = vadd.f32 %v740, %v766
      %v768 = vpop.f32.mrf.mxu0
      %769 = vdwg.mxu0
      %v770 = vadd.f32 %v373, %v767
      %v771 = vsel %vm396, %v770, 0.0
      %772 = vadd.xlane.f32.xlu0 %v771
      %v773 = vpop.xlane.xlu0 %772
      %v774 = vrcp.pop 32.0
      %v775 = vmul.f32 32.0, %v774
      %v776 = vsub.f32 1.0, %v775
      %v777 = vmul.f32 %v774, %v776
      %v778 = vadd.f32 %v774, %v777
      %vm779 = vweird.f32 %v774
      %v780 = vsel %vm779, %v774, %v778
      %v781 = vmul.f32 %v773, %v780
      %v782 = vsub.f32 %v770, %v781
      %v783 = vmul.f32 %v782, %v782
      %v784 = vsel %vm396, %v783, 0.0
      %785 = vadd.xlane.f32.xlu0 %v784
      %v786 = vpop.xlane.xlu0 %785
      %v787 = vmul.f32 %v786, %v780
      %v788 = vadd.f32 %v787, 1e-05
      %v789 = vrsqrt.pop %v788
      %v790 = vmul.f32 %v789, %v788
      %v791 = vmul.f32 %v790, %v789
      %v792 = vmul.f32 0.5, %v791
      %v793 = vsub.f32 1.5, %v792
      %v794 = vmul.f32 %v789, %v793
      %vm795 = vweird.f32 %v788
      %vm796 = vweird.f32 %v789
      %vm797 = vmor %vm795, %vm796
      %v798 = vsel %vm797, %v789, %v794
      %v799 = vmul.f32 %v782, %v798
      %v800 = vld [vmem:[%s8] sm:$0x1]
      %v802 = vperm.slane %v800, 0
      %v804 = vmul.f32 %v799, %v802
      %v805 = vld [vmem:[%s9] sm:$0x1]
      %v807 = vperm.slane %v805, 0
      %v809 = vadd.f32 %v804, %v807
      %810 = vst.msk [vmem:[%s371] sm:$0xff] %vm396, %v809
      %p811 = scmp.lt.s32.totalorder %s21, 1
      %s812 = scalar_select %p811, %s21, 1
      %s813 = smul.addr %s812, 8
      %s814 = scalar_lea.vmem %s10, %s813
      // Predicated region
      $region61: #{transformer_forward.11} parent=59 // pred_check
        %p815 = pneg %p259
      $region62: #{transformer_forward.11} parent=59 // pred_check_branch
        %817 = sbr.rel (%p815) target = $region64
      $region63: #{transformer_forward.11} parent=59 // pred_region
        _
      $region64: #{transformer_forward.11} parent=59 // pred_fallthru
        _
    $region60: #{transformer_forward.11} parent=5 // pred_fallthru
      _
    %p818 = scmp.le.s32.totalorder 2, %s16
    // Predicated region
    $region65: #{transformer_forward.11} parent=5 // pred_check
      %p819 = pneg %p818
    $region66: #{transformer_forward.11} parent=5 // pred_check_branch
      %821 = sbr.rel (%p819) target = $region68
    $region67: #{transformer_forward.11} parent=5 // pred_region
      %s822 = ssub.s32 %s16, 2
      // Predicated region
      $region69: #{transformer_forward.11} parent=67 // pred_check
        %p823 = pneg %p265
      $region70: #{transformer_forward.11} parent=67 // pred_check_branch
        %825 = sbr.rel (%p823) target = $region72
      $region71: #{transformer_forward.11} parent=67 // pred_region
        %p826 = scmp.lt.s32.totalorder %s22, 1
        %s827 = scalar_select %p826, %s22, 1
        %s828 = smul.addr %s827, 8
        %s829 = scalar_lea.vmem %s10, %s828
      $region72: #{transformer_forward.11} parent=67 // pred_fallthru
        _
    $region68: #{transformer_forward.11} parent=5 // pred_fallthru
      _
  $region6: #{transformer_forward.11} parent=0 // loop_footer
    %s20 = sadd.s32 1, %s16
  $region7: #{transformer_forward.11} parent=0 // loop_footer_branch
    %15 = sbr.rel target = $region3
  $region8: #{transformer_forward.11} parent=0 // loop_exit
    _

// kernel: transformer_forward.15
$region0: #{transformer_forward.15}
  #allocation0 [shape = 'u32[]', space=smem, size = 0x4, offset = 0x4, fixed_abs, tag = 'smem constant byte address 0x4 - core index']
  #allocation1 [shape = 'u32[72,128]{1,0:T(1,128)}', space=vmem, size = 0x9000, scoped, tag = 'internal scratch']
  #allocation2 [shape = 'f32[8,32]{1,0:T(8,128)}', space=vmem, size = 0x1000, scoped, tag = 'scratch operand']
  %s0 = inlined_call_operand.vmem [shape: f32[2,8,32], index: 0, kind: input, shape index: {}, may-alias: {0,1}]
  %s1 = inlined_call_operand.vmem [shape: f32[2,8,32], index: 1, kind: input, shape index: {}, may-alias: {0,1}]
  %s2 = inlined_call_operand.vmem [shape: bf16[32,32], index: 2, kind: input, shape index: {}]
  %s3 = inlined_call_operand.hbm [shape: f32[1,32], index: 3, kind: input, shape index: {}]
  %s4 = inlined_call_operand.vmem [shape: bf16[32,64], index: 4, kind: input, shape index: {}]
  %s5 = inlined_call_operand.hbm [shape: f32[1,64], index: 5, kind: input, shape index: {}]
  %s6 = inlined_call_operand.vmem [shape: bf16[32,32], index: 6, kind: input, shape index: {}]
  %s7 = inlined_call_operand.hbm [shape: f32[1,32], index: 7, kind: input, shape index: {}]
  %s8 = inlined_call_operand.hbm [shape: f32[1,32], index: 8, kind: input, shape index: {}]
  %s9 = inlined_call_operand.hbm [shape: f32[1,32], index: 9, kind: input, shape index: {}]
  %s10 = inlined_call_operand.vmem [shape: f32[2,8,32], index: 10, kind: output, shape index: {}]
  %s11 = sld [smem:[#allocation0]]
  $region93: #{transformer_forward.15} parent=0
    _
  %s13 = ssub.s32 1, %s11
  %s14 = scalar_select 0, %s13, %s11
  $region1: #{transformer_forward.15} parent=0
    #allocation3 [shape = 'u8[512]{0}', space=vmem, size = 0x400, scoped, tag = 'input window, operand 3, single buffered']
    #allocation4 [shape = 's32[2]{0}', space=sflag, size = 0x8, scoped, tag = 'scoped memory for transformer_forward.15']
    #allocation5 [shape = 'u8[512]{0}', space=vmem, size = 0x400, scoped, tag = 'input window, operand 5, single buffered']
    #allocation6 [shape = 's32[1]{0}', space=sflag, size = 0x4, scoped, tag = 'scoped memory for transformer_forward.15']
    #allocation7 [shape = 'u8[512]{0}', space=vmem, size = 0x400, scoped, tag = 'input window, operand 7, single buffered']
    #allocation8 [shape = 'u8[512]{0}', space=vmem, size = 0x400, scoped, tag = 'input window, operand 8, single buffered']
    #allocation9 [shape = 's32[1]{0}', space=sflag, size = 0x4, scoped, tag = 'scoped memory for transformer_forward.15']
    #allocation10 [shape = 'u8[512]{0}', space=vmem, size = 0x400, scoped, tag = 'input window, operand 9, single buffered']
    %15 = vsyncpa [#allocation4], 0
    %16 = vsyncpa [#allocation6], 0
    %17 = vsyncpa [#allocation9], 0
    loop: start=0, step=1, limit=4
    $region2: #{transformer_forward.15} parent=1 // loop_pre_header
      _
    $region3: #{transformer_forward.15} parent=1 // loop_header
      %s19 = sphi 0, %s23
      %p20 = scmp.ge.s32.totalorder %s19, 4
      %s29 = sphi 0, %s31
      %s32 = sphi 0, %s29
      %s33 = sphi 0, %s32
      %s49 = sphi 0, %s33
      %s55 = sphi 0, %s57
      %s58 = sphi 0, %s55
      %s59 = sphi 0, %s58
      %s75 = sphi 0, %s59
      %s79 = sphi 0, %s79
      %s81 = sphi 0, %s79
      %s82 = sphi 0, %s81
      %s96 = sphi 0, %s82
      %s100 = sphi 0, %s100
      %s102 = sphi 0, %s100
      %s103 = sphi 0, %s102
      %s117 = sphi 0, %s103
      %s121 = sphi 0, %s121
      %s123 = sphi 0, %s121
      %s124 = sphi 0, %s123
      %s138 = sphi 0, %s124
      %s142 = sphi 0, %s142
      %s144 = sphi 0, %s142
      %s145 = sphi 0, %s144
      %s159 = sphi 0, %s145
      %s163 = sphi 0, %s163
      %s165 = sphi 0, %s163
      %s166 = sphi 0, %s165
      %s180 = sphi 0, %s166
      %s184 = sphi 0, %s184
      %s186 = sphi 0, %s184
      %s187 = sphi 0, %s186
      %s201 = sphi 0, %s187
      %s205 = sphi 0, %s205
      %s207 = sphi 0, %s205
      %s208 = sphi 0, %s207
      %s222 = sphi 0, %s208
      %s226 = sphi 0, %s226
      %s228 = sphi 0, %s226
      %s229 = sphi 0, %s228
      %s243 = sphi 0, %s229
      %s249 = sphi 0, %s251
      %s252 = sphi 0, %s249
      %s253 = sphi 0, %s252
      %s269 = sphi 0, %s253
    $region4: #{transformer_forward.15} parent=1 // loop_header_branch
      %22 = sbr.rel (%p20) target = $region8
    $region5: #{transformer_forward.15} parent=1 // loop_body
      %s24 = ssub.s32 %s19, 1
      %s25 = ssub.s32 %s19, 2
      %s26 = sadd.s32 %s19, 1
      %s27 = ssub.s32 %s19, %s26
      %p28 = scmp.eq.s32.totalorder %s27, 0
      %s30 = sadd.s32 %s29, 1
      %s31 = scalar_select %p28, %s29, %s30
      %p34 = pneg %p28
      %p35 = scmp.eq.s32.totalorder %s19, 1
      %p36 = por %p34, %p35
      %p37 = scmp.ne.s32.totalorder %s29, %s32
      %p38 = scmp.eq.s32.totalorder %s19, 0
      %p39 = por %p37, %p38
      %p40 = scmp.ne.s32.totalorder %s29, %s32
      %p41 = scmp.eq.s32.totalorder %s24, 1
      %p42 = por %p40, %p41
      %p43 = scmp.ne.s32.totalorder %s32, %s33
      %p44 = scmp.eq.s32.totalorder %s24, 0
      %p45 = por %p43, %p44
      %p46 = scmp.ne.s32.totalorder %s32, %s33
      %p47 = scmp.eq.s32.totalorder %s25, 1
      %p48 = por %p46, %p47
      %p50 = scmp.ne.s32.totalorder %s33, %s49
      %p51 = scmp.eq.s32.totalorder %s25, 0
      %p52 = por %p50, %p51
      %s53 = ssub.s32 %s19, %s26
      %p54 = scmp.eq.s32.totalorder %s53, 0
      %s56 = sadd.s32 %s55, 1
      %s57 = scalar_select %p54, %s55, %s56
      %p60 = pneg %p54
      %p61 = scmp.eq.s32.totalorder %s19, 1
      %p62 = por %p60, %p61
      %p63 = scmp.ne.s32.totalorder %s55, %s58
      %p64 = scmp.eq.s32.totalorder %s19, 0
      %p65 = por %p63, %p64
      %p66 = scmp.ne.s32.totalorder %s55, %s58
      %p67 = scmp.eq.s32.totalorder %s24, 1
      %p68 = por %p66, %p67
      %p69 = scmp.ne.s32.totalorder %s58, %s59
      %p70 = scmp.eq.s32.totalorder %s24, 0
      %p71 = por %p69, %p70
      %p72 = scmp.ne.s32.totalorder %s58, %s59
      %p73 = scmp.eq.s32.totalorder %s25, 1
      %p74 = por %p72, %p73
      %p76 = scmp.ne.s32.totalorder %s59, %s75
      %p77 = scmp.eq.s32.totalorder %s25, 0
      %p78 = por %p76, %p77
      %s80 = sadd.s32 %s79, 1
      %p83 = scmp.eq.s32.totalorder %s19, 1
      %p84 = scmp.ne.s32.totalorder %s79, %s81
      %p85 = scmp.eq.s32.totalorder %s19, 0
      %p86 = por %p84, %p85
      %p87 = scmp.ne.s32.totalorder %s79, %s81
      %p88 = scmp.eq.s32.totalorder %s24, 1
      %p89 = por %p87, %p88
      %p90 = scmp.ne.s32.totalorder %s81, %s82
      %p91 = scmp.eq.s32.totalorder %s24, 0
      %p92 = por %p90, %p91
      %p93 = scmp.ne.s32.totalorder %s81, %s82
      %p94 = scmp.eq.s32.totalorder %s25, 1
      %p95 = por %p93, %p94
      %p97 = scmp.ne.s32.totalorder %s82, %s96
      %p98 = scmp.eq.s32.totalorder %s25, 0
      %p99 = por %p97, %p98
      %s101 = sadd.s32 %s100, 1
      %p104 = scmp.eq.s32.totalorder %s19, 1
      %p105 = scmp.ne.s32.totalorder %s100, %s102
      %p106 = scmp.eq.s32.totalorder %s19, 0
      %p107 = por %p105, %p106
      %p108 = scmp.ne.s32.totalorder %s100, %s102
      %p109 = scmp.eq.s32.totalorder %s24, 1
      %p110 = por %p108, %p109
      %p111 = scmp.ne.s32.totalorder %s102, %s103
      %p112 = scmp.eq.s32.totalorder %s24, 0
      %p113 = por %p111, %p112
      %p114 = scmp.ne.s32.totalorder %s102, %s103
      %p115 = scmp.eq.s32.totalorder %s25, 1
      %p116 = por %p114, %p115
      %p118 = scmp.ne.s32.totalorder %s103, %s117
      %p119 = scmp.eq.s32.totalorder %s25, 0
      %p120 = por %p118, %p119
      %s122 = sadd.s32 %s121, 1
      %p125 = scmp.eq.s32.totalorder %s19, 1
      %p126 = scmp.ne.s32.totalorder %s121, %s123
      %p127 = scmp.eq.s32.totalorder %s19, 0
      %p128 = por %p126, %p127
      %p129 = scmp.ne.s32.totalorder %s121, %s123
      %p130 = scmp.eq.s32.totalorder %s24, 1
      %p131 = por %p129, %p130
      %p132 = scmp.ne.s32.totalorder %s123, %s124
      %p133 = scmp.eq.s32.totalorder %s24, 0
      %p134 = por %p132, %p133
      %p135 = scmp.ne.s32.totalorder %s123, %s124
      %p136 = scmp.eq.s32.totalorder %s25, 1
      %p137 = por %p135, %p136
      %p139 = scmp.ne.s32.totalorder %s124, %s138
      %p140 = scmp.eq.s32.totalorder %s25, 0
      %p141 = por %p139, %p140
      %s143 = sadd.s32 %s142, 1
      %p146 = scmp.eq.s32.totalorder %s19, 1
      %p147 = scmp.ne.s32.totalorder %s142, %s144
      %p148 = scmp.eq.s32.totalorder %s19, 0
      %p149 = por %p147, %p148
      %p150 = scmp.ne.s32.totalorder %s142, %s144
      %p151 = scmp.eq.s32.totalorder %s24, 1
      %p152 = por %p150, %p151
      %p153 = scmp.ne.s32.totalorder %s144, %s145
      %p154 = scmp.eq.s32.totalorder %s24, 0
      %p155 = por %p153, %p154
      %p156 = scmp.ne.s32.totalorder %s144, %s145
      %p157 = scmp.eq.s32.totalorder %s25, 1
      %p158 = por %p156, %p157
      %p160 = scmp.ne.s32.totalorder %s145, %s159
      %p161 = scmp.eq.s32.totalorder %s25, 0
      %p162 = por %p160, %p161
      %s164 = sadd.s32 %s163, 1
      %p167 = scmp.eq.s32.totalorder %s19, 1
      %p168 = scmp.ne.s32.totalorder %s163, %s165
      %p169 = scmp.eq.s32.totalorder %s19, 0
      %p170 = por %p168, %p169
      %p171 = scmp.ne.s32.totalorder %s163, %s165
      %p172 = scmp.eq.s32.totalorder %s24, 1
      %p173 = por %p171, %p172
      %p174 = scmp.ne.s32.totalorder %s165, %s166
      %p175 = scmp.eq.s32.totalorder %s24, 0
      %p176 = por %p174, %p175
      %p177 = scmp.ne.s32.totalorder %s165, %s166
      %p178 = scmp.eq.s32.totalorder %s25, 1
      %p179 = por %p177, %p178
      %p181 = scmp.ne.s32.totalorder %s166, %s180
      %p182 = scmp.eq.s32.totalorder %s25, 0
      %p183 = por %p181, %p182
      %s185 = sadd.s32 %s184, 1
      %p188 = scmp.eq.s32.totalorder %s19, 1
      %p189 = scmp.ne.s32.totalorder %s184, %s186
      %p190 = scmp.eq.s32.totalorder %s19, 0
      %p191 = por %p189, %p190
      %p192 = scmp.ne.s32.totalorder %s184, %s186
      %p193 = scmp.eq.s32.totalorder %s24, 1
      %p194 = por %p192, %p193
      %p195 = scmp.ne.s32.totalorder %s186, %s187
      %p196 = scmp.eq.s32.totalorder %s24, 0
      %p197 = por %p195, %p196
      %p198 = scmp.ne.s32.totalorder %s186, %s187
      %p199 = scmp.eq.s32.totalorder %s25, 1
      %p200 = por %p198, %p199
      %p202 = scmp.ne.s32.totalorder %s187, %s201
      %p203 = scmp.eq.s32.totalorder %s25, 0
      %p204 = por %p202, %p203
      %s206 = sadd.s32 %s205, 1
      %p209 = scmp.eq.s32.totalorder %s19, 1
      %p210 = scmp.ne.s32.totalorder %s205, %s207
      %p211 = scmp.eq.s32.totalorder %s19, 0
      %p212 = por %p210, %p211
      %p213 = scmp.ne.s32.totalorder %s205, %s207
      %p214 = scmp.eq.s32.totalorder %s24, 1
      %p215 = por %p213, %p214
      %p216 = scmp.ne.s32.totalorder %s207, %s208
      %p217 = scmp.eq.s32.totalorder %s24, 0
      %p218 = por %p216, %p217
      %p219 = scmp.ne.s32.totalorder %s207, %s208
      %p220 = scmp.eq.s32.totalorder %s25, 1
      %p221 = por %p219, %p220
      %p223 = scmp.ne.s32.totalorder %s208, %s222
      %p224 = scmp.eq.s32.totalorder %s25, 0
      %p225 = por %p223, %p224
      %s227 = sadd.s32 %s226, 1
      %p230 = scmp.eq.s32.totalorder %s19, 1
      %p231 = scmp.ne.s32.totalorder %s226, %s228
      %p232 = scmp.eq.s32.totalorder %s19, 0
      %p233 = por %p231, %p232
      %p234 = scmp.ne.s32.totalorder %s226, %s228
      %p235 = scmp.eq.s32.totalorder %s24, 1
      %p236 = por %p234, %p235
      %p237 = scmp.ne.s32.totalorder %s228, %s229
      %p238 = scmp.eq.s32.totalorder %s24, 0
      %p239 = por %p237, %p238
      %p240 = scmp.ne.s32.totalorder %s228, %s229
      %p241 = scmp.eq.s32.totalorder %s25, 1
      %p242 = por %p240, %p241
      %p244 = scmp.ne.s32.totalorder %s229, %s243
      %p245 = scmp.eq.s32.totalorder %s25, 0
      %p246 = por %p244, %p245
      %s247 = ssub.s32 %s19, %s26
      %p248 = scmp.eq.s32.totalorder %s247, 0
      %s250 = sadd.s32 %s249, 1
      %s251 = scalar_select %p248, %s249, %s250
      %p254 = pneg %p248
      %p255 = scmp.eq.s32.totalorder %s19, 1
      %p256 = por %p254, %p255
      %p257 = scmp.ne.s32.totalorder %s249, %s252
      %p258 = scmp.eq.s32.totalorder %s19, 0
      %p259 = por %p257, %p258
      %p260 = scmp.ne.s32.totalorder %s249, %s252
      %p261 = scmp.eq.s32.totalorder %s24, 1
      %p262 = por %p260, %p261
      %p263 = scmp.ne.s32.totalorder %s252, %s253
      %p264 = scmp.eq.s32.totalorder %s24, 0
      %p265 = por %p263, %p264
      %p266 = scmp.ne.s32.totalorder %s252, %s253
      %p267 = scmp.eq.s32.totalorder %s25, 1
      %p268 = por %p266, %p267
      %p270 = scmp.ne.s32.totalorder %s253, %s269
      %p271 = scmp.eq.s32.totalorder %s25, 0
      %p272 = por %p270, %p271
      %p273 = scmp.le.s32.totalorder 1, %s19
      %p274 = scmp.lt.s32.totalorder %s19, 3
      %p275 = pnand %p273, %p274
      %p276 = pneg %p275
      // Predicated region
      $region9: #{transformer_forward.15} parent=5 // pred_check
        _
      $region10: #{transformer_forward.15} parent=5 // pred_check_branch
        %278 = sbr.rel (%p275) target = $region12
      $region11: #{transformer_forward.15} parent=5 // pred_region
        %s279 = ssub.s32 %s19, 1
        // Predicated region
        $region13: #{transformer_forward.15} parent=11 // pred_check
          %p280 = pneg %p92
        $region14: #{transformer_forward.15} parent=11 // pred_check_branch
          %282 = sbr.rel (%p280) target = $region16
        $region15: #{transformer_forward.15} parent=11 // pred_region
          _
        $region16: #{transformer_forward.15} parent=11 // pred_fallthru
          _
        // Predicated region
        $region17: #{transformer_forward.15} parent=11 // pred_check
          %p283 = pneg %p113
        $region18: #{transformer_forward.15} parent=11 // pred_check_branch
          %285 = sbr.rel (%p283) target = $region20
        $region19: #{transformer_forward.15} parent=11 // pred_region
          %287 = vsyncadd [#allocation4], 0
          %s289 = sshll.u32 %s3, 4
          %s290 = int_to_ptr.hbm [resolvable:$true] %s289
          %s291 = sshll.u32 [#allocation3], 4
          %s292 = int_to_ptr.vmem [resolvable:$true] %s291
          %294 = dma.hbm_to_vmem [thread:$0]  %s290, 16, %s292, [#allocation4]
        $region20: #{transformer_forward.15} parent=11 // pred_fallthru
          _
        // Predicated region
        $region21: #{transformer_forward.15} parent=11 // pred_check
          %p295 = pneg %p134
        $region22: #{transformer_forward.15} parent=11 // pred_check_branch
          %297 = sbr.rel (%p295) target = $region24
        $region23: #{transformer_forward.15} parent=11 // pred_region
          _
        $region24: #{transformer_forward.15} parent=11 // pred_fallthru
          _
        // Predicated region
        $region25: #{transformer_forward.15} parent=11 // pred_check
          %p298 = pneg %p155
        $region26: #{transformer_forward.15} parent=11 // pred_check_branch
          %300 = sbr.rel (%p298) target = $region28
        $region27: #{transformer_forward.15} parent=11 // pred_region
          %302 = vsyncadd [#allocation6], 0
          %s304 = sshll.u32 %s5, 4
          %s305 = int_to_ptr.hbm [resolvable:$true] %s304
          %s306 = sshll.u32 [#allocation5], 4
          %s307 = int_to_ptr.vmem [resolvable:$true] %s306
          %309 = dma.hbm_to_vmem [thread:$0]  %s305, 16, %s307, [#allocation6]
        $region28: #{transformer_forward.15} parent=11 // pred_fallthru
          _
        // Predicated region
        $region29: #{transformer_forward.15} parent=11 // pred_check
          %p310 = pneg %p176
        $region30: #{transformer_forward.15} parent=11 // pred_check_branch
          %312 = sbr.rel (%p310) target = $region32
        $region31: #{transformer_forward.15} parent=11 // pred_region
          _
        $region32: #{transformer_forward.15} parent=11 // pred_fallthru
          _
        // Predicated region
        $region33: #{transformer_forward.15} parent=11 // pred_check
          %p313 = pneg %p197
        $region34: #{transformer_forward.15} parent=11 // pred_check_branch
          %315 = sbr.rel (%p313) target = $region36
        $region35: #{transformer_forward.15} parent=11 // pred_region
          %317 = vsyncadd [#allocation6], 0
          %s319 = sshll.u32 %s7, 4
          %s320 = int_to_ptr.hbm [resolvable:$true] %s319
          %s321 = sshll.u32 [#allocation7], 4
          %s322 = int_to_ptr.vmem [resolvable:$true] %s321
          %324 = dma.hbm_to_vmem [thread:$0]  %s320, 16, %s322, [#allocation6]
        $region36: #{transformer_forward.15} parent=11 // pred_fallthru
          _
        // Predicated region
        $region37: #{transformer_forward.15} parent=11 // pred_check
          %p325 = pneg %p218
        $region38: #{transformer_forward.15} parent=11 // pred_check_branch
          %327 = sbr.rel (%p325) target = $region40
        $region39: #{transformer_forward.15} parent=11 // pred_region
          %329 = vsyncadd [#allocation9], 0
          %s331 = sshll.u32 %s8, 4
          %s332 = int_to_ptr.hbm [resolvable:$true] %s331
          %s333 = sshll.u32 [#allocation8], 4
          %s334 = int_to_ptr.vmem [resolvable:$true] %s333
          %336 = dma.hbm_to_vmem [thread:$0]  %s332, 16, %s334, [#allocation9]
        $region40: #{transformer_forward.15} parent=11 // pred_fallthru
          _
        // Predicated region
        $region41: #{transformer_forward.15} parent=11 // pred_check
          %p337 = pneg %p239
        $region42: #{transformer_forward.15} parent=11 // pred_check_branch
          %339 = sbr.rel (%p337) target = $region44
        $region43: #{transformer_forward.15} parent=11 // pred_region
          %341 = vsyncadd [#allocation9], 0
          %s343 = sshll.u32 %s9, 4
          %s344 = int_to_ptr.hbm [resolvable:$true] %s343
          %s345 = sshll.u32 [#allocation10], 4
          %s346 = int_to_ptr.vmem [resolvable:$true] %s345
          %348 = dma.hbm_to_vmem [thread:$0]  %s344, 16, %s346, [#allocation9]
        $region44: #{transformer_forward.15} parent=11 // pred_fallthru
          _
      $region12: #{transformer_forward.15} parent=5 // pred_fallthru
        _
      %p349 = scmp.lt.s32.totalorder %s19, 2
      // Predicated region
      $region45: #{transformer_forward.15} parent=5 // pred_check
        %p350 = pneg %p349
      $region46: #{transformer_forward.15} parent=5 // pred_check_branch
        %352 = sbr.rel (%p350) target = $region48
      $region47: #{transformer_forward.15} parent=5 // pred_region
        // Predicated region
        $region49: #{transformer_forward.15} parent=47 // pred_check
          %p353 = pneg %p39
        $region50: #{transformer_forward.15} parent=47 // pred_check_branch
          %355 = sbr.rel (%p353) target = $region52
        $region51: #{transformer_forward.15} parent=47 // pred_region
          %p356 = scmp.lt.s32.totalorder %s19, 1
          %s357 = scalar_select %p356, %s19, 1
          %s358 = smul.addr %s357, 8
          %s359 = scalar_lea.vmem %s0, %s358
        $region52: #{transformer_forward.15} parent=47 // pred_fallthru
          _
        // Predicated region
        $region53: #{transformer_forward.15} parent=47 // pred_check
          %p360 = pneg %p65
        $region54: #{transformer_forward.15} parent=47 // pred_check_branch
          %362 = sbr.rel (%p360) target = $region56
        $region55: #{transformer_forward.15} parent=47 // pred_region
          %p363 = scmp.lt.s32.totalorder %s19, 1
          %s364 = scalar_select %p363, %s19, 1
          %s365 = smul.addr %s364, 8
          %s366 = scalar_lea.vmem %s1, %s365
        $region56: #{transformer_forward.15} parent=47 // pred_fallthru
          _
      $region48: #{transformer_forward.15} parent=5 // pred_fallthru
        _
      %p367 = scmp.le.s32.totalorder 1, %s19
      %p368 = scmp.lt.s32.totalorder %s19, 3
      %p369 = pnand %p367, %p368
      %p370 = pneg %p369
      // Predicated region
      $region57: #{transformer_forward.15} parent=5 // pred_check
        _
      $region58: #{transformer_forward.15} parent=5 // pred_check_branch
        %372 = sbr.rel (%p369) target = $region60
      $region59: #{transformer_forward.15} parent=5 // pred_region
        %s373 = ssub.s32 %s19, 1
        // Predicated region
        $region61: #{transformer_forward.15} parent=59 // pred_check
          %p374 = pneg %p113
        $region62: #{transformer_forward.15} parent=59 // pred_check_branch
          %376 = sbr.rel (%p374) target = $region64
        $region63: #{transformer_forward.15} parent=59 // pred_region
          %378 = dma.done [#allocation4], 16
        $region64: #{transformer_forward.15} parent=59 // pred_fallthru
          _
        // Predicated region
        $region65: #{transformer_forward.15} parent=59 // pred_check
          %p379 = pneg %p155
        $region66: #{transformer_forward.15} parent=59 // pred_check_branch
          %381 = sbr.rel (%p379) target = $region68
        $region67: #{transformer_forward.15} parent=59 // pred_region
          %383 = dma.done [#allocation6], 16
        $region68: #{transformer_forward.15} parent=59 // pred_fallthru
          _
        // Predicated region
        $region69: #{transformer_forward.15} parent=59 // pred_check
          %p384 = pneg %p197
        $region70: #{transformer_forward.15} parent=59 // pred_check_branch
          %386 = sbr.rel (%p384) target = $region72
        $region71: #{transformer_forward.15} parent=59 // pred_region
          %388 = dma.done [#allocation6], 16
        $region72: #{transformer_forward.15} parent=59 // pred_fallthru
          _
        // Predicated region
        $region73: #{transformer_forward.15} parent=59 // pred_check
          %p389 = pneg %p218
        $region74: #{transformer_forward.15} parent=59 // pred_check_branch
          %391 = sbr.rel (%p389) target = $region76
        $region75: #{transformer_forward.15} parent=59 // pred_region
          %393 = dma.done [#allocation9], 16
        $region76: #{transformer_forward.15} parent=59 // pred_fallthru
          _
        // Predicated region
        $region77: #{transformer_forward.15} parent=59 // pred_check
          %p394 = pneg %p239
        $region78: #{transformer_forward.15} parent=59 // pred_check_branch
          %396 = sbr.rel (%p394) target = $region80
        $region79: #{transformer_forward.15} parent=59 // pred_region
          %398 = dma.done [#allocation9], 16
        $region80: #{transformer_forward.15} parent=59 // pred_fallthru
          _
        %p399 = scmp.lt.s32.totalorder %s24, 1
        %s400 = scalar_select %p399, %s24, 1
        %s401 = smul.addr %s400, 8
        %s402 = scalar_lea.vmem %s0, %s401
        %p403 = pneg %p45
        %p404 = pneg %p42
        %p405 = scmp.lt.s32.totalorder %s24, 1
        %s406 = scalar_select %p405, %s24, 1
        %s407 = smul.addr %s406, 8
        %s408 = scalar_lea.vmem %s1, %s407
        %p409 = pneg %p71
        %p410 = pneg %p68
        %p411 = pneg %p92
        %p412 = pneg %p89
        %p413 = pneg %p113
        %p414 = pneg %p110
        %p415 = pneg %p134
        %p416 = pneg %p131
        %p417 = pneg %p155
        %p418 = pneg %p152
        %p419 = pneg %p176
        %p420 = pneg %p173
        %p421 = pneg %p197
        %p422 = pneg %p194
        %p423 = pneg %p218
        %p424 = pneg %p215
        %p425 = pneg %p239
        %p426 = pneg %p236
        %p427 = pneg %p265
        %p428 = pneg %p262
        %p429 = scmp.lt.s32.totalorder %s24, 1
        %s430 = scalar_select %p429, %s24, 1
        %s431 = smul.addr %s430, 8
        %s432 = scalar_lea.vmem %s10, %s431
        %p433 = scmp.lt.s32.totalorder %s24, 1
        %s434 = scalar_select %p433, %s24, 1
        %s435 = smul.addr %s434, 8
        %s436 = scalar_lea.vmem %s0, %s435
        %p437 = scmp.lt.s32.totalorder %s24, 1
        %s438 = scalar_select %p437, %s24, 1
        %s439 = smul.addr %s438, 8
        %s440 = scalar_lea.vmem %s1, %s439
        %p441 = scmp.lt.s32.totalorder %s24, 1
        %s442 = scalar_select %p441, %s24, 1
        %s443 = smul.addr %s442, 8
        %s444 = scalar_lea.vmem %s10, %s443
        %v446 = vld [vmem:[%s436] sm:$0xff]
        %v447 = vld [vmem:[%s440] sm:$0xff]
        %v448 = vpack.c.bf16 %v446, %v446
        %v449 = vld [vmem:[%s2] sm:$0xf]
        %v450 = vld [vmem:[%s2 + $0x4] sm:$0xf]
        %v451 = vld [vmem:[%s2 + $0x8] sm:$0xf]
        %v452 = vld [vmem:[%s2 + $0xc] sm:$0xf]
        %v453 = vld [vmem:[#allocation3] sm:$0x1]
        %v455 = vperm.slane %v453, 0
        %v461 = vunpack.c.l.b16 %v449
        %v462 = vunpack.c.l.b16 %v450
        %v463 = vunpack.c.l.b16 %v451
        %v464 = vunpack.c.l.b16 %v452
        %v465 = vpack.c.b16 %v462, %v461
        %v466 = vpack.c.b16 %v464, %v463
        %vm469 = vcmask 261120
        %v471 = vsel %vm469, %v448, 0
        %473 = vmatpush.bf16.msra.mxu0 0
        %474 = vmatpush.bf16.msra.mxu0 0
        %475 = vmatpush.bf16.msra.mxu0 0
        %476 = vmatpush.bf16.msra.mxu0 0
        %477 = vmatpush.bf16.msra.mxu0 0
        %478 = vmatpush.bf16.msra.mxu0 0
        %479 = vmatpush.bf16.msra.mxu0 %v466
        %480 = vmatpush.bf16.msra.mxu0 %v465
        %481 = vmatmul.bf16.gmra.mxu0 %v471
        %v482 = vpop.f32.mrf.mxu0
        %v483 = vadd.f32 %v455, %v482
        %v484 = vpop.f32.mrf.mxu0
        %485 = vdwg.mxu0
        %v486 = vpack.c.bf16 %v447, %v447
        %v487 = vld [vmem:[%s4] sm:$0xf]
        %v488 = vld [vmem:[%s4 + $0x4] sm:$0xf]
        %v489 = vld [vmem:[%s4 + $0x8] sm:$0xf]
        %v490 = vld [vmem:[%s4 + $0xc] sm:$0xf]
        %v491 = vld [vmem:[#allocation5] sm:$0x1]
        %v493 = vperm.slane %v491, 0
        %v499 = vunpack.c.l.b16 %v487
        %v500 = vunpack.c.l.b16 %v488
        %v501 = vunpack.c.l.b16 %v489
        %v502 = vunpack.c.l.b16 %v490
        %v503 = vpack.c.b16 %v500, %v499
        %v504 = vpack.c.b16 %v502, %v501
        %v508 = vsel %vm469, %v486, 0
        %510 = vmatpush.bf16.msra.mxu0 0
        %511 = vmatpush.bf16.msra.mxu0 0
        %512 = vmatpush.bf16.msra.mxu0 0
        %513 = vmatpush.bf16.msra.mxu0 0
        %514 = vmatpush.bf16.msra.mxu0 0
        %515 = vmatpush.bf16.msra.mxu0 0
        %516 = vmatpush.bf16.msra.mxu0 %v504
        %517 = vmatpush.bf16.msra.mxu0 %v503
        %518 = vmatmul.bf16.gmra.mxu0 %v508
        %v519 = vpop.f32.mrf.mxu0
        %v520 = vadd.f32 %v493, %v519
        %v521 = vpop.f32.mrf.mxu0
        %522 = vdwg.mxu0
        %v523 = vlaneseq
        %v524 = vshrl.u32 %v523, 7
        %v525 = vlaneseq
        %v526 = vand.u32 %v525, 127
        %vm527 = vcmp.ge.s32.totalorder %v524, %v526
        %v528 = vsel %vm527, 0.0, -1e+09
        %vm529 = vcmask 64512
        %v531 = vsel %vm529, %v483, 0
        %v534 = vsel %vm529, %v520, 0
        %536 = vmatpush.xpose.msra.mxu0 0.0
        %537 = vmatpush.xpose.msra.mxu0 0.0
        %538 = vmatpush.xpose.msra.mxu0 0.0
        %539 = vmatpush.xpose.msra.mxu0 0.0
        %540 = vmatpush.xpose.msra.mxu0 0.0
        %541 = vmatpush.xpose.msra.mxu0 0.0
        %542 = vmatpush.xpose.msra.mxu0 0.0
        %543 = vmatpush.xpose.msra.mxu0 0.0
        %544 = vmatpush.xpose.msra.mxu0 0.0
        %545 = vmatpush.xpose.msra.mxu0 0.0
        %546 = vmatpush.xpose.msra.mxu0 0.0
        %547 = vmatpush.xpose.msra.mxu0 0.0
        %548 = vmatpush.xpose.msra.mxu0 0.0
        %549 = vmatpush.xpose.msra.mxu0 0.0
        %550 = vmatpush.xpose.msra.mxu0 0.0
        %551 = vmatpush.xpose.msra.mxu0 %v534
        %552 = vmatmul.f32.gmra.mxu0 %v531
        %v553 = vpop.f32.mrf.mxu0
        %v554 = vadd.f32 0.0, %v553
        %555 = vdwg.mxu0
        %v556 = vmul.f32 %v554, 0.35355338
        %v557 = vadd.f32 %v556, %v528
        %v558 = vsel %vm529, %v557, -inf
        %559 = vmax.xlane.f32.xlu0 %v558
        %v560 = vpop.xlane.xlu0 %559
        %v561 = vsub.f32 %v557, %v560
        %v562 = vmul.f32 %v561, 1.442695
        %v563 = vpow.pop %v562
        %v564 = vsel %vm529, %v563, 0.0
        %565 = vadd.xlane.f32.xlu0 %v564
        %v566 = vpop.xlane.xlu0 %565
        %v567 = vrcp.pop %v566
        %v568 = vmul.f32 %v563, %v567
        %569 = vrot.lane.b32.xlu0 %v520, 96
        %v570 = vpop.permute.xlu0 %569
        %v573 = vsel %vm529, %v568, 0
        %575 = vmatpush.msra.mxu0 0.0
        %576 = vmatpush.msra.mxu0 0.0
        %577 = vmatpush.msra.mxu0 0.0
        %578 = vmatpush.msra.mxu0 0.0
        %579 = vmatpush.msra.mxu0 0.0
        %580 = vmatpush.msra.mxu0 0.0
        %581 = vmatpush.msra.mxu0 0.0
        %582 = vmatpush.msra.mxu0 0.0
        %583 = vmatpush.msra.mxu0 0.0
        %584 = vmatpush.msra.mxu0 0.0
        %585 = vmatpush.msra.mxu0 0.0
        %586 = vmatpush.msra.mxu0 0.0
        %587 = vmatpush.msra.mxu0 0.0
        %588 = vmatpush.msra.mxu0 0.0
        %589 = vmatpush.msra.mxu0 0.0
        %590 = vmatpush.msra.mxu0 %v570
        %591 = vmatmul.f32.gmra.mxu0 %v573
        %v592 = vpop.f32.mrf.mxu0
        %v593 = vadd.f32 0.0, %v592
        %594 = vdwg.mxu0
        %595 = vst.msk [vmem:[#allocation2] sm:$0xff] %vm529, %v593
        %596 = vrot.lane.b32.xlu0 %v483, 120
        %v597 = vpop.permute.xlu0 %596
        %598 = vrot.lane.b32.xlu0 %v520, 120
        %v599 = vpop.permute.xlu0 %598
        %v600 = vsel %vm529, %v597, 0
        %v602 = vsel %vm529, %v599, 0
        %604 = vmatpush.xpose.msra.mxu0 0.0
        %605 = vmatpush.xpose.msra.mxu0 0.0
        %606 = vmatpush.xpose.msra.mxu0 0.0
        %607 = vmatpush.xpose.msra.mxu0 0.0
        %608 = vmatpush.xpose.msra.mxu0 0.0
        %609 = vmatpush.xpose.msra.mxu0 0.0
        %610 = vmatpush.xpose.msra.mxu0 0.0
        %611 = vmatpush.xpose.msra.mxu0 0.0
        %612 = vmatpush.xpose.msra.mxu0 0.0
        %613 = vmatpush.xpose.msra.mxu0 0.0
        %614 = vmatpush.xpose.msra.mxu0 0.0
        %615 = vmatpush.xpose.msra.mxu0 0.0
        %616 = vmatpush.xpose.msra.mxu0 0.0
        %617 = vmatpush.xpose.msra.mxu0 0.0
        %618 = vmatpush.xpose.msra.mxu0 0.0
        %619 = vmatpush.xpose.msra.mxu0 %v602
        %620 = vmatmul.f32.gmra.mxu0 %v600
        %v621 = vpop.f32.mrf.mxu0
        %v622 = vadd.f32 0.0, %v621
        %623 = vdwg.mxu0
        %v624 = vmul.f32 %v622, 0.35355338
        %v625 = vadd.f32 %v624, %v528
        %v626 = vsel %vm529, %v625, -inf
        %627 = vmax.xlane.f32.xlu0 %v626
        %v628 = vpop.xlane.xlu0 %627
        %v629 = vsub.f32 %v625, %v628
        %v630 = vmul.f32 %v629, 1.442695
        %v631 = vpow.pop %v630
        %v632 = vsel %vm529, %v631, 0.0
        %633 = vadd.xlane.f32.xlu0 %v632
        %v634 = vpop.xlane.xlu0 %633
        %v635 = vrcp.pop %v634
        %v636 = vmul.f32 %v631, %v635
        %637 = vrot.lane.b32.xlu0 %v520, 88
        %v638 = vpop.permute.xlu0 %637
        %v641 = vsel %vm529, %v636, 0
        %643 = vmatpush.msra.mxu0 0.0
        %644 = vmatpush.msra.mxu0 0.0
        %645 = vmatpush.msra.mxu0 0.0
        %646 = vmatpush.msra.mxu0 0.0
        %647 = vmatpush.msra.mxu0 0.0
        %648 = vmatpush.msra.mxu0 0.0
        %649 = vmatpush.msra.mxu0 0.0
        %650 = vmatpush.msra.mxu0 0.0
        %651 = vmatpush.msra.mxu0 0.0
        %652 = vmatpush.msra.mxu0 0.0
        %653 = vmatpush.msra.mxu0 0.0
        %654 = vmatpush.msra.mxu0 0.0
        %655 = vmatpush.msra.mxu0 0.0
        %656 = vmatpush.msra.mxu0 0.0
        %657 = vmatpush.msra.mxu0 0.0
        %658 = vmatpush.msra.mxu0 %v638
        %659 = vmatmul.f32.gmra.mxu0 %v641
        %v660 = vpop.f32.mrf.mxu0
        %v661 = vadd.f32 0.0, %v660
        %662 = vdwg.mxu0
        %664 = vrot.lane.b32.xlu0 %v661, 8
        %v665 = vpop.permute.xlu0 %664
        %vm667 = vcmask 130112
        %668 = vst.msk [vmem:[#allocation2] sm:$0xff] %vm667, %v665
        %669 = vrot.lane.b32.xlu0 %v483, 112
        %v670 = vpop.permute.xlu0 %669
        %671 = vrot.lane.b32.xlu0 %v520, 112
        %v672 = vpop.permute.xlu0 %671
        %v673 = vsel %vm529, %v670, 0
        %v675 = vsel %vm529, %v672, 0
        %677 = vmatpush.xpose.msra.mxu0 0.0
        %678 = vmatpush.xpose.msra.mxu0 0.0
        %679 = vmatpush.xpose.msra.mxu0 0.0
        %680 = vmatpush.xpose.msra.mxu0 0.0
        %681 = vmatpush.xpose.msra.mxu0 0.0
        %682 = vmatpush.xpose.msra.mxu0 0.0
        %683 = vmatpush.xpose.msra.mxu0 0.0
        %684 = vmatpush.xpose.msra.mxu0 0.0
        %685 = vmatpush.xpose.msra.mxu0 0.0
        %686 = vmatpush.xpose.msra.mxu0 0.0
        %687 = vmatpush.xpose.msra.mxu0 0.0
        %688 = vmatpush.xpose.msra.mxu0 0.0
        %689 = vmatpush.xpose.msra.mxu0 0.0
        %690 = vmatpush.xpose.msra.mxu0 0.0
        %691 = vmatpush.xpose.msra.mxu0 0.0
        %692 = vmatpush.xpose.msra.mxu0 %v675
        %693 = vmatmul.f32.gmra.mxu0 %v673
        %v694 = vpop.f32.mrf.mxu0
        %v695 = vadd.f32 0.0, %v694
        %696 = vdwg.mxu0
        %v697 = vmul.f32 %v695, 0.35355338
        %v698 = vadd.f32 %v697, %v528
        %v699 = vsel %vm529, %v698, -inf
        %700 = vmax.xlane.f32.xlu0 %v699
        %v701 = vpop.xlane.xlu0 %700
        %v702 = vsub.f32 %v698, %v701
        %v703 = vmul.f32 %v702, 1.442695
        %v704 = vpow.pop %v703
        %v705 = vsel %vm529, %v704, 0.0
        %706 = vadd.xlane.f32.xlu0 %v705
        %v707 = vpop.xlane.xlu0 %706
        %v708 = vrcp.pop %v707
        %v709 = vmul.f32 %v704, %v708
        %710 = vrot.lane.b32.xlu0 %v520, 80
        %v711 = vpop.permute.xlu0 %710
        %v714 = vsel %vm529, %v709, 0
        %716 = vmatpush.msra.mxu0 0.0
        %717 = vmatpush.msra.mxu0 0.0
        %718 = vmatpush.msra.mxu0 0.0
        %719 = vmatpush.msra.mxu0 0.0
        %720 = vmatpush.msra.mxu0 0.0
        %721 = vmatpush.msra.mxu0 0.0
        %722 = vmatpush.msra.mxu0 0.0
        %723 = vmatpush.msra.mxu0 0.0
        %724 = vmatpush.msra.mxu0 0.0
        %725 = vmatpush.msra.mxu0 0.0
        %726 = vmatpush.msra.mxu0 0.0
        %727 = vmatpush.msra.mxu0 0.0
        %728 = vmatpush.msra.mxu0 0.0
        %729 = vmatpush.msra.mxu0 0.0
        %730 = vmatpush.msra.mxu0 0.0
        %731 = vmatpush.msra.mxu0 %v711
        %732 = vmatmul.f32.gmra.mxu0 %v714
        %v733 = vpop.f32.mrf.mxu0
        %v734 = vadd.f32 0.0, %v733
        %735 = vdwg.mxu0
        %737 = vrot.lane.b32.xlu0 %v734, 16
        %v738 = vpop.permute.xlu0 %737
        %vm740 = vcmask 195712
        %741 = vst.msk [vmem:[#allocation2] sm:$0xff] %vm740, %v738
        %742 = vrot.lane.b32.xlu0 %v483, 104
        %v743 = vpop.permute.xlu0 %742
        %744 = vrot.lane.b32.xlu0 %v520, 104
        %v745 = vpop.permute.xlu0 %744
        %v746 = vsel %vm529, %v743, 0
        %v748 = vsel %vm529, %v745, 0
        %750 = vmatpush.xpose.msra.mxu0 0.0
        %751 = vmatpush.xpose.msra.mxu0 0.0
        %752 = vmatpush.xpose.msra.mxu0 0.0
        %753 = vmatpush.xpose.msra.mxu0 0.0
        %754 = vmatpush.xpose.msra.mxu0 0.0
        %755 = vmatpush.xpose.msra.mxu0 0.0
        %756 = vmatpush.xpose.msra.mxu0 0.0
        %757 = vmatpush.xpose.msra.mxu0 0.0
        %758 = vmatpush.xpose.msra.mxu0 0.0
        %759 = vmatpush.xpose.msra.mxu0 0.0
        %760 = vmatpush.xpose.msra.mxu0 0.0
        %761 = vmatpush.xpose.msra.mxu0 0.0
        %762 = vmatpush.xpose.msra.mxu0 0.0
        %763 = vmatpush.xpose.msra.mxu0 0.0
        %764 = vmatpush.xpose.msra.mxu0 0.0
        %765 = vmatpush.xpose.msra.mxu0 %v748
        %766 = vmatmul.f32.gmra.mxu0 %v746
        %v767 = vpop.f32.mrf.mxu0
        %v768 = vadd.f32 0.0, %v767
        %769 = vdwg.mxu0
        %v770 = vmul.f32 %v768, 0.35355338
        %v771 = vadd.f32 %v770, %v528
        %v772 = vsel %vm529, %v771, -inf
        %773 = vmax.xlane.f32.xlu0 %v772
        %v774 = vpop.xlane.xlu0 %773
        %v775 = vsub.f32 %v771, %v774
        %v776 = vmul.f32 %v775, 1.442695
        %v777 = vpow.pop %v776
        %v778 = vsel %vm529, %v777, 0.0
        %779 = vadd.xlane.f32.xlu0 %v778
        %v780 = vpop.xlane.xlu0 %779
        %v781 = vrcp.pop %v780
        %v782 = vmul.f32 %v777, %v781
        %783 = vrot.lane.b32.xlu0 %v520, 72
        %v784 = vpop.permute.xlu0 %783
        %v787 = vsel %vm529, %v782, 0
        %789 = vmatpush.msra.mxu0 0.0
        %790 = vmatpush.msra.mxu0 0.0
        %791 = vmatpush.msra.mxu0 0.0
        %792 = vmatpush.msra.mxu0 0.0
        %793 = vmatpush.msra.mxu0 0.0
        %794 = vmatpush.msra.mxu0 0.0
        %795 = vmatpush.msra.mxu0 0.0
        %796 = vmatpush.msra.mxu0 0.0
        %797 = vmatpush.msra.mxu0 0.0
        %798 = vmatpush.msra.mxu0 0.0
        %799 = vmatpush.msra.mxu0 0.0
        %800 = vmatpush.msra.mxu0 0.0
        %801 = vmatpush.msra.mxu0 0.0
        %802 = vmatpush.msra.mxu0 0.0
        %803 = vmatpush.msra.mxu0 0.0
        %804 = vmatpush.msra.mxu0 %v784
        %805 = vmatmul.f32.gmra.mxu0 %v787
        %v806 = vpop.f32.mrf.mxu0
        %v807 = vadd.f32 0.0, %v806
        %808 = vdwg.mxu0
        %810 = vrot.lane.b32.xlu0 %v807, 24
        %v811 = vpop.permute.xlu0 %810
        %vm813 = vcmask 261312
        %814 = vst.msk [vmem:[#allocation2] sm:$0xff] %vm813, %v811
        %v815 = vld [vmem:[#allocation2] sm:$0xff]
        %v816 = vpack.c.bf16 %v815, %v815
        %v817 = vld [vmem:[%s6] sm:$0xf]
        %v818 = vld [vmem:[%s6 + $0x4] sm:$0xf]
        %v819 = vld [vmem:[%s6 + $0x8] sm:$0xf]
        %v820 = vld [vmem:[%s6 + $0xc] sm:$0xf]
        %v821 = vld [vmem:[#allocation7] sm:$0x1]
        %v823 = vperm.slane %v821, 0
        %v829 = vunpack.c.l.b16 %v817
        %v830 = vunpack.c.l.b16 %v818
        %v831 = vunpack.c.l.b16 %v819
        %v832 = vunpack.c.l.b16 %v820
        %v833 = vpack.c.b16 %v830, %v829
        %v834 = vpack.c.b16 %v832, %v831
        %v838 = vsel %vm469, %v816, 0
        %840 = vmatpush.bf16.msra.mxu0 0
        %841 = vmatpush.bf16.msra.mxu0 0
        %842 = vmatpush.bf16.msra.mxu0 0
        %843 = vmatpush.bf16.msra.mxu0 0
        %844 = vmatpush.bf16.msra.mxu0 0
        %845 = vmatpush.bf16.msra.mxu0 0
        %846 = vmatpush.bf16.msra.mxu0 %v834
        %847 = vmatpush.bf16.msra.mxu0 %v833
        %848 = vmatmul.bf16.gmra.mxu0 %v838
        %v849 = vpop.f32.mrf.mxu0
        %v850 = vadd.f32 %v823, %v849
        %v851 = vpop.f32.mrf.mxu0
        %852 = vdwg.mxu0
        %v853 = vadd.f32 %v446, %v850
        %v854 = vsel %vm469, %v853, 0.0
        %855 = vadd.xlane.f32.xlu0 %v854
        %v856 = vpop.xlane.xlu0 %855
        %v857 = vrcp.pop 32.0
        %v858 = vmul.f32 32.0, %v857
        %v859 = vsub.f32 1.0, %v858
        %v860 = vmul.f32 %v857, %v859
        %v861 = vadd.f32 %v857, %v860
        %vm862 = vweird.f32 %v857
        %v863 = vsel %vm862, %v857, %v861
        %v864 = vmul.f32 %v856, %v863
        %v865 = vsub.f32 %v853, %v864
        %v866 = vmul.f32 %v865, %v865
        %v867 = vsel %vm469, %v866, 0.0
        %868 = vadd.xlane.f32.xlu0 %v867
        %v869 = vpop.xlane.xlu0 %868
        %v870 = vmul.f32 %v869, %v863
        %v871 = vadd.f32 %v870, 1e-05
        %v872 = vrsqrt.pop %v871
        %v873 = vmul.f32 %v872, %v871
        %v874 = vmul.f32 %v873, %v872
        %v875 = vmul.f32 0.5, %v874
        %v876 = vsub.f32 1.5, %v875
        %v877 = vmul.f32 %v872, %v876
        %vm878 = vweird.f32 %v871
        %vm879 = vweird.f32 %v872
        %vm880 = vmor %vm878, %vm879
        %v881 = vsel %vm880, %v872, %v877
        %v882 = vmul.f32 %v865, %v881
        %v883 = vld [vmem:[#allocation8] sm:$0x1]
        %v885 = vperm.slane %v883, 0
        %v887 = vmul.f32 %v882, %v885
        %v888 = vld [vmem:[#allocation10] sm:$0x1]
        %v890 = vperm.slane %v888, 0
        %v892 = vadd.f32 %v887, %v890
        %893 = vst.msk [vmem:[%s444] sm:$0xff] %vm469, %v892
        %p894 = scmp.lt.s32.totalorder %s24, 1
        %s895 = scalar_select %p894, %s24, 1
        %s896 = smul.addr %s895, 8
        %s897 = scalar_lea.vmem %s10, %s896
        // Predicated region
        $region81: #{transformer_forward.15} parent=59 // pred_check
          %p898 = pneg %p262
        $region82: #{transformer_forward.15} parent=59 // pred_check_branch
          %900 = sbr.rel (%p898) target = $region84
        $region83: #{transformer_forward.15} parent=59 // pred_region
          _
        $region84: #{transformer_forward.15} parent=59 // pred_fallthru
          _
      $region60: #{transformer_forward.15} parent=5 // pred_fallthru
        _
      %p901 = scmp.le.s32.totalorder 2, %s19
      // Predicated region
      $region85: #{transformer_forward.15} parent=5 // pred_check
        %p902 = pneg %p901
      $region86: #{transformer_forward.15} parent=5 // pred_check_branch
        %904 = sbr.rel (%p902) target = $region88
      $region87: #{transformer_forward.15} parent=5 // pred_region
        %s905 = ssub.s32 %s19, 2
        // Predicated region
        $region89: #{transformer_forward.15} parent=87 // pred_check
          %p906 = pneg %p268
        $region90: #{transformer_forward.15} parent=87 // pred_check_branch
          %908 = sbr.rel (%p906) target = $region92
        $region91: #{transformer_forward.15} parent=87 // pred_region
          %p909 = scmp.lt.s32.totalorder %s25, 1
          %s910 = scalar_select %p909, %s25, 1
          %s911 = smul.addr %s910, 8
          %s912 = scalar_lea.vmem %s10, %s911
        $region92: #{transformer_forward.15} parent=87 // pred_fallthru
          _
      $region88: #{transformer_forward.15} parent=5 // pred_fallthru
        _
    $region6: #{transformer_forward.15} parent=1 // loop_footer
      %s23 = sadd.s32 1, %s19
    $region7: #{transformer_forward.15} parent=1 // loop_footer_branch
      %18 = sbr.rel target = $region3
    $region8: #{transformer_forward.15} parent=1 // loop_exit
      _
    %913 = vsyncpa [#allocation4], 1
    %s914 = scalar_lea.sflag [#allocation4], 1
    %915 = vsyncpa %s914, 1
    %916 = vsyncpa [#allocation6], 1
    %917 = vsyncpa [#allocation9], 1

// kernel: transformer_forward.17
$region0: #{transformer_forward.17}
  #allocation0 [shape = 'u32[]', space=smem, size = 0x4, offset = 0x4, fixed_abs, tag = 'smem constant byte address 0x4 - core index']
  #allocation1 [shape = 'u32[72,128]{1,0:T(1,128)}', space=vmem, size = 0x9000, scoped, tag = 'internal scratch']
  %s0 = inlined_call_operand.vmem [shape: f32[2,8,32], index: 0, kind: input, shape index: {}]
  %s1 = inlined_call_operand.vmem [shape: bf16[32,64], index: 1, kind: input, shape index: {}]
  %s2 = inlined_call_operand.hbm [shape: f32[1,64], index: 2, kind: input, shape index: {}]
  %s3 = inlined_call_operand.vmem [shape: bf16[64,32], index: 3, kind: input, shape index: {}]
  %s4 = inlined_call_operand.hbm [shape: f32[1,32], index: 4, kind: input, shape index: {}]
  %s5 = inlined_call_operand.hbm [shape: f32[1,32], index: 5, kind: input, shape index: {}]
  %s6 = inlined_call_operand.hbm [shape: f32[1,32], index: 6, kind: input, shape index: {}]
  %s7 = inlined_call_operand.vmem [shape: f32[2,8,32], index: 7, kind: output, shape index: {}]
  %s8 = sld [smem:[#allocation0]]
  $region77: #{transformer_forward.17} parent=0
    _
  %s10 = ssub.s32 1, %s8
  %s11 = scalar_select 0, %s10, %s8
  $region1: #{transformer_forward.17} parent=0
    #allocation2 [shape = 'u8[512]{0}', space=vmem, size = 0x400, scoped, tag = 'input window, operand 2, single buffered']
    #allocation3 [shape = 's32[2]{0}', space=sflag, size = 0x8, scoped, tag = 'scoped memory for transformer_forward.17']
    #allocation4 [shape = 'u8[512]{0}', space=vmem, size = 0x400, scoped, tag = 'input window, operand 4, single buffered']
    #allocation5 [shape = 's32[1]{0}', space=sflag, size = 0x4, scoped, tag = 'scoped memory for transformer_forward.17']
    #allocation6 [shape = 'u8[512]{0}', space=vmem, size = 0x400, scoped, tag = 'input window, operand 5, single buffered']
    #allocation7 [shape = 'u8[512]{0}', space=vmem, size = 0x400, scoped, tag = 'input window, operand 6, single buffered']
    #allocation8 [shape = 's32[1]{0}', space=sflag, size = 0x4, scoped, tag = 'scoped memory for transformer_forward.17']
    %12 = vsyncpa [#allocation3], 0
    %13 = vsyncpa [#allocation5], 0
    %14 = vsyncpa [#allocation8], 0
    loop: start=0, step=1, limit=4
    $region2: #{transformer_forward.17} parent=1 // loop_pre_header
      _
    $region3: #{transformer_forward.17} parent=1 // loop_header
      %s16 = sphi 0, %s20
      %p17 = scmp.ge.s32.totalorder %s16, 4
      %s26 = sphi 0, %s28
      %s29 = sphi 0, %s26
      %s30 = sphi 0, %s29
      %s46 = sphi 0, %s30
      %s50 = sphi 0, %s50
      %s52 = sphi 0, %s50
      %s53 = sphi 0, %s52
      %s67 = sphi 0, %s53
      %s71 = sphi 0, %s71
      %s73 = sphi 0, %s71
      %s74 = sphi 0, %s73
      %s88 = sphi 0, %s74
      %s92 = sphi 0, %s92
      %s94 = sphi 0, %s92
      %s95 = sphi 0, %s94
      %s109 = sphi 0, %s95
      %s113 = sphi 0, %s113
      %s115 = sphi 0, %s113
      %s116 = sphi 0, %s115
      %s130 = sphi 0, %s116
      %s134 = sphi 0, %s134
      %s136 = sphi 0, %s134
      %s137 = sphi 0, %s136
      %s151 = sphi 0, %s137
      %s155 = sphi 0, %s155
      %s157 = sphi 0, %s155
      %s158 = sphi 0, %s157
      %s172 = sphi 0, %s158
      %s178 = sphi 0, %s180
      %s181 = sphi 0, %s178
      %s182 = sphi 0, %s181
      %s198 = sphi 0, %s182
    $region4: #{transformer_forward.17} parent=1 // loop_header_branch
      %19 = sbr.rel (%p17) target = $region8
    $region5: #{transformer_forward.17} parent=1 // loop_body
      %s21 = ssub.s32 %s16, 1
      %s22 = ssub.s32 %s16, 2
      %s23 = sadd.s32 %s16, 1
      %s24 = ssub.s32 %s16, %s23
      %p25 = scmp.eq.s32.totalorder %s24, 0
      %s27 = sadd.s32 %s26, 1
      %s28 = scalar_select %p25, %s26, %s27
      %p31 = pneg %p25
      %p32 = scmp.eq.s32.totalorder %s16, 1
      %p33 = por %p31, %p32
      %p34 = scmp.ne.s32.totalorder %s26, %s29
      %p35 = scmp.eq.s32.totalorder %s16, 0
      %p36 = por %p34, %p35
      %p37 = scmp.ne.s32.totalorder %s26, %s29
      %p38 = scmp.eq.s32.totalorder %s21, 1
      %p39 = por %p37, %p38
      %p40 = scmp.ne.s32.totalorder %s29, %s30
      %p41 = scmp.eq.s32.totalorder %s21, 0
      %p42 = por %p40, %p41
      %p43 = scmp.ne.s32.totalorder %s29, %s30
      %p44 = scmp.eq.s32.totalorder %s22, 1
      %p45 = por %p43, %p44
      %p47 = scmp.ne.s32.totalorder %s30, %s46
      %p48 = scmp.eq.s32.totalorder %s22, 0
      %p49 = por %p47, %p48
      %s51 = sadd.s32 %s50, 1
      %p54 = scmp.eq.s32.totalorder %s16, 1
      %p55 = scmp.ne.s32.totalorder %s50, %s52
      %p56 = scmp.eq.s32.totalorder %s16, 0
      %p57 = por %p55, %p56
      %p58 = scmp.ne.s32.totalorder %s50, %s52
      %p59 = scmp.eq.s32.totalorder %s21, 1
      %p60 = por %p58, %p59
      %p61 = scmp.ne.s32.totalorder %s52, %s53
      %p62 = scmp.eq.s32.totalorder %s21, 0
      %p63 = por %p61, %p62
      %p64 = scmp.ne.s32.totalorder %s52, %s53
      %p65 = scmp.eq.s32.totalorder %s22, 1
      %p66 = por %p64, %p65
      %p68 = scmp.ne.s32.totalorder %s53, %s67
      %p69 = scmp.eq.s32.totalorder %s22, 0
      %p70 = por %p68, %p69
      %s72 = sadd.s32 %s71, 1
      %p75 = scmp.eq.s32.totalorder %s16, 1
      %p76 = scmp.ne.s32.totalorder %s71, %s73
      %p77 = scmp.eq.s32.totalorder %s16, 0
      %p78 = por %p76, %p77
      %p79 = scmp.ne.s32.totalorder %s71, %s73
      %p80 = scmp.eq.s32.totalorder %s21, 1
      %p81 = por %p79, %p80
      %p82 = scmp.ne.s32.totalorder %s73, %s74
      %p83 = scmp.eq.s32.totalorder %s21, 0
      %p84 = por %p82, %p83
      %p85 = scmp.ne.s32.totalorder %s73, %s74
      %p86 = scmp.eq.s32.totalorder %s22, 1
      %p87 = por %p85, %p86
      %p89 = scmp.ne.s32.totalorder %s74, %s88
      %p90 = scmp.eq.s32.totalorder %s22, 0
      %p91 = por %p89, %p90
      %s93 = sadd.s32 %s92, 1
      %p96 = scmp.eq.s32.totalorder %s16, 1
      %p97 = scmp.ne.s32.totalorder %s92, %s94
      %p98 = scmp.eq.s32.totalorder %s16, 0
      %p99 = por %p97, %p98
      %p100 = scmp.ne.s32.totalorder %s92, %s94
      %p101 = scmp.eq.s32.totalorder %s21, 1
      %p102 = por %p100, %p101
      %p103 = scmp.ne.s32.totalorder %s94, %s95
      %p104 = scmp.eq.s32.totalorder %s21, 0
      %p105 = por %p103, %p104
      %p106 = scmp.ne.s32.totalorder %s94, %s95
      %p107 = scmp.eq.s32.totalorder %s22, 1
      %p108 = por %p106, %p107
      %p110 = scmp.ne.s32.totalorder %s95, %s109
      %p111 = scmp.eq.s32.totalorder %s22, 0
      %p112 = por %p110, %p111
      %s114 = sadd.s32 %s113, 1
      %p117 = scmp.eq.s32.totalorder %s16, 1
      %p118 = scmp.ne.s32.totalorder %s113, %s115
      %p119 = scmp.eq.s32.totalorder %s16, 0
      %p120 = por %p118, %p119
      %p121 = scmp.ne.s32.totalorder %s113, %s115
      %p122 = scmp.eq.s32.totalorder %s21, 1
      %p123 = por %p121, %p122
      %p124 = scmp.ne.s32.totalorder %s115, %s116
      %p125 = scmp.eq.s32.totalorder %s21, 0
      %p126 = por %p124, %p125
      %p127 = scmp.ne.s32.totalorder %s115, %s116
      %p128 = scmp.eq.s32.totalorder %s22, 1
      %p129 = por %p127, %p128
      %p131 = scmp.ne.s32.totalorder %s116, %s130
      %p132 = scmp.eq.s32.totalorder %s22, 0
      %p133 = por %p131, %p132
      %s135 = sadd.s32 %s134, 1
      %p138 = scmp.eq.s32.totalorder %s16, 1
      %p139 = scmp.ne.s32.totalorder %s134, %s136
      %p140 = scmp.eq.s32.totalorder %s16, 0
      %p141 = por %p139, %p140
      %p142 = scmp.ne.s32.totalorder %s134, %s136
      %p143 = scmp.eq.s32.totalorder %s21, 1
      %p144 = por %p142, %p143
      %p145 = scmp.ne.s32.totalorder %s136, %s137
      %p146 = scmp.eq.s32.totalorder %s21, 0
      %p147 = por %p145, %p146
      %p148 = scmp.ne.s32.totalorder %s136, %s137
      %p149 = scmp.eq.s32.totalorder %s22, 1
      %p150 = por %p148, %p149
      %p152 = scmp.ne.s32.totalorder %s137, %s151
      %p153 = scmp.eq.s32.totalorder %s22, 0
      %p154 = por %p152, %p153
      %s156 = sadd.s32 %s155, 1
      %p159 = scmp.eq.s32.totalorder %s16, 1
      %p160 = scmp.ne.s32.totalorder %s155, %s157
      %p161 = scmp.eq.s32.totalorder %s16, 0
      %p162 = por %p160, %p161
      %p163 = scmp.ne.s32.totalorder %s155, %s157
      %p164 = scmp.eq.s32.totalorder %s21, 1
      %p165 = por %p163, %p164
      %p166 = scmp.ne.s32.totalorder %s157, %s158
      %p167 = scmp.eq.s32.totalorder %s21, 0
      %p168 = por %p166, %p167
      %p169 = scmp.ne.s32.totalorder %s157, %s158
      %p170 = scmp.eq.s32.totalorder %s22, 1
      %p171 = por %p169, %p170
      %p173 = scmp.ne.s32.totalorder %s158, %s172
      %p174 = scmp.eq.s32.totalorder %s22, 0
      %p175 = por %p173, %p174
      %s176 = ssub.s32 %s16, %s23
      %p177 = scmp.eq.s32.totalorder %s176, 0
      %s179 = sadd.s32 %s178, 1
      %s180 = scalar_select %p177, %s178, %s179
      %p183 = pneg %p177
      %p184 = scmp.eq.s32.totalorder %s16, 1
      %p185 = por %p183, %p184
      %p186 = scmp.ne.s32.totalorder %s178, %s181
      %p187 = scmp.eq.s32.totalorder %s16, 0
      %p188 = por %p186, %p187
      %p189 = scmp.ne.s32.totalorder %s178, %s181
      %p190 = scmp.eq.s32.totalorder %s21, 1
      %p191 = por %p189, %p190
      %p192 = scmp.ne.s32.totalorder %s181, %s182
      %p193 = scmp.eq.s32.totalorder %s21, 0
      %p194 = por %p192, %p193
      %p195 = scmp.ne.s32.totalorder %s181, %s182
      %p196 = scmp.eq.s32.totalorder %s22, 1
      %p197 = por %p195, %p196
      %p199 = scmp.ne.s32.totalorder %s182, %s198
      %p200 = scmp.eq.s32.totalorder %s22, 0
      %p201 = por %p199, %p200
      %p202 = scmp.le.s32.totalorder 1, %s16
      %p203 = scmp.lt.s32.totalorder %s16, 3
      %p204 = pnand %p202, %p203
      %p205 = pneg %p204
      // Predicated region
      $region9: #{transformer_forward.17} parent=5 // pred_check
        _
      $region10: #{transformer_forward.17} parent=5 // pred_check_branch
        %207 = sbr.rel (%p204) target = $region12
      $region11: #{transformer_forward.17} parent=5 // pred_region
        %s208 = ssub.s32 %s16, 1
        // Predicated region
        $region13: #{transformer_forward.17} parent=11 // pred_check
          %p209 = pneg %p63
        $region14: #{transformer_forward.17} parent=11 // pred_check_branch
          %211 = sbr.rel (%p209) target = $region16
        $region15: #{transformer_forward.17} parent=11 // pred_region
          _
        $region16: #{transformer_forward.17} parent=11 // pred_fallthru
          _
        // Predicated region
        $region17: #{transformer_forward.17} parent=11 // pred_check
          %p212 = pneg %p84
        $region18: #{transformer_forward.17} parent=11 // pred_check_branch
          %214 = sbr.rel (%p212) target = $region20
        $region19: #{transformer_forward.17} parent=11 // pred_region
          %216 = vsyncadd [#allocation3], 0
          %s218 = sshll.u32 %s2, 4
          %s219 = int_to_ptr.hbm [resolvable:$true] %s218
          %s220 = sshll.u32 [#allocation2], 4
          %s221 = int_to_ptr.vmem [resolvable:$true] %s220
          %223 = dma.hbm_to_vmem [thread:$0]  %s219, 16, %s221, [#allocation3]
        $region20: #{transformer_forward.17} parent=11 // pred_fallthru
          _
        // Predicated region
        $region21: #{transformer_forward.17} parent=11 // pred_check
          %p224 = pneg %p105
        $region22: #{transformer_forward.17} parent=11 // pred_check_branch
          %226 = sbr.rel (%p224) target = $region24
        $region23: #{transformer_forward.17} parent=11 // pred_region
          _
        $region24: #{transformer_forward.17} parent=11 // pred_fallthru
          _
        // Predicated region
        $region25: #{transformer_forward.17} parent=11 // pred_check
          %p227 = pneg %p126
        $region26: #{transformer_forward.17} parent=11 // pred_check_branch
          %229 = sbr.rel (%p227) target = $region28
        $region27: #{transformer_forward.17} parent=11 // pred_region
          %231 = vsyncadd [#allocation5], 0
          %s233 = sshll.u32 %s4, 4
          %s234 = int_to_ptr.hbm [resolvable:$true] %s233
          %s235 = sshll.u32 [#allocation4], 4
          %s236 = int_to_ptr.vmem [resolvable:$true] %s235
          %238 = dma.hbm_to_vmem [thread:$0]  %s234, 16, %s236, [#allocation5]
        $region28: #{transformer_forward.17} parent=11 // pred_fallthru
          _
        // Predicated region
        $region29: #{transformer_forward.17} parent=11 // pred_check
          %p239 = pneg %p147
        $region30: #{transformer_forward.17} parent=11 // pred_check_branch
          %241 = sbr.rel (%p239) target = $region32
        $region31: #{transformer_forward.17} parent=11 // pred_region
          %243 = vsyncadd [#allocation5], 0
          %s245 = sshll.u32 %s5, 4
          %s246 = int_to_ptr.hbm [resolvable:$true] %s245
          %s247 = sshll.u32 [#allocation6], 4
          %s248 = int_to_ptr.vmem [resolvable:$true] %s247
          %250 = dma.hbm_to_vmem [thread:$0]  %s246, 16, %s248, [#allocation5]
        $region32: #{transformer_forward.17} parent=11 // pred_fallthru
          _
        // Predicated region
        $region33: #{transformer_forward.17} parent=11 // pred_check
          %p251 = pneg %p168
        $region34: #{transformer_forward.17} parent=11 // pred_check_branch
          %253 = sbr.rel (%p251) target = $region36
        $region35: #{transformer_forward.17} parent=11 // pred_region
          %255 = vsyncadd [#allocation8], 0
          %s257 = sshll.u32 %s6, 4
          %s258 = int_to_ptr.hbm [resolvable:$true] %s257
          %s259 = sshll.u32 [#allocation7], 4
          %s260 = int_to_ptr.vmem [resolvable:$true] %s259
          %262 = dma.hbm_to_vmem [thread:$0]  %s258, 16, %s260, [#allocation8]
        $region36: #{transformer_forward.17} parent=11 // pred_fallthru
          _
      $region12: #{transformer_forward.17} parent=5 // pred_fallthru
        _
      %p263 = scmp.lt.s32.totalorder %s16, 2
      // Predicated region
      $region37: #{transformer_forward.17} parent=5 // pred_check
        %p264 = pneg %p263
      $region38: #{transformer_forward.17} parent=5 // pred_check_branch
        %266 = sbr.rel (%p264) target = $region40
      $region39: #{transformer_forward.17} parent=5 // pred_region
        // Predicated region
        $region41: #{transformer_forward.17} parent=39 // pred_check
          %p267 = pneg %p36
        $region42: #{transformer_forward.17} parent=39 // pred_check_branch
          %269 = sbr.rel (%p267) target = $region44
        $region43: #{transformer_forward.17} parent=39 // pred_region
          %p270 = scmp.lt.s32.totalorder %s16, 1
          %s271 = scalar_select %p270, %s16, 1
          %s272 = smul.addr %s271, 8
          %s273 = scalar_lea.vmem %s0, %s272
        $region44: #{transformer_forward.17} parent=39 // pred_fallthru
          _
      $region40: #{transformer_forward.17} parent=5 // pred_fallthru
        _
      %p274 = scmp.le.s32.totalorder 1, %s16
      %p275 = scmp.lt.s32.totalorder %s16, 3
      %p276 = pnand %p274, %p275
      %p277 = pneg %p276
      // Predicated region
      $region45: #{transformer_forward.17} parent=5 // pred_check
        _
      $region46: #{transformer_forward.17} parent=5 // pred_check_branch
        %279 = sbr.rel (%p276) target = $region48
      $region47: #{transformer_forward.17} parent=5 // pred_region
        %s280 = ssub.s32 %s16, 1
        // Predicated region
        $region49: #{transformer_forward.17} parent=47 // pred_check
          %p281 = pneg %p84
        $region50: #{transformer_forward.17} parent=47 // pred_check_branch
          %283 = sbr.rel (%p281) target = $region52
        $region51: #{transformer_forward.17} parent=47 // pred_region
          %285 = dma.done [#allocation3], 16
        $region52: #{transformer_forward.17} parent=47 // pred_fallthru
          _
        // Predicated region
        $region53: #{transformer_forward.17} parent=47 // pred_check
          %p286 = pneg %p126
        $region54: #{transformer_forward.17} parent=47 // pred_check_branch
          %288 = sbr.rel (%p286) target = $region56
        $region55: #{transformer_forward.17} parent=47 // pred_region
          %290 = dma.done [#allocation5], 16
        $region56: #{transformer_forward.17} parent=47 // pred_fallthru
          _
        // Predicated region
        $region57: #{transformer_forward.17} parent=47 // pred_check
          %p291 = pneg %p147
        $region58: #{transformer_forward.17} parent=47 // pred_check_branch
          %293 = sbr.rel (%p291) target = $region60
        $region59: #{transformer_forward.17} parent=47 // pred_region
          %295 = dma.done [#allocation5], 16
        $region60: #{transformer_forward.17} parent=47 // pred_fallthru
          _
        // Predicated region
        $region61: #{transformer_forward.17} parent=47 // pred_check
          %p296 = pneg %p168
        $region62: #{transformer_forward.17} parent=47 // pred_check_branch
          %298 = sbr.rel (%p296) target = $region64
        $region63: #{transformer_forward.17} parent=47 // pred_region
          %300 = dma.done [#allocation8], 16
        $region64: #{transformer_forward.17} parent=47 // pred_fallthru
          _
        %p301 = scmp.lt.s32.totalorder %s21, 1
        %s302 = scalar_select %p301, %s21, 1
        %s303 = smul.addr %s302, 8
        %s304 = scalar_lea.vmem %s0, %s303
        %p305 = pneg %p42
        %p306 = pneg %p39
        %p307 = pneg %p63
        %p308 = pneg %p60
        %p309 = pneg %p84
        %p310 = pneg %p81
        %p311 = pneg %p105
        %p312 = pneg %p102
        %p313 = pneg %p126
        %p314 = pneg %p123
        %p315 = pneg %p147
        %p316 = pneg %p144
        %p317 = pneg %p168
        %p318 = pneg %p165
        %p319 = pneg %p194
        %p320 = pneg %p191
        %p321 = scmp.lt.s32.totalorder %s21, 1
        %s322 = scalar_select %p321, %s21, 1
        %s323 = smul.addr %s322, 8
        %s324 = scalar_lea.vmem %s7, %s323
        %p325 = scmp.lt.s32.totalorder %s21, 1
        %s326 = scalar_select %p325, %s21, 1
        %s327 = smul.addr %s326, 8
        %s328 = scalar_lea.vmem %s0, %s327
        %p329 = scmp.lt.s32.totalorder %s21, 1
        %s330 = scalar_select %p329, %s21, 1
        %s331 = smul.addr %s330, 8
        %s332 = scalar_lea.vmem %s7, %s331
        %v334 = vld [vmem:[%s328] sm:$0xff]
        %v335 = vpack.c.bf16 %v334, %v334
        %v336 = vld [vmem:[%s1] sm:$0xf]
        %v337 = vld [vmem:[%s1 + $0x4] sm:$0xf]
        %v338 = vld [vmem:[%s1 + $0x8] sm:$0xf]
        %v339 = vld [vmem:[%s1 + $0xc] sm:$0xf]
        %v340 = vld [vmem:[#allocation2] sm:$0x1]
        %v342 = vperm.slane %v340, 0
        %v348 = vunpack.c.l.b16 %v336
        %v349 = vunpack.c.l.b16 %v337
        %v350 = vunpack.c.l.b16 %v338
        %v351 = vunpack.c.l.b16 %v339
        %v352 = vpack.c.b16 %v349, %v348
        %v353 = vpack.c.b16 %v351, %v350
        %vm356 = vcmask 261120
        %v358 = vsel %vm356, %v335, 0
        %360 = vmatpush.bf16.msra.mxu0 0
        %361 = vmatpush.bf16.msra.mxu0 0
        %362 = vmatpush.bf16.msra.mxu0 0
        %363 = vmatpush.bf16.msra.mxu0 0
        %364 = vmatpush.bf16.msra.mxu0 0
        %365 = vmatpush.bf16.msra.mxu0 0
        %366 = vmatpush.bf16.msra.mxu0 %v353
        %367 = vmatpush.bf16.msra.mxu0 %v352
        %368 = vmatmul.bf16.gmra.mxu0 %v358
        %v369 = vpop.f32.mrf.mxu0
        %v370 = vadd.f32 %v342, %v369
        %v371 = vpop.f32.mrf.mxu0
        %372 = vdwg.mxu0
        %v373 = vmax.f32 %v370, 0.0
        %v374 = vpack.c.bf16 %v373, %v373
        %v375 = vld [vmem:[%s3] sm:$0xf]
        %v376 = vld [vmem:[%s3 + $0x4] sm:$0xf]
        %v377 = vld [vmem:[%s3 + $0x8] sm:$0xf]
        %v378 = vld [vmem:[%s3 + $0xc] sm:$0xf]
        %v379 = vld [vmem:[%s3 + $0x10] sm:$0xf]
        %v380 = vld [vmem:[%s3 + $0x14] sm:$0xf]
        %v381 = vld [vmem:[%s3 + $0x18] sm:$0xf]
        %v382 = vld [vmem:[%s3 + $0x1c] sm:$0xf]
        %v383 = vld [vmem:[#allocation4] sm:$0x1]
        %v385 = vperm.slane %v383, 0
        %v395 = vunpack.c.l.b16 %v375
        %v396 = vunpack.c.l.b16 %v376
        %v397 = vunpack.c.l.b16 %v377
        %v398 = vunpack.c.l.b16 %v378
        %v399 = vunpack.c.l.b16 %v379
        %v400 = vunpack.c.l.b16 %v380
        %v401 = vunpack.c.l.b16 %v381
        %v402 = vunpack.c.l.b16 %v382
        %v403 = vpack.c.b16 %v396, %v395
        %v404 = vpack.c.b16 %v398, %v397
        %v405 = vpack.c.b16 %v400, %v399
        %v406 = vpack.c.b16 %v402, %v401
        %vm411 = vcmask 523264
        %v413 = vsel %vm411, %v374, 0
        %415 = vmatpush.bf16.msra.mxu0 0
        %416 = vmatpush.bf16.msra.mxu0 0
        %417 = vmatpush.bf16.msra.mxu0 0
        %418 = vmatpush.bf16.msra.mxu0 0
        %419 = vmatpush.bf16.msra.mxu0 %v406
        %420 = vmatpush.bf16.msra.mxu0 %v405
        %421 = vmatpush.bf16.msra.mxu0 %v404
        %422 = vmatpush.bf16.msra.mxu0 %v403
        %423 = vmatmul.bf16.gmra.mxu0 %v413
        %v424 = vpop.f32.mrf.mxu0
        %v425 = vadd.f32 %v385, %v424
        %v426 = vpop.f32.mrf.mxu0
        %427 = vdwg.mxu0
        %v428 = vadd.f32 %v334, %v425
        %v429 = vsel %vm356, %v428, 0.0
        %430 = vadd.xlane.f32.xlu0 %v429
        %v431 = vpop.xlane.xlu0 %430
        %v432 = vrcp.pop 32.0
        %v433 = vmul.f32 32.0, %v432
        %v434 = vsub.f32 1.0, %v433
        %v435 = vmul.f32 %v432, %v434
        %v436 = vadd.f32 %v432, %v435
        %vm437 = vweird.f32 %v432
        %v438 = vsel %vm437, %v432, %v436
        %v439 = vmul.f32 %v431, %v438
        %v440 = vsub.f32 %v428, %v439
        %v441 = vmul.f32 %v440, %v440
        %v442 = vsel %vm356, %v441, 0.0
        %443 = vadd.xlane.f32.xlu0 %v442
        %v444 = vpop.xlane.xlu0 %443
        %v445 = vmul.f32 %v444, %v438
        %v446 = vadd.f32 %v445, 1e-05
        %v447 = vrsqrt.pop %v446
        %v448 = vmul.f32 %v447, %v446
        %v449 = vmul.f32 %v448, %v447
        %v450 = vmul.f32 0.5, %v449
        %v451 = vsub.f32 1.5, %v450
        %v452 = vmul.f32 %v447, %v451
        %vm453 = vweird.f32 %v446
        %vm454 = vweird.f32 %v447
        %vm455 = vmor %vm453, %vm454
        %v456 = vsel %vm455, %v447, %v452
        %v457 = vmul.f32 %v440, %v456
        %v458 = vld [vmem:[#allocation6] sm:$0x1]
        %v460 = vperm.slane %v458, 0
        %v462 = vmul.f32 %v457, %v460
        %v463 = vld [vmem:[#allocation7] sm:$0x1]
        %v465 = vperm.slane %v463, 0
        %v467 = vadd.f32 %v462, %v465
        %468 = vst.msk [vmem:[%s332] sm:$0xff] %vm356, %v467
        %p469 = scmp.lt.s32.totalorder %s21, 1
        %s470 = scalar_select %p469, %s21, 1
        %s471 = smul.addr %s470, 8
        %s472 = scalar_lea.vmem %s7, %s471
        // Predicated region
        $region65: #{transformer_forward.17} parent=47 // pred_check
          %p473 = pneg %p191
        $region66: #{transformer_forward.17} parent=47 // pred_check_branch
          %475 = sbr.rel (%p473) target = $region68
        $region67: #{transformer_forward.17} parent=47 // pred_region
          _
        $region68: #{transformer_forward.17} parent=47 // pred_fallthru
          _
      $region48: #{transformer_forward.17} parent=5 // pred_fallthru
        _
      %p476 = scmp.le.s32.totalorder 2, %s16
      // Predicated region
      $region69: #{transformer_forward.17} parent=5 // pred_check
        %p477 = pneg %p476
      $region70: #{transformer_forward.17} parent=5 // pred_check_branch
        %479 = sbr.rel (%p477) target = $region72
      $region71: #{transformer_forward.17} parent=5 // pred_region
        %s480 = ssub.s32 %s16, 2
        // Predicated region
        $region73: #{transformer_forward.17} parent=71 // pred_check
          %p481 = pneg %p197
        $region74: #{transformer_forward.17} parent=71 // pred_check_branch
          %483 = sbr.rel (%p481) target = $region76
        $region75: #{transformer_forward.17} parent=71 // pred_region
          %p484 = scmp.lt.s32.totalorder %s22, 1
          %s485 = scalar_select %p484, %s22, 1
          %s486 = smul.addr %s485, 8
          %s487 = scalar_lea.vmem %s7, %s486
        $region76: #{transformer_forward.17} parent=71 // pred_fallthru
          _
      $region72: #{transformer_forward.17} parent=5 // pred_fallthru
        _
    $region6: #{transformer_forward.17} parent=1 // loop_footer
      %s20 = sadd.s32 1, %s16
    $region7: #{transformer_forward.17} parent=1 // loop_footer_branch
      %15 = sbr.rel target = $region3
    $region8: #{transformer_forward.17} parent=1 // loop_exit
      _
    %488 = vsyncpa [#allocation3], 1
    %s489 = scalar_lea.sflag [#allocation3], 1
    %490 = vsyncpa %s489, 1
    %491 = vsyncpa [#allocation5], 1
    %492 = vsyncpa [#allocation8], 1

// kernel: transformer_forward.21
$region0: #{transformer_forward.21}
  #allocation0 [shape = 'u32[]', space=smem, size = 0x4, offset = 0x4, fixed_abs, tag = 'smem constant byte address 0x4 - core index']
  #allocation1 [shape = 'u32[72,128]{1,0:T(1,128)}', space=vmem, size = 0x9000, scoped, tag = 'internal scratch']
  %s0 = inlined_call_operand.vmem [shape: f32[16,32], index: 0, kind: input, shape index: {}]
  %s1 = inlined_call_operand.vmem [shape: bf16[32,128], index: 1, kind: input, shape index: {}]
  %s2 = inlined_call_operand.vmem [shape: f32[1,128], index: 2, kind: input, shape index: {}]
  %s3 = inlined_call_operand.vmem [shape: f32[16,128], index: 3, kind: output, shape index: {}]
  %s4 = sld [smem:[#allocation0]]
  $region22: #{transformer_forward.21} parent=0
    _
  %s6 = ssub.s32 1, %s4
  %s7 = scalar_select 0, %s6, %s4
  // Predicated region
  $region2: #{transformer_forward.21} parent=0 // pred_check
    _
  $region3: #{transformer_forward.21} parent=0 // pred_check_branch
    %9 = sbr.rel (0) target = $region5
  $region4: #{transformer_forward.21} parent=0 // pred_region
    _
  $region5: #{transformer_forward.21} parent=0 // pred_fallthru
    _
  // Predicated region
  $region6: #{transformer_forward.21} parent=0 // pred_check
    _
  $region7: #{transformer_forward.21} parent=0 // pred_check_branch
    %11 = sbr.rel (0) target = $region9
  $region8: #{transformer_forward.21} parent=0 // pred_region
    _
  $region9: #{transformer_forward.21} parent=0 // pred_fallthru
    _
  // Predicated region
  $region10: #{transformer_forward.21} parent=0 // pred_check
    _
  $region11: #{transformer_forward.21} parent=0 // pred_check_branch
    %13 = sbr.rel (0) target = $region13
  $region12: #{transformer_forward.21} parent=0 // pred_region
    _
  $region13: #{transformer_forward.21} parent=0 // pred_fallthru
    _
  %v15 = vld [vmem:[%s0] sm:$0xff]
  %v16 = vld [vmem:[%s0 + $0x8] sm:$0xff]
  %v17 = vpack.c.bf16 %v16, %v15
  %v18 = vld [vmem:[%s1] sm:$0xf]
  %v19 = vld [vmem:[%s1 + $0x4] sm:$0xf]
  %v20 = vld [vmem:[%s1 + $0x8] sm:$0xf]
  %v21 = vld [vmem:[%s1 + $0xc] sm:$0xf]
  %v22 = vld [vmem:[%s2] sm:$0x1]
  %v24 = vperm.slane %v22, 0
  %v30 = vunpack.c.l.b16 %v18
  %v31 = vunpack.c.l.b16 %v19
  %v32 = vunpack.c.l.b16 %v20
  %v33 = vunpack.c.l.b16 %v21
  %v34 = vpack.c.b16 %v31, %v30
  %v35 = vpack.c.b16 %v33, %v32
  %vm38 = vcmask 261120
  %v40 = vsel %vm38, %v17, 0
  %42 = vmatpush.bf16.msra.mxu0 0
  %43 = vmatpush.bf16.msra.mxu0 0
  %44 = vmatpush.bf16.msra.mxu0 0
  %45 = vmatpush.bf16.msra.mxu0 0
  %46 = vmatpush.bf16.msra.mxu0 0
  %47 = vmatpush.bf16.msra.mxu0 0
  %48 = vmatpush.bf16.msra.mxu0 %v35
  %49 = vmatpush.bf16.msra.mxu0 %v34
  %50 = vmatmul.bf16.gmra.mxu0 %v40
  %v51 = vpop.f32.mrf.mxu0
  %v52 = vadd.f32 %v24, %v51
  %v53 = vpop.f32.mrf.mxu0
  %v54 = vadd.f32 %v24, %v53
  %55 = vdwg.mxu0
  %56 = vst [vmem:[%s3] sm:$0xff] %v52
  %57 = vst [vmem:[%s3 + $0x8] sm:$0xff] %v54
  // Predicated region
  $region14: #{transformer_forward.21} parent=0 // pred_check
    _
  $region15: #{transformer_forward.21} parent=0 // pred_check_branch
    %59 = sbr.rel (0) target = $region17
  $region16: #{transformer_forward.21} parent=0 // pred_region
    _
  $region17: #{transformer_forward.21} parent=0 // pred_fallthru
    _
  // Predicated region
  $region18: #{transformer_forward.21} parent=0 // pred_check
    _
  $region19: #{transformer_forward.21} parent=0 // pred_check_branch
    %61 = sbr.rel (0) target = $region21
  $region20: #{transformer_forward.21} parent=0 // pred_region
    _
  $region21: #{transformer_forward.21} parent=0 // pred_fallthru
    _

// kernel: transformer_forward.16
$region0: #{transformer_forward.16}
  #allocation0 [shape = 'u32[]', space=smem, size = 0x4, offset = 0x4, fixed_abs, tag = 'smem constant byte address 0x4 - core index']
  #allocation1 [shape = 'u32[72,128]{1,0:T(1,128)}', space=vmem, size = 0x9000, scoped, tag = 'internal scratch']
  #allocation2 [shape = 'f32[8,32]{1,0:T(8,128)}', space=vmem, size = 0x1000, scoped, tag = 'scratch operand']
  %s0 = inlined_call_operand.vmem [shape: f32[2,8,32], index: 0, kind: input, shape index: {}]
  %s1 = inlined_call_operand.vmem [shape: f32[2,8,32], index: 1, kind: input, shape index: {}]
  %s2 = inlined_call_operand.vmem [shape: bf16[32,32], index: 2, kind: input, shape index: {}]
  %s3 = inlined_call_operand.vmem [shape: f32[1,32], index: 3, kind: input, shape index: {}]
  %s4 = inlined_call_operand.vmem [shape: bf16[32,64], index: 4, kind: input, shape index: {}]
  %s5 = inlined_call_operand.hbm [shape: f32[1,64], index: 5, kind: input, shape index: {}]
  %s6 = inlined_call_operand.vmem [shape: bf16[32,32], index: 6, kind: input, shape index: {}]
  %s7 = inlined_call_operand.hbm [shape: f32[1,32], index: 7, kind: input, shape index: {}]
  %s8 = inlined_call_operand.hbm [shape: f32[1,32], index: 8, kind: input, shape index: {}]
  %s9 = inlined_call_operand.hbm [shape: f32[1,32], index: 9, kind: input, shape index: {}]
  %s10 = inlined_call_operand.vmem [shape: f32[2,8,32], index: 10, kind: output, shape index: {}]
  %s11 = sld [smem:[#allocation0]]
  $region89: #{transformer_forward.16} parent=0
    _
  %s13 = ssub.s32 1, %s11
  %s14 = scalar_select 0, %s13, %s11
  $region1: #{transformer_forward.16} parent=0
    #allocation3 [shape = 'u8[512]{0}', space=vmem, size = 0x400, scoped, tag = 'input window, operand 5, single buffered']
    #allocation4 [shape = 's32[2]{0}', space=sflag, size = 0x8, scoped, tag = 'scoped memory for transformer_forward.16']
    #allocation5 [shape = 'u8[512]{0}', space=vmem, size = 0x400, scoped, tag = 'input window, operand 7, single buffered']
    #allocation6 [shape = 's32[1]{0}', space=sflag, size = 0x4, scoped, tag = 'scoped memory for transformer_forward.16']
    #allocation7 [shape = 'u8[512]{0}', space=vmem, size = 0x400, scoped, tag = 'input window, operand 8, single buffered']
    #allocation8 [shape = 'u8[512]{0}', space=vmem, size = 0x400, scoped, tag = 'input window, operand 9, single buffered']
    #allocation9 [shape = 's32[1]{0}', space=sflag, size = 0x4, scoped, tag = 'scoped memory for transformer_forward.16']
    %15 = vsyncpa [#allocation4], 0
    %16 = vsyncpa [#allocation6], 0
    %17 = vsyncpa [#allocation9], 0
    loop: start=0, step=1, limit=4
    $region2: #{transformer_forward.16} parent=1 // loop_pre_header
      _
    $region3: #{transformer_forward.16} parent=1 // loop_header
      %s19 = sphi 0, %s23
      %p20 = scmp.ge.s32.totalorder %s19, 4
      %s29 = sphi 0, %s31
      %s32 = sphi 0, %s29
      %s33 = sphi 0, %s32
      %s49 = sphi 0, %s33
      %s55 = sphi 0, %s57
      %s58 = sphi 0, %s55
      %s59 = sphi 0, %s58
      %s75 = sphi 0, %s59
      %s79 = sphi 0, %s79
      %s81 = sphi 0, %s79
      %s82 = sphi 0, %s81
      %s96 = sphi 0, %s82
      %s100 = sphi 0, %s100
      %s102 = sphi 0, %s100
      %s103 = sphi 0, %s102
      %s117 = sphi 0, %s103
      %s121 = sphi 0, %s121
      %s123 = sphi 0, %s121
      %s124 = sphi 0, %s123
      %s138 = sphi 0, %s124
      %s142 = sphi 0, %s142
      %s144 = sphi 0, %s142
      %s145 = sphi 0, %s144
      %s159 = sphi 0, %s145
      %s163 = sphi 0, %s163
      %s165 = sphi 0, %s163
      %s166 = sphi 0, %s165
      %s180 = sphi 0, %s166
      %s184 = sphi 0, %s184
      %s186 = sphi 0, %s184
      %s187 = sphi 0, %s186
      %s201 = sphi 0, %s187
      %s205 = sphi 0, %s205
      %s207 = sphi 0, %s205
      %s208 = sphi 0, %s207
      %s222 = sphi 0, %s208
      %s226 = sphi 0, %s226
      %s228 = sphi 0, %s226
      %s229 = sphi 0, %s228
      %s243 = sphi 0, %s229
      %s249 = sphi 0, %s251
      %s252 = sphi 0, %s249
      %s253 = sphi 0, %s252
      %s269 = sphi 0, %s253
    $region4: #{transformer_forward.16} parent=1 // loop_header_branch
      %22 = sbr.rel (%p20) target = $region8
    $region5: #{transformer_forward.16} parent=1 // loop_body
      %s24 = ssub.s32 %s19, 1
      %s25 = ssub.s32 %s19, 2
      %s26 = sadd.s32 %s19, 1
      %s27 = ssub.s32 %s19, %s26
      %p28 = scmp.eq.s32.totalorder %s27, 0
      %s30 = sadd.s32 %s29, 1
      %s31 = scalar_select %p28, %s29, %s30
      %p34 = pneg %p28
      %p35 = scmp.eq.s32.totalorder %s19, 1
      %p36 = por %p34, %p35
      %p37 = scmp.ne.s32.totalorder %s29, %s32
      %p38 = scmp.eq.s32.totalorder %s19, 0
      %p39 = por %p37, %p38
      %p40 = scmp.ne.s32.totalorder %s29, %s32
      %p41 = scmp.eq.s32.totalorder %s24, 1
      %p42 = por %p40, %p41
      %p43 = scmp.ne.s32.totalorder %s32, %s33
      %p44 = scmp.eq.s32.totalorder %s24, 0
      %p45 = por %p43, %p44
      %p46 = scmp.ne.s32.totalorder %s32, %s33
      %p47 = scmp.eq.s32.totalorder %s25, 1
      %p48 = por %p46, %p47
      %p50 = scmp.ne.s32.totalorder %s33, %s49
      %p51 = scmp.eq.s32.totalorder %s25, 0
      %p52 = por %p50, %p51
      %s53 = ssub.s32 %s19, %s26
      %p54 = scmp.eq.s32.totalorder %s53, 0
      %s56 = sadd.s32 %s55, 1
      %s57 = scalar_select %p54, %s55, %s56
      %p60 = pneg %p54
      %p61 = scmp.eq.s32.totalorder %s19, 1
      %p62 = por %p60, %p61
      %p63 = scmp.ne.s32.totalorder %s55, %s58
      %p64 = scmp.eq.s32.totalorder %s19, 0
      %p65 = por %p63, %p64
      %p66 = scmp.ne.s32.totalorder %s55, %s58
      %p67 = scmp.eq.s32.totalorder %s24, 1
      %p68 = por %p66, %p67
      %p69 = scmp.ne.s32.totalorder %s58, %s59
      %p70 = scmp.eq.s32.totalorder %s24, 0
      %p71 = por %p69, %p70
      %p72 = scmp.ne.s32.totalorder %s58, %s59
      %p73 = scmp.eq.s32.totalorder %s25, 1
      %p74 = por %p72, %p73
      %p76 = scmp.ne.s32.totalorder %s59, %s75
      %p77 = scmp.eq.s32.totalorder %s25, 0
      %p78 = por %p76, %p77
      %s80 = sadd.s32 %s79, 1
      %p83 = scmp.eq.s32.totalorder %s19, 1
      %p84 = scmp.ne.s32.totalorder %s79, %s81
      %p85 = scmp.eq.s32.totalorder %s19, 0
      %p86 = por %p84, %p85
      %p87 = scmp.ne.s32.totalorder %s79, %s81
      %p88 = scmp.eq.s32.totalorder %s24, 1
      %p89 = por %p87, %p88
      %p90 = scmp.ne.s32.totalorder %s81, %s82
      %p91 = scmp.eq.s32.totalorder %s24, 0
      %p92 = por %p90, %p91
      %p93 = scmp.ne.s32.totalorder %s81, %s82
      %p94 = scmp.eq.s32.totalorder %s25, 1
      %p95 = por %p93, %p94
      %p97 = scmp.ne.s32.totalorder %s82, %s96
      %p98 = scmp.eq.s32.totalorder %s25, 0
      %p99 = por %p97, %p98
      %s101 = sadd.s32 %s100, 1
      %p104 = scmp.eq.s32.totalorder %s19, 1
      %p105 = scmp.ne.s32.totalorder %s100, %s102
      %p106 = scmp.eq.s32.totalorder %s19, 0
      %p107 = por %p105, %p106
      %p108 = scmp.ne.s32.totalorder %s100, %s102
      %p109 = scmp.eq.s32.totalorder %s24, 1
      %p110 = por %p108, %p109
      %p111 = scmp.ne.s32.totalorder %s102, %s103
      %p112 = scmp.eq.s32.totalorder %s24, 0
      %p113 = por %p111, %p112
      %p114 = scmp.ne.s32.totalorder %s102, %s103
      %p115 = scmp.eq.s32.totalorder %s25, 1
      %p116 = por %p114, %p115
      %p118 = scmp.ne.s32.totalorder %s103, %s117
      %p119 = scmp.eq.s32.totalorder %s25, 0
      %p120 = por %p118, %p119
      %s122 = sadd.s32 %s121, 1
      %p125 = scmp.eq.s32.totalorder %s19, 1
      %p126 = scmp.ne.s32.totalorder %s121, %s123
      %p127 = scmp.eq.s32.totalorder %s19, 0
      %p128 = por %p126, %p127
      %p129 = scmp.ne.s32.totalorder %s121, %s123
      %p130 = scmp.eq.s32.totalorder %s24, 1
      %p131 = por %p129, %p130
      %p132 = scmp.ne.s32.totalorder %s123, %s124
      %p133 = scmp.eq.s32.totalorder %s24, 0
      %p134 = por %p132, %p133
      %p135 = scmp.ne.s32.totalorder %s123, %s124
      %p136 = scmp.eq.s32.totalorder %s25, 1
      %p137 = por %p135, %p136
      %p139 = scmp.ne.s32.totalorder %s124, %s138
      %p140 = scmp.eq.s32.totalorder %s25, 0
      %p141 = por %p139, %p140
      %s143 = sadd.s32 %s142, 1
      %p146 = scmp.eq.s32.totalorder %s19, 1
      %p147 = scmp.ne.s32.totalorder %s142, %s144
      %p148 = scmp.eq.s32.totalorder %s19, 0
      %p149 = por %p147, %p148
      %p150 = scmp.ne.s32.totalorder %s142, %s144
      %p151 = scmp.eq.s32.totalorder %s24, 1
      %p152 = por %p150, %p151
      %p153 = scmp.ne.s32.totalorder %s144, %s145
      %p154 = scmp.eq.s32.totalorder %s24, 0
      %p155 = por %p153, %p154
      %p156 = scmp.ne.s32.totalorder %s144, %s145
      %p157 = scmp.eq.s32.totalorder %s25, 1
      %p158 = por %p156, %p157
      %p160 = scmp.ne.s32.totalorder %s145, %s159
      %p161 = scmp.eq.s32.totalorder %s25, 0
      %p162 = por %p160, %p161
      %s164 = sadd.s32 %s163, 1
      %p167 = scmp.eq.s32.totalorder %s19, 1
      %p168 = scmp.ne.s32.totalorder %s163, %s165
      %p169 = scmp.eq.s32.totalorder %s19, 0
      %p170 = por %p168, %p169
      %p171 = scmp.ne.s32.totalorder %s163, %s165
      %p172 = scmp.eq.s32.totalorder %s24, 1
      %p173 = por %p171, %p172
      %p174 = scmp.ne.s32.totalorder %s165, %s166
      %p175 = scmp.eq.s32.totalorder %s24, 0
      %p176 = por %p174, %p175
      %p177 = scmp.ne.s32.totalorder %s165, %s166
      %p178 = scmp.eq.s32.totalorder %s25, 1
      %p179 = por %p177, %p178
      %p181 = scmp.ne.s32.totalorder %s166, %s180
      %p182 = scmp.eq.s32.totalorder %s25, 0
      %p183 = por %p181, %p182
      %s185 = sadd.s32 %s184, 1
      %p188 = scmp.eq.s32.totalorder %s19, 1
      %p189 = scmp.ne.s32.totalorder %s184, %s186
      %p190 = scmp.eq.s32.totalorder %s19, 0
      %p191 = por %p189, %p190
      %p192 = scmp.ne.s32.totalorder %s184, %s186
      %p193 = scmp.eq.s32.totalorder %s24, 1
      %p194 = por %p192, %p193
      %p195 = scmp.ne.s32.totalorder %s186, %s187
      %p196 = scmp.eq.s32.totalorder %s24, 0
      %p197 = por %p195, %p196
      %p198 = scmp.ne.s32.totalorder %s186, %s187
      %p199 = scmp.eq.s32.totalorder %s25, 1
      %p200 = por %p198, %p199
      %p202 = scmp.ne.s32.totalorder %s187, %s201
      %p203 = scmp.eq.s32.totalorder %s25, 0
      %p204 = por %p202, %p203
      %s206 = sadd.s32 %s205, 1
      %p209 = scmp.eq.s32.totalorder %s19, 1
      %p210 = scmp.ne.s32.totalorder %s205, %s207
      %p211 = scmp.eq.s32.totalorder %s19, 0
      %p212 = por %p210, %p211
      %p213 = scmp.ne.s32.totalorder %s205, %s207
      %p214 = scmp.eq.s32.totalorder %s24, 1
      %p215 = por %p213, %p214
      %p216 = scmp.ne.s32.totalorder %s207, %s208
      %p217 = scmp.eq.s32.totalorder %s24, 0
      %p218 = por %p216, %p217
      %p219 = scmp.ne.s32.totalorder %s207, %s208
      %p220 = scmp.eq.s32.totalorder %s25, 1
      %p221 = por %p219, %p220
      %p223 = scmp.ne.s32.totalorder %s208, %s222
      %p224 = scmp.eq.s32.totalorder %s25, 0
      %p225 = por %p223, %p224
      %s227 = sadd.s32 %s226, 1
      %p230 = scmp.eq.s32.totalorder %s19, 1
      %p231 = scmp.ne.s32.totalorder %s226, %s228
      %p232 = scmp.eq.s32.totalorder %s19, 0
      %p233 = por %p231, %p232
      %p234 = scmp.ne.s32.totalorder %s226, %s228
      %p235 = scmp.eq.s32.totalorder %s24, 1
      %p236 = por %p234, %p235
      %p237 = scmp.ne.s32.totalorder %s228, %s229
      %p238 = scmp.eq.s32.totalorder %s24, 0
      %p239 = por %p237, %p238
      %p240 = scmp.ne.s32.totalorder %s228, %s229
      %p241 = scmp.eq.s32.totalorder %s25, 1
      %p242 = por %p240, %p241
      %p244 = scmp.ne.s32.totalorder %s229, %s243
      %p245 = scmp.eq.s32.totalorder %s25, 0
      %p246 = por %p244, %p245
      %s247 = ssub.s32 %s19, %s26
      %p248 = scmp.eq.s32.totalorder %s247, 0
      %s250 = sadd.s32 %s249, 1
      %s251 = scalar_select %p248, %s249, %s250
      %p254 = pneg %p248
      %p255 = scmp.eq.s32.totalorder %s19, 1
      %p256 = por %p254, %p255
      %p257 = scmp.ne.s32.totalorder %s249, %s252
      %p258 = scmp.eq.s32.totalorder %s19, 0
      %p259 = por %p257, %p258
      %p260 = scmp.ne.s32.totalorder %s249, %s252
      %p261 = scmp.eq.s32.totalorder %s24, 1
      %p262 = por %p260, %p261
      %p263 = scmp.ne.s32.totalorder %s252, %s253
      %p264 = scmp.eq.s32.totalorder %s24, 0
      %p265 = por %p263, %p264
      %p266 = scmp.ne.s32.totalorder %s252, %s253
      %p267 = scmp.eq.s32.totalorder %s25, 1
      %p268 = por %p266, %p267
      %p270 = scmp.ne.s32.totalorder %s253, %s269
      %p271 = scmp.eq.s32.totalorder %s25, 0
      %p272 = por %p270, %p271
      %p273 = scmp.le.s32.totalorder 1, %s19
      %p274 = scmp.lt.s32.totalorder %s19, 3
      %p275 = pnand %p273, %p274
      %p276 = pneg %p275
      // Predicated region
      $region9: #{transformer_forward.16} parent=5 // pred_check
        _
      $region10: #{transformer_forward.16} parent=5 // pred_check_branch
        %278 = sbr.rel (%p275) target = $region12
      $region11: #{transformer_forward.16} parent=5 // pred_region
        %s279 = ssub.s32 %s19, 1
        // Predicated region
        $region13: #{transformer_forward.16} parent=11 // pred_check
          %p280 = pneg %p92
        $region14: #{transformer_forward.16} parent=11 // pred_check_branch
          %282 = sbr.rel (%p280) target = $region16
        $region15: #{transformer_forward.16} parent=11 // pred_region
          _
        $region16: #{transformer_forward.16} parent=11 // pred_fallthru
          _
        // Predicated region
        $region17: #{transformer_forward.16} parent=11 // pred_check
          %p283 = pneg %p113
        $region18: #{transformer_forward.16} parent=11 // pred_check_branch
          %285 = sbr.rel (%p283) target = $region20
        $region19: #{transformer_forward.16} parent=11 // pred_region
          _
        $region20: #{transformer_forward.16} parent=11 // pred_fallthru
          _
        // Predicated region
        $region21: #{transformer_forward.16} parent=11 // pred_check
          %p286 = pneg %p134
        $region22: #{transformer_forward.16} parent=11 // pred_check_branch
          %288 = sbr.rel (%p286) target = $region24
        $region23: #{transformer_forward.16} parent=11 // pred_region
          _
        $region24: #{transformer_forward.16} parent=11 // pred_fallthru
          _
        // Predicated region
        $region25: #{transformer_forward.16} parent=11 // pred_check
          %p289 = pneg %p155
        $region26: #{transformer_forward.16} parent=11 // pred_check_branch
          %291 = sbr.rel (%p289) target = $region28
        $region27: #{transformer_forward.16} parent=11 // pred_region
          %293 = vsyncadd [#allocation4], 0
          %s295 = sshll.u32 %s5, 4
          %s296 = int_to_ptr.hbm [resolvable:$true] %s295
          %s297 = sshll.u32 [#allocation3], 4
          %s298 = int_to_ptr.vmem [resolvable:$true] %s297
          %300 = dma.hbm_to_vmem [thread:$0]  %s296, 16, %s298, [#allocation4]
        $region28: #{transformer_forward.16} parent=11 // pred_fallthru
          _
        // Predicated region
        $region29: #{transformer_forward.16} parent=11 // pred_check
          %p301 = pneg %p176
        $region30: #{transformer_forward.16} parent=11 // pred_check_branch
          %303 = sbr.rel (%p301) target = $region32
        $region31: #{transformer_forward.16} parent=11 // pred_region
          _
        $region32: #{transformer_forward.16} parent=11 // pred_fallthru
          _
        // Predicated region
        $region33: #{transformer_forward.16} parent=11 // pred_check
          %p304 = pneg %p197
        $region34: #{transformer_forward.16} parent=11 // pred_check_branch
          %306 = sbr.rel (%p304) target = $region36
        $region35: #{transformer_forward.16} parent=11 // pred_region
          %308 = vsyncadd [#allocation6], 0
          %s310 = sshll.u32 %s7, 4
          %s311 = int_to_ptr.hbm [resolvable:$true] %s310
          %s312 = sshll.u32 [#allocation5], 4
          %s313 = int_to_ptr.vmem [resolvable:$true] %s312
          %315 = dma.hbm_to_vmem [thread:$0]  %s311, 16, %s313, [#allocation6]
        $region36: #{transformer_forward.16} parent=11 // pred_fallthru
          _
        // Predicated region
        $region37: #{transformer_forward.16} parent=11 // pred_check
          %p316 = pneg %p218
        $region38: #{transformer_forward.16} parent=11 // pred_check_branch
          %318 = sbr.rel (%p316) target = $region40
        $region39: #{transformer_forward.16} parent=11 // pred_region
          %320 = vsyncadd [#allocation6], 0
          %s322 = sshll.u32 %s8, 4
          %s323 = int_to_ptr.hbm [resolvable:$true] %s322
          %s324 = sshll.u32 [#allocation7], 4
          %s325 = int_to_ptr.vmem [resolvable:$true] %s324
          %327 = dma.hbm_to_vmem [thread:$0]  %s323, 16, %s325, [#allocation6]
        $region40: #{transformer_forward.16} parent=11 // pred_fallthru
          _
        // Predicated region
        $region41: #{transformer_forward.16} parent=11 // pred_check
          %p328 = pneg %p239
        $region42: #{transformer_forward.16} parent=11 // pred_check_branch
          %330 = sbr.rel (%p328) target = $region44
        $region43: #{transformer_forward.16} parent=11 // pred_region
          %332 = vsyncadd [#allocation9], 0
          %s334 = sshll.u32 %s9, 4
          %s335 = int_to_ptr.hbm [resolvable:$true] %s334
          %s336 = sshll.u32 [#allocation8], 4
          %s337 = int_to_ptr.vmem [resolvable:$true] %s336
          %339 = dma.hbm_to_vmem [thread:$0]  %s335, 16, %s337, [#allocation9]
        $region44: #{transformer_forward.16} parent=11 // pred_fallthru
          _
      $region12: #{transformer_forward.16} parent=5 // pred_fallthru
        _
      %p340 = scmp.lt.s32.totalorder %s19, 2
      // Predicated region
      $region45: #{transformer_forward.16} parent=5 // pred_check
        %p341 = pneg %p340
      $region46: #{transformer_forward.16} parent=5 // pred_check_branch
        %343 = sbr.rel (%p341) target = $region48
      $region47: #{transformer_forward.16} parent=5 // pred_region
        // Predicated region
        $region49: #{transformer_forward.16} parent=47 // pred_check
          %p344 = pneg %p39
        $region50: #{transformer_forward.16} parent=47 // pred_check_branch
          %346 = sbr.rel (%p344) target = $region52
        $region51: #{transformer_forward.16} parent=47 // pred_region
          %p347 = scmp.lt.s32.totalorder %s19, 1
          %s348 = scalar_select %p347, %s19, 1
          %s349 = smul.addr %s348, 8
          %s350 = scalar_lea.vmem %s0, %s349
        $region52: #{transformer_forward.16} parent=47 // pred_fallthru
          _
        // Predicated region
        $region53: #{transformer_forward.16} parent=47 // pred_check
          %p351 = pneg %p65
        $region54: #{transformer_forward.16} parent=47 // pred_check_branch
          %353 = sbr.rel (%p351) target = $region56
        $region55: #{transformer_forward.16} parent=47 // pred_region
          %p354 = scmp.lt.s32.totalorder %s19, 1
          %s355 = scalar_select %p354, %s19, 1
          %s356 = smul.addr %s355, 8
          %s357 = scalar_lea.vmem %s1, %s356
        $region56: #{transformer_forward.16} parent=47 // pred_fallthru
          _
      $region48: #{transformer_forward.16} parent=5 // pred_fallthru
        _
      %p358 = scmp.le.s32.totalorder 1, %s19
      %p359 = scmp.lt.s32.totalorder %s19, 3
      %p360 = pnand %p358, %p359
      %p361 = pneg %p360
      // Predicated region
      $region57: #{transformer_forward.16} parent=5 // pred_check
        _
      $region58: #{transformer_forward.16} parent=5 // pred_check_branch
        %363 = sbr.rel (%p360) target = $region60
      $region59: #{transformer_forward.16} parent=5 // pred_region
        %s364 = ssub.s32 %s19, 1
        // Predicated region
        $region61: #{transformer_forward.16} parent=59 // pred_check
          %p365 = pneg %p155
        $region62: #{transformer_forward.16} parent=59 // pred_check_branch
          %367 = sbr.rel (%p365) target = $region64
        $region63: #{transformer_forward.16} parent=59 // pred_region
          %369 = dma.done [#allocation4], 16
        $region64: #{transformer_forward.16} parent=59 // pred_fallthru
          _
        // Predicated region
        $region65: #{transformer_forward.16} parent=59 // pred_check
          %p370 = pneg %p197
        $region66: #{transformer_forward.16} parent=59 // pred_check_branch
          %372 = sbr.rel (%p370) target = $region68
        $region67: #{transformer_forward.16} parent=59 // pred_region
          %374 = dma.done [#allocation6], 16
        $region68: #{transformer_forward.16} parent=59 // pred_fallthru
          _
        // Predicated region
        $region69: #{transformer_forward.16} parent=59 // pred_check
          %p375 = pneg %p218
        $region70: #{transformer_forward.16} parent=59 // pred_check_branch
          %377 = sbr.rel (%p375) target = $region72
        $region71: #{transformer_forward.16} parent=59 // pred_region
          %379 = dma.done [#allocation6], 16
        $region72: #{transformer_forward.16} parent=59 // pred_fallthru
          _
        // Predicated region
        $region73: #{transformer_forward.16} parent=59 // pred_check
          %p380 = pneg %p239
        $region74: #{transformer_forward.16} parent=59 // pred_check_branch
          %382 = sbr.rel (%p380) target = $region76
        $region75: #{transformer_forward.16} parent=59 // pred_region
          %384 = dma.done [#allocation9], 16
        $region76: #{transformer_forward.16} parent=59 // pred_fallthru
          _
        %p385 = scmp.lt.s32.totalorder %s24, 1
        %s386 = scalar_select %p385, %s24, 1
        %s387 = smul.addr %s386, 8
        %s388 = scalar_lea.vmem %s0, %s387
        %p389 = pneg %p45
        %p390 = pneg %p42
        %p391 = scmp.lt.s32.totalorder %s24, 1
        %s392 = scalar_select %p391, %s24, 1
        %s393 = smul.addr %s392, 8
        %s394 = scalar_lea.vmem %s1, %s393
        %p395 = pneg %p71
        %p396 = pneg %p68
        %p397 = pneg %p92
        %p398 = pneg %p89
        %p399 = pneg %p113
        %p400 = pneg %p110
        %p401 = pneg %p134
        %p402 = pneg %p131
        %p403 = pneg %p155
        %p404 = pneg %p152
        %p405 = pneg %p176
        %p406 = pneg %p173
        %p407 = pneg %p197
        %p408 = pneg %p194
        %p409 = pneg %p218
        %p410 = pneg %p215
        %p411 = pneg %p239
        %p412 = pneg %p236
        %p413 = pneg %p265
        %p414 = pneg %p262
        %p415 = scmp.lt.s32.totalorder %s24, 1
        %s416 = scalar_select %p415, %s24, 1
        %s417 = smul.addr %s416, 8
        %s418 = scalar_lea.vmem %s10, %s417
        %p419 = scmp.lt.s32.totalorder %s24, 1
        %s420 = scalar_select %p419, %s24, 1
        %s421 = smul.addr %s420, 8
        %s422 = scalar_lea.vmem %s0, %s421
        %p423 = scmp.lt.s32.totalorder %s24, 1
        %s424 = scalar_select %p423, %s24, 1
        %s425 = smul.addr %s424, 8
        %s426 = scalar_lea.vmem %s1, %s425
        %p427 = scmp.lt.s32.totalorder %s24, 1
        %s428 = scalar_select %p427, %s24, 1
        %s429 = smul.addr %s428, 8
        %s430 = scalar_lea.vmem %s10, %s429
        %v432 = vld [vmem:[%s422] sm:$0xff]
        %v433 = vld [vmem:[%s426] sm:$0xff]
        %v434 = vpack.c.bf16 %v432, %v432
        %v435 = vld [vmem:[%s2] sm:$0xf]
        %v436 = vld [vmem:[%s2 + $0x4] sm:$0xf]
        %v437 = vld [vmem:[%s2 + $0x8] sm:$0xf]
        %v438 = vld [vmem:[%s2 + $0xc] sm:$0xf]
        %v439 = vld [vmem:[%s3] sm:$0x1]
        %v441 = vperm.slane %v439, 0
        %v447 = vunpack.c.l.b16 %v435
        %v448 = vunpack.c.l.b16 %v436
        %v449 = vunpack.c.l.b16 %v437
        %v450 = vunpack.c.l.b16 %v438
        %v451 = vpack.c.b16 %v448, %v447
        %v452 = vpack.c.b16 %v450, %v449
        %vm455 = vcmask 261120
        %v457 = vsel %vm455, %v434, 0
        %459 = vmatpush.bf16.msra.mxu0 0
        %460 = vmatpush.bf16.msra.mxu0 0
        %461 = vmatpush.bf16.msra.mxu0 0
        %462 = vmatpush.bf16.msra.mxu0 0
        %463 = vmatpush.bf16.msra.mxu0 0
        %464 = vmatpush.bf16.msra.mxu0 0
        %465 = vmatpush.bf16.msra.mxu0 %v452
        %466 = vmatpush.bf16.msra.mxu0 %v451
        %467 = vmatmul.bf16.gmra.mxu0 %v457
        %v468 = vpop.f32.mrf.mxu0
        %v469 = vadd.f32 %v441, %v468
        %v470 = vpop.f32.mrf.mxu0
        %471 = vdwg.mxu0
        %v472 = vpack.c.bf16 %v433, %v433
        %v473 = vld [vmem:[%s4] sm:$0xf]
        %v474 = vld [vmem:[%s4 + $0x4] sm:$0xf]
        %v475 = vld [vmem:[%s4 + $0x8] sm:$0xf]
        %v476 = vld [vmem:[%s4 + $0xc] sm:$0xf]
        %v477 = vld [vmem:[#allocation3] sm:$0x1]
        %v479 = vperm.slane %v477, 0
        %v485 = vunpack.c.l.b16 %v473
        %v486 = vunpack.c.l.b16 %v474
        %v487 = vunpack.c.l.b16 %v475
        %v488 = vunpack.c.l.b16 %v476
        %v489 = vpack.c.b16 %v486, %v485
        %v490 = vpack.c.b16 %v488, %v487
        %v494 = vsel %vm455, %v472, 0
        %496 = vmatpush.bf16.msra.mxu0 0
        %497 = vmatpush.bf16.msra.mxu0 0
        %498 = vmatpush.bf16.msra.mxu0 0
        %499 = vmatpush.bf16.msra.mxu0 0
        %500 = vmatpush.bf16.msra.mxu0 0
        %501 = vmatpush.bf16.msra.mxu0 0
        %502 = vmatpush.bf16.msra.mxu0 %v490
        %503 = vmatpush.bf16.msra.mxu0 %v489
        %504 = vmatmul.bf16.gmra.mxu0 %v494
        %v505 = vpop.f32.mrf.mxu0
        %v506 = vadd.f32 %v479, %v505
        %v507 = vpop.f32.mrf.mxu0
        %508 = vdwg.mxu0
        %vm509 = vcmask 64512
        %v511 = vsel %vm509, %v469, 0
        %v514 = vsel %vm509, %v506, 0
        %516 = vmatpush.xpose.msra.mxu0 0.0
        %517 = vmatpush.xpose.msra.mxu0 0.0
        %518 = vmatpush.xpose.msra.mxu0 0.0
        %519 = vmatpush.xpose.msra.mxu0 0.0
        %520 = vmatpush.xpose.msra.mxu0 0.0
        %521 = vmatpush.xpose.msra.mxu0 0.0
        %522 = vmatpush.xpose.msra.mxu0 0.0
        %523 = vmatpush.xpose.msra.mxu0 0.0
        %524 = vmatpush.xpose.msra.mxu0 0.0
        %525 = vmatpush.xpose.msra.mxu0 0.0
        %526 = vmatpush.xpose.msra.mxu0 0.0
        %527 = vmatpush.xpose.msra.mxu0 0.0
        %528 = vmatpush.xpose.msra.mxu0 0.0
        %529 = vmatpush.xpose.msra.mxu0 0.0
        %530 = vmatpush.xpose.msra.mxu0 0.0
        %531 = vmatpush.xpose.msra.mxu0 %v514
        %532 = vmatmul.f32.gmra.mxu0 %v511
        %v533 = vpop.f32.mrf.mxu0
        %v534 = vadd.f32 0.0, %v533
        %535 = vdwg.mxu0
        %v536 = vmul.f32 %v534, 0.35355338
        %v537 = vsel %vm509, %v536, -inf
        %538 = vmax.xlane.f32.xlu0 %v537
        %v539 = vpop.xlane.xlu0 %538
        %v540 = vsub.f32 %v536, %v539
        %v541 = vmul.f32 %v540, 1.442695
        %v542 = vpow.pop %v541
        %v543 = vsel %vm509, %v542, 0.0
        %544 = vadd.xlane.f32.xlu0 %v543
        %v545 = vpop.xlane.xlu0 %544
        %v546 = vrcp.pop %v545
        %v547 = vmul.f32 %v542, %v546
        %548 = vrot.lane.b32.xlu0 %v506, 96
        %v549 = vpop.permute.xlu0 %548
        %v552 = vsel %vm509, %v547, 0
        %554 = vmatpush.msra.mxu0 0.0
        %555 = vmatpush.msra.mxu0 0.0
        %556 = vmatpush.msra.mxu0 0.0
        %557 = vmatpush.msra.mxu0 0.0
        %558 = vmatpush.msra.mxu0 0.0
        %559 = vmatpush.msra.mxu0 0.0
        %560 = vmatpush.msra.mxu0 0.0
        %561 = vmatpush.msra.mxu0 0.0
        %562 = vmatpush.msra.mxu0 0.0
        %563 = vmatpush.msra.mxu0 0.0
        %564 = vmatpush.msra.mxu0 0.0
        %565 = vmatpush.msra.mxu0 0.0
        %566 = vmatpush.msra.mxu0 0.0
        %567 = vmatpush.msra.mxu0 0.0
        %568 = vmatpush.msra.mxu0 0.0
        %569 = vmatpush.msra.mxu0 %v549
        %570 = vmatmul.f32.gmra.mxu0 %v552
        %v571 = vpop.f32.mrf.mxu0
        %v572 = vadd.f32 0.0, %v571
        %573 = vdwg.mxu0
        %574 = vst.msk [vmem:[#allocation2] sm:$0xff] %vm509, %v572
        %575 = vrot.lane.b32.xlu0 %v469, 120
        %v576 = vpop.permute.xlu0 %575
        %577 = vrot.lane.b32.xlu0 %v506, 120
        %v578 = vpop.permute.xlu0 %577
        %v579 = vsel %vm509, %v576, 0
        %v581 = vsel %vm509, %v578, 0
        %583 = vmatpush.xpose.msra.mxu0 0.0
        %584 = vmatpush.xpose.msra.mxu0 0.0
        %585 = vmatpush.xpose.msra.mxu0 0.0
        %586 = vmatpush.xpose.msra.mxu0 0.0
        %587 = vmatpush.xpose.msra.mxu0 0.0
        %588 = vmatpush.xpose.msra.mxu0 0.0
        %589 = vmatpush.xpose.msra.mxu0 0.0
        %590 = vmatpush.xpose.msra.mxu0 0.0
        %591 = vmatpush.xpose.msra.mxu0 0.0
        %592 = vmatpush.xpose.msra.mxu0 0.0
        %593 = vmatpush.xpose.msra.mxu0 0.0
        %594 = vmatpush.xpose.msra.mxu0 0.0
        %595 = vmatpush.xpose.msra.mxu0 0.0
        %596 = vmatpush.xpose.msra.mxu0 0.0
        %597 = vmatpush.xpose.msra.mxu0 0.0
        %598 = vmatpush.xpose.msra.mxu0 %v581
        %599 = vmatmul.f32.gmra.mxu0 %v579
        %v600 = vpop.f32.mrf.mxu0
        %v601 = vadd.f32 0.0, %v600
        %602 = vdwg.mxu0
        %v603 = vmul.f32 %v601, 0.35355338
        %v604 = vsel %vm509, %v603, -inf
        %605 = vmax.xlane.f32.xlu0 %v604
        %v606 = vpop.xlane.xlu0 %605
        %v607 = vsub.f32 %v603, %v606
        %v608 = vmul.f32 %v607, 1.442695
        %v609 = vpow.pop %v608
        %v610 = vsel %vm509, %v609, 0.0
        %611 = vadd.xlane.f32.xlu0 %v610
        %v612 = vpop.xlane.xlu0 %611
        %v613 = vrcp.pop %v612
        %v614 = vmul.f32 %v609, %v613
        %615 = vrot.lane.b32.xlu0 %v506, 88
        %v616 = vpop.permute.xlu0 %615
        %v619 = vsel %vm509, %v614, 0
        %621 = vmatpush.msra.mxu0 0.0
        %622 = vmatpush.msra.mxu0 0.0
        %623 = vmatpush.msra.mxu0 0.0
        %624 = vmatpush.msra.mxu0 0.0
        %625 = vmatpush.msra.mxu0 0.0
        %626 = vmatpush.msra.mxu0 0.0
        %627 = vmatpush.msra.mxu0 0.0
        %628 = vmatpush.msra.mxu0 0.0
        %629 = vmatpush.msra.mxu0 0.0
        %630 = vmatpush.msra.mxu0 0.0
        %631 = vmatpush.msra.mxu0 0.0
        %632 = vmatpush.msra.mxu0 0.0
        %633 = vmatpush.msra.mxu0 0.0
        %634 = vmatpush.msra.mxu0 0.0
        %635 = vmatpush.msra.mxu0 0.0
        %636 = vmatpush.msra.mxu0 %v616
        %637 = vmatmul.f32.gmra.mxu0 %v619
        %v638 = vpop.f32.mrf.mxu0
        %v639 = vadd.f32 0.0, %v638
        %640 = vdwg.mxu0
        %642 = vrot.lane.b32.xlu0 %v639, 8
        %v643 = vpop.permute.xlu0 %642
        %vm645 = vcmask 130112
        %646 = vst.msk [vmem:[#allocation2] sm:$0xff] %vm645, %v643
        %647 = vrot.lane.b32.xlu0 %v469, 112
        %v648 = vpop.permute.xlu0 %647
        %649 = vrot.lane.b32.xlu0 %v506, 112
        %v650 = vpop.permute.xlu0 %649
        %v651 = vsel %vm509, %v648, 0
        %v653 = vsel %vm509, %v650, 0
        %655 = vmatpush.xpose.msra.mxu0 0.0
        %656 = vmatpush.xpose.msra.mxu0 0.0
        %657 = vmatpush.xpose.msra.mxu0 0.0
        %658 = vmatpush.xpose.msra.mxu0 0.0
        %659 = vmatpush.xpose.msra.mxu0 0.0
        %660 = vmatpush.xpose.msra.mxu0 0.0
        %661 = vmatpush.xpose.msra.mxu0 0.0
        %662 = vmatpush.xpose.msra.mxu0 0.0
        %663 = vmatpush.xpose.msra.mxu0 0.0
        %664 = vmatpush.xpose.msra.mxu0 0.0
        %665 = vmatpush.xpose.msra.mxu0 0.0
        %666 = vmatpush.xpose.msra.mxu0 0.0
        %667 = vmatpush.xpose.msra.mxu0 0.0
        %668 = vmatpush.xpose.msra.mxu0 0.0
        %669 = vmatpush.xpose.msra.mxu0 0.0
        %670 = vmatpush.xpose.msra.mxu0 %v653
        %671 = vmatmul.f32.gmra.mxu0 %v651
        %v672 = vpop.f32.mrf.mxu0
        %v673 = vadd.f32 0.0, %v672
        %674 = vdwg.mxu0
        %v675 = vmul.f32 %v673, 0.35355338
        %v676 = vsel %vm509, %v675, -inf
        %677 = vmax.xlane.f32.xlu0 %v676
        %v678 = vpop.xlane.xlu0 %677
        %v679 = vsub.f32 %v675, %v678
        %v680 = vmul.f32 %v679, 1.442695
        %v681 = vpow.pop %v680
        %v682 = vsel %vm509, %v681, 0.0
        %683 = vadd.xlane.f32.xlu0 %v682
        %v684 = vpop.xlane.xlu0 %683
        %v685 = vrcp.pop %v684
        %v686 = vmul.f32 %v681, %v685
        %687 = vrot.lane.b32.xlu0 %v506, 80
        %v688 = vpop.permute.xlu0 %687
        %v691 = vsel %vm509, %v686, 0
        %693 = vmatpush.msra.mxu0 0.0
        %694 = vmatpush.msra.mxu0 0.0
        %695 = vmatpush.msra.mxu0 0.0
        %696 = vmatpush.msra.mxu0 0.0
        %697 = vmatpush.msra.mxu0 0.0
        %698 = vmatpush.msra.mxu0 0.0
        %699 = vmatpush.msra.mxu0 0.0
        %700 = vmatpush.msra.mxu0 0.0
        %701 = vmatpush.msra.mxu0 0.0
        %702 = vmatpush.msra.mxu0 0.0
        %703 = vmatpush.msra.mxu0 0.0
        %704 = vmatpush.msra.mxu0 0.0
        %705 = vmatpush.msra.mxu0 0.0
        %706 = vmatpush.msra.mxu0 0.0
        %707 = vmatpush.msra.mxu0 0.0
        %708 = vmatpush.msra.mxu0 %v688
        %709 = vmatmul.f32.gmra.mxu0 %v691
        %v710 = vpop.f32.mrf.mxu0
        %v711 = vadd.f32 0.0, %v710
        %712 = vdwg.mxu0
        %714 = vrot.lane.b32.xlu0 %v711, 16
        %v715 = vpop.permute.xlu0 %714
        %vm717 = vcmask 195712
        %718 = vst.msk [vmem:[#allocation2] sm:$0xff] %vm717, %v715
        %719 = vrot.lane.b32.xlu0 %v469, 104
        %v720 = vpop.permute.xlu0 %719
        %721 = vrot.lane.b32.xlu0 %v506, 104
        %v722 = vpop.permute.xlu0 %721
        %v723 = vsel %vm509, %v720, 0
        %v725 = vsel %vm509, %v722, 0
        %727 = vmatpush.xpose.msra.mxu0 0.0
        %728 = vmatpush.xpose.msra.mxu0 0.0
        %729 = vmatpush.xpose.msra.mxu0 0.0
        %730 = vmatpush.xpose.msra.mxu0 0.0
        %731 = vmatpush.xpose.msra.mxu0 0.0
        %732 = vmatpush.xpose.msra.mxu0 0.0
        %733 = vmatpush.xpose.msra.mxu0 0.0
        %734 = vmatpush.xpose.msra.mxu0 0.0
        %735 = vmatpush.xpose.msra.mxu0 0.0
        %736 = vmatpush.xpose.msra.mxu0 0.0
        %737 = vmatpush.xpose.msra.mxu0 0.0
        %738 = vmatpush.xpose.msra.mxu0 0.0
        %739 = vmatpush.xpose.msra.mxu0 0.0
        %740 = vmatpush.xpose.msra.mxu0 0.0
        %741 = vmatpush.xpose.msra.mxu0 0.0
        %742 = vmatpush.xpose.msra.mxu0 %v725
        %743 = vmatmul.f32.gmra.mxu0 %v723
        %v744 = vpop.f32.mrf.mxu0
        %v745 = vadd.f32 0.0, %v744
        %746 = vdwg.mxu0
        %v747 = vmul.f32 %v745, 0.35355338
        %v748 = vsel %vm509, %v747, -inf
        %749 = vmax.xlane.f32.xlu0 %v748
        %v750 = vpop.xlane.xlu0 %749
        %v751 = vsub.f32 %v747, %v750
        %v752 = vmul.f32 %v751, 1.442695
        %v753 = vpow.pop %v752
        %v754 = vsel %vm509, %v753, 0.0
        %755 = vadd.xlane.f32.xlu0 %v754
        %v756 = vpop.xlane.xlu0 %755
        %v757 = vrcp.pop %v756
        %v758 = vmul.f32 %v753, %v757
        %759 = vrot.lane.b32.xlu0 %v506, 72
        %v760 = vpop.permute.xlu0 %759
        %v763 = vsel %vm509, %v758, 0
        %765 = vmatpush.msra.mxu0 0.0
        %766 = vmatpush.msra.mxu0 0.0
        %767 = vmatpush.msra.mxu0 0.0
        %768 = vmatpush.msra.mxu0 0.0
        %769 = vmatpush.msra.mxu0 0.0
        %770 = vmatpush.msra.mxu0 0.0
        %771 = vmatpush.msra.mxu0 0.0
        %772 = vmatpush.msra.mxu0 0.0
        %773 = vmatpush.msra.mxu0 0.0
        %774 = vmatpush.msra.mxu0 0.0
        %775 = vmatpush.msra.mxu0 0.0
        %776 = vmatpush.msra.mxu0 0.0
        %777 = vmatpush.msra.mxu0 0.0
        %778 = vmatpush.msra.mxu0 0.0
        %779 = vmatpush.msra.mxu0 0.0
        %780 = vmatpush.msra.mxu0 %v760
        %781 = vmatmul.f32.gmra.mxu0 %v763
        %v782 = vpop.f32.mrf.mxu0
        %v783 = vadd.f32 0.0, %v782
        %784 = vdwg.mxu0
        %786 = vrot.lane.b32.xlu0 %v783, 24
        %v787 = vpop.permute.xlu0 %786
        %vm789 = vcmask 261312
        %790 = vst.msk [vmem:[#allocation2] sm:$0xff] %vm789, %v787
        %v791 = vld [vmem:[#allocation2] sm:$0xff]
        %v792 = vpack.c.bf16 %v791, %v791
        %v793 = vld [vmem:[%s6] sm:$0xf]
        %v794 = vld [vmem:[%s6 + $0x4] sm:$0xf]
        %v795 = vld [vmem:[%s6 + $0x8] sm:$0xf]
        %v796 = vld [vmem:[%s6 + $0xc] sm:$0xf]
        %v797 = vld [vmem:[#allocation5] sm:$0x1]
        %v799 = vperm.slane %v797, 0
        %v805 = vunpack.c.l.b16 %v793
        %v806 = vunpack.c.l.b16 %v794
        %v807 = vunpack.c.l.b16 %v795
        %v808 = vunpack.c.l.b16 %v796
        %v809 = vpack.c.b16 %v806, %v805
        %v810 = vpack.c.b16 %v808, %v807
        %v814 = vsel %vm455, %v792, 0
        %816 = vmatpush.bf16.msra.mxu0 0
        %817 = vmatpush.bf16.msra.mxu0 0
        %818 = vmatpush.bf16.msra.mxu0 0
        %819 = vmatpush.bf16.msra.mxu0 0
        %820 = vmatpush.bf16.msra.mxu0 0
        %821 = vmatpush.bf16.msra.mxu0 0
        %822 = vmatpush.bf16.msra.mxu0 %v810
        %823 = vmatpush.bf16.msra.mxu0 %v809
        %824 = vmatmul.bf16.gmra.mxu0 %v814
        %v825 = vpop.f32.mrf.mxu0
        %v826 = vadd.f32 %v799, %v825
        %v827 = vpop.f32.mrf.mxu0
        %828 = vdwg.mxu0
        %v829 = vadd.f32 %v432, %v826
        %v830 = vsel %vm455, %v829, 0.0
        %831 = vadd.xlane.f32.xlu0 %v830
        %v832 = vpop.xlane.xlu0 %831
        %v833 = vrcp.pop 32.0
        %v834 = vmul.f32 32.0, %v833
        %v835 = vsub.f32 1.0, %v834
        %v836 = vmul.f32 %v833, %v835
        %v837 = vadd.f32 %v833, %v836
        %vm838 = vweird.f32 %v833
        %v839 = vsel %vm838, %v833, %v837
        %v840 = vmul.f32 %v832, %v839
        %v841 = vsub.f32 %v829, %v840
        %v842 = vmul.f32 %v841, %v841
        %v843 = vsel %vm455, %v842, 0.0
        %844 = vadd.xlane.f32.xlu0 %v843
        %v845 = vpop.xlane.xlu0 %844
        %v846 = vmul.f32 %v845, %v839
        %v847 = vadd.f32 %v846, 1e-05
        %v848 = vrsqrt.pop %v847
        %v849 = vmul.f32 %v848, %v847
        %v850 = vmul.f32 %v849, %v848
        %v851 = vmul.f32 0.5, %v850
        %v852 = vsub.f32 1.5, %v851
        %v853 = vmul.f32 %v848, %v852
        %vm854 = vweird.f32 %v847
        %vm855 = vweird.f32 %v848
        %vm856 = vmor %vm854, %vm855
        %v857 = vsel %vm856, %v848, %v853
        %v858 = vmul.f32 %v841, %v857
        %v859 = vld [vmem:[#allocation7] sm:$0x1]
        %v861 = vperm.slane %v859, 0
        %v863 = vmul.f32 %v858, %v861
        %v864 = vld [vmem:[#allocation8] sm:$0x1]
        %v866 = vperm.slane %v864, 0
        %v868 = vadd.f32 %v863, %v866
        %869 = vst.msk [vmem:[%s430] sm:$0xff] %vm455, %v868
        %p870 = scmp.lt.s32.totalorder %s24, 1
        %s871 = scalar_select %p870, %s24, 1
        %s872 = smul.addr %s871, 8
        %s873 = scalar_lea.vmem %s10, %s872
        // Predicated region
        $region77: #{transformer_forward.16} parent=59 // pred_check
          %p874 = pneg %p262
        $region78: #{transformer_forward.16} parent=59 // pred_check_branch
          %876 = sbr.rel (%p874) target = $region80
        $region79: #{transformer_forward.16} parent=59 // pred_region
          _
        $region80: #{transformer_forward.16} parent=59 // pred_fallthru
          _
      $region60: #{transformer_forward.16} parent=5 // pred_fallthru
        _
      %p877 = scmp.le.s32.totalorder 2, %s19
      // Predicated region
      $region81: #{transformer_forward.16} parent=5 // pred_check
        %p878 = pneg %p877
      $region82: #{transformer_forward.16} parent=5 // pred_check_branch
        %880 = sbr.rel (%p878) target = $region84
      $region83: #{transformer_forward.16} parent=5 // pred_region
        %s881 = ssub.s32 %s19, 2
        // Predicated region
        $region85: #{transformer_forward.16} parent=83 // pred_check
          %p882 = pneg %p268
        $region86: #{transformer_forward.16} parent=83 // pred_check_branch
          %884 = sbr.rel (%p882) target = $region88
        $region87: #{transformer_forward.16} parent=83 // pred_region
          %p885 = scmp.lt.s32.totalorder %s25, 1
          %s886 = scalar_select %p885, %s25, 1
          %s887 = smul.addr %s886, 8
          %s888 = scalar_lea.vmem %s10, %s887
        $region88: #{transformer_forward.16} parent=83 // pred_fallthru
          _
      $region84: #{transformer_forward.16} parent=5 // pred_fallthru
        _
    $region6: #{transformer_forward.16} parent=1 // loop_footer
      %s23 = sadd.s32 1, %s19
    $region7: #{transformer_forward.16} parent=1 // loop_footer_branch
      %18 = sbr.rel target = $region3
    $region8: #{transformer_forward.16} parent=1 // loop_exit
      _
    %889 = vsyncpa [#allocation4], 1
    %s890 = scalar_lea.sflag [#allocation4], 1
    %891 = vsyncpa %s890, 1
    %892 = vsyncpa [#allocation6], 1
    %893 = vsyncpa [#allocation9], 1

</llo_original>
